<compile_context>
chip_gen: v7x
topology: tpu7x:2x2x1
jax: 0.10.0
libtpu: 0.0.40
codegen_flags: <defaults>
</compile_context>

<pallas_src>
from functools import partial

import numpy as np
import jax
import jax.numpy as jnp
from jax.experimental import pallas as pl
from jax.experimental.pallas import tpu as pltpu

# ----------------------------- config (small) --------------------------------
IMG_SIZE = 16
PATCH = 8
IN_CHANS = 4
ENC_DIM = 32
ENC_DEPTH = 2
ENC_HEADS = 2
DEC_DIM = 32
DEC_DEPTH = 1
DEC_HEADS = 2
MLP_RATIO = 4
CHANNEL_DIM = 32          # encoder_to_channel output dim (fixed to 32 in module)
IMGC_NUMCLASS = 10
LN_EPS = 1e-5             # nn.LayerNorm default
NUM_PATCHES = (IMG_SIZE // PATCH) ** 2
SLAB_LANES = 128          # lane width of the packed parameter slab


def _vmem_spec():
    return pl.BlockSpec(memory_space=pltpu.MemorySpace.VMEM)


# ------------------------------- fused kernel --------------------------------
def _fused_vit_kernel(ws_ref, patches_ref, o_ref, *, offs, batch, seq,
                      enc_depth, dec_depth, enc_heads, dec_heads):
    bs = batch * seq

    def W(name):
        off, r, c = offs[name]               # static Python ints -> static slices
        return ws_ref[off:off + r, :c]

    attn_mask = W("attn_mask")               # [B*S, B*S] additive block-diag mask
    pool = W("pool")                          # [B, B*S]   mean-pool matrix (1/S blocks)

    def layernorm(x, g, b):
        mu = jnp.mean(x, axis=-1, keepdims=True)
        xc = x - mu
        var = jnp.mean(xc * xc, axis=-1, keepdims=True)
        return xc * jax.lax.rsqrt(var + LN_EPS) * g + b

    def layernorm_nogb(x):                    # gamma/beta folded into following linear
        mu = jnp.mean(x, axis=-1, keepdims=True)
        xc = x - mu
        var = jnp.mean(xc * xc, axis=-1, keepdims=True)
        return xc * jax.lax.rsqrt(var + LN_EPS)

    def erf(x):
        # TODO(synk): exact-erf GELU (nn.GELU default) implemented via A&S 7.1.26
        # (|abs err| <= 1.5e-7, ~f32 resolution) using only exp/mul/select so it
        # lowers cleanly on all TPU generations.
        ax = jnp.abs(x)
        t = 1.0 / (1.0 + 0.3275911 * ax)
        poly = t * (0.254829592 + t * (-0.284496736 + t * (1.421413741
                    + t * (-1.453152027 + t * 1.061405429))))
        y = 1.0 - poly * jnp.exp(-ax * ax)
        return jnp.where(x >= 0.0, y, -y)

    def gelu(x):
        return 0.5 * x * (1.0 + erf(x * 0.7071067811865476))

    def block(x, pfx, dim, heads):
        # pre-norm attention
        xn = layernorm(x, W(pfx + "n1_g"), W(pfx + "n1_b"))
        att = None
        for h in range(heads):
            q = pl.dot(xn, W(f"{pfx}wq{h}"))          # scale pre-folded into Wq
            k = pl.dot(xn, W(f"{pfx}wk{h}"))
            v = pl.dot(xn, W(f"{pfx}wv{h}"))
            s = pl.dot(q, k, trans_b=True) + attn_mask    # [B*S, B*S]; cross-batch -> -1e30
            s = s - jnp.max(s, axis=-1, keepdims=True)
            p = jnp.exp(s)
            p = p / jnp.sum(p, axis=-1, keepdims=True)    # exact divide
            ctx = pl.dot(p, v)                            # [B*S, dh]
            contrib = pl.dot(ctx, W(f"{pfx}wo{h}"))       # accumulate through proj rows
            att = contrib if att is None else att + contrib
        x = x + att + W(pfx + "proj_b")
        # pre-norm MLP
        xn = layernorm(x, W(pfx + "n2_g"), W(pfx + "n2_b"))
        hid = gelu(pl.dot(xn, W(pfx + "fc1_w")) + W(pfx + "fc1_b"))
        return x + pl.dot(hid, W(pfx + "fc2_w")) + W(pfx + "fc2_b")

    # ---- encoder: patch embed + sincos pos + blocks + LN ----
    x = pl.dot(patches_ref[...], W("patch_w")) + W("pos_enc")   # patch_b folded into pos_enc
    for i in range(enc_depth):
        x = block(x, f"e{i}_", ENC_DIM, enc_heads)
    x = layernorm(x, W("enc_g"), W("enc_b"))

    # ---- fused encoder_to_channel @ channel_to_decoder (+ decoder pos embed) ----
    x = pl.dot(x, W("ch_w")) + W("pos_dec")      # fused channel bias folded into pos_dec

    # ---- decoder blocks + LN (gamma/beta folded into head) ----
    for i in range(dec_depth):
        x = block(x, f"d{i}_", DEC_DIM, dec_heads)
    x = layernorm_nogb(x)

    # ---- token mean-pool (matmul) + classification head ----
    m = pl.dot(pool, x)                           # [B, D_dec]
    o_ref[...] = (pl.dot(m, W("head_w")) + W("head_b")).astype(o_ref.dtype)


# ------------------------------ forward wrapper --------------------------------
def vit_van_cls_forward(wslab, img, bm_pos, *, offs):
    # TODO(synk): bm_pos accepted but unused — vanilla ("Van") encoder processes all patches.
    B, C, H, Wd = img.shape
    p = PATCH
    n = (H // p) * (Wd // p)
    # im2col patchify: NCHW -> [B*N, C*p*p] with (C, ph, pw) flatten order
    # (matches Conv2d(kernel=patch, stride=patch) weight layout). Tiny one-off XLA glue.
    patches = img.reshape(B, C, H // p, p, Wd // p, p).transpose(0, 2, 4, 1, 3, 5)
    patches = patches.reshape(B * n, C * p * p)

    kernel = partial(_fused_vit_kernel, offs=offs, batch=B, seq=n,
                     enc_depth=ENC_DEPTH, dec_depth=DEC_DEPTH,
                     enc_heads=ENC_HEADS, dec_heads=DEC_HEADS)

    out_x = pl.pallas_call(
        kernel,
        out_shape=jax.ShapeDtypeStruct((B, IMGC_NUMCLASS), jnp.float32),
        in_specs=[_vmem_spec(), _vmem_spec()],
        out_specs=_vmem_spec(),
    )(wslab, patches)
    return {"out_x": out_x}
    # NOTE(v7x): a batch grid with dimension_semantics=("parallel",) (or pl.core_map
    # over a 2-core mesh) would light up the 2nd TensorCore once batch grows; the
    # current footprint (<1 MiB) is far below even v7x's VMEM limits.


# ------------------------------ parameter packing ------------------------------
def pack_params(params, batch):
    """Pack all parameters (+ derived constants) into one [rows, 128] f32 slab.

    Built ONCE outside jit. Returns (slab, offsets) where offsets maps
    name -> (row_offset, rows, cols) with 8-aligned, static row offsets.
    """
    S = NUM_PATCHES
    B = batch
    entries = []

    def add(name, a):
        a = np.asarray(a, dtype=np.float32)
        if a.ndim == 1:
            a = a[None, :]
        assert a.ndim == 2 and a.shape[1] <= SLAB_LANES, (name, a.shape)
        entries.append((name, a))

    def add_block(pfx, blk, dim, heads):
        dh = dim // heads
        scale = dh ** -0.5
        qkv_w = np.asarray(blk["qkv_w"], np.float32)    # [dim, 3*dim], cols = [q|k|v], head-major
        proj_w = np.asarray(blk["proj_w"], np.float32)  # [dim, dim]
        add(pfx + "n1_g", blk["n1_g"])
        add(pfx + "n1_b", blk["n1_b"])
        for h in range(heads):
            add(f"{pfx}wq{h}", qkv_w[:, h * dh:(h + 1) * dh] * scale)        # scale folded
            add(f"{pfx}wk{h}", qkv_w[:, dim + h * dh:dim + (h + 1) * dh])
            add(f"{pfx}wv{h}", qkv_w[:, 2 * dim + h * dh:2 * dim + (h + 1) * dh])
            add(f"{pfx}wo{h}", proj_w[h * dh:(h + 1) * dh, :])               # proj rows for head h
        # qkv_bias=False in the module -> qkv bias is identically zero; skipped (exact).
        add(pfx + "proj_b", blk["proj_b"])
        add(pfx + "n2_g", blk["n2_g"])
        add(pfx + "n2_b", blk["n2_b"])
        add(pfx + "fc1_w", blk["fc1_w"])
        add(pfx + "fc1_b", blk["fc1_b"])
        add(pfx + "fc2_w", blk["fc2_w"])
        add(pfx + "fc2_b", blk["fc2_b"])

    # encoder
    add("patch_w", params["patch_w"])
    pos_enc = (np.tile(np.asarray(params["pos_embed_enc"], np.float32), (B, 1))
               + np.asarray(params["patch_b"], np.float32))                  # patch_b folded
    add("pos_enc", pos_enc)
    for i, blk in enumerate(params["enc_blocks"]):
        add_block(f"e{i}_", blk, ENC_DIM, ENC_HEADS)
    add("enc_g", params["enc_norm_g"])
    add("enc_b", params["enc_norm_b"])

    # fused encoder_to_channel @ channel_to_decoder (exact algebraic merge)
    e2c_w = np.asarray(params["enc2ch_w"], np.float32)
    e2c_b = np.asarray(params["enc2ch_b"], np.float32)
    c2d_w = np.asarray(params["ch2dec_w"], np.float32)
    c2d_b = np.asarray(params["ch2dec_b"], np.float32)
    ch_w = e2c_w @ c2d_w
    ch_b = e2c_b @ c2d_w + c2d_b
    add("ch_w", ch_w)
    pos_dec = np.tile(np.asarray(params["pos_embed_dec"], np.float32), (B, 1)) + ch_b
    add("pos_dec", pos_dec)                                                  # ch bias folded

    # decoder
    for i, blk in enumerate(params["dec_blocks"]):
        add_block(f"d{i}_", blk, DEC_DIM, DEC_HEADS)

    # dec_norm gamma/beta folded into head: mean(x̂·g+b)@W + hb = mean(x̂)@(diag(g)W) + (b@W + hb)
    hw = np.asarray(params["head_w"], np.float32)
    hb = np.asarray(params["head_b"], np.float32)
    g = np.asarray(params["dec_norm_g"], np.float32).reshape(-1, 1)
    b = np.asarray(params["dec_norm_b"], np.float32)
    add("head_w", g * hw)
    add("head_b", hb + b @ hw)

    # constant attention block-diagonal bias and mean-pool matrix
    bid = np.repeat(np.arange(B), S)
    attn_mask = np.where(bid[:, None] == bid[None, :], 0.0, -1e30).astype(np.float32)
    add("attn_mask", attn_mask)                                              # [B*S, B*S]
    add("pool", np.kron(np.eye(B, dtype=np.float32), np.full((1, S), 1.0 / S, np.float32)))

    # layout: 8-aligned row offsets, single 128-lane slab
    offs = {}
    row = 0
    for name, a in entries:
        row = -(-row // 8) * 8
        offs[name] = (row, a.shape[0], a.shape[1])
        row += a.shape[0]
    total_rows = -(-row // 8) * 8
    slab = np.zeros((total_rows, SLAB_LANES), np.float32)
    for name, a in entries:
        off, r, c = offs[name]
        slab[off:off + r, :c] = a
    return jnp.asarray(slab), offs


# ------------------------------ param init ------------------------------------
def sinusoid_pos_embed(n_pos, dim):
    pos = np.arange(n_pos, dtype=np.float64)[:, None]
    i = np.arange(dim, dtype=np.float64)[None, :]
    angle = pos / np.power(10000.0, 2.0 * (i // 2) / dim)
    table = np.zeros((n_pos, dim), dtype=np.float64)
    table[:, 0::2] = np.sin(angle[:, 0::2])
    table[:, 1::2] = np.cos(angle[:, 1::2])
    return jnp.asarray(table, dtype=jnp.float32)   # [N, D]


def _init_block(key, dim, mlp_hidden):
    ks = jax.random.split(key, 4)
    s = 0.02
    return {
        "n1_g": jnp.ones((1, dim), jnp.float32),
        "n1_b": jnp.zeros((1, dim), jnp.float32),
        "qkv_w": s * jax.random.normal(ks[0], (dim, 3 * dim), jnp.float32),   # qkv_bias=False
        "proj_w": s * jax.random.normal(ks[1], (dim, dim), jnp.float32),
        "proj_b": jnp.zeros((1, dim), jnp.float32),
        "n2_g": jnp.ones((1, dim), jnp.float32),
        "n2_b": jnp.zeros((1, dim), jnp.float32),
        "fc1_w": s * jax.random.normal(ks[2], (dim, mlp_hidden), jnp.float32),
        "fc1_b": jnp.zeros((1, mlp_hidden), jnp.float32),
        "fc2_w": s * jax.random.normal(ks[3], (mlp_hidden, dim), jnp.float32),
        "fc2_b": jnp.zeros((1, dim), jnp.float32),
    }


def init_params(seed=0):
    key = jax.random.PRNGKey(seed)
    keys = jax.random.split(key, 8 + ENC_DEPTH + DEC_DEPTH)
    s = 0.02
    patch_dim = IN_CHANS * PATCH * PATCH
    return {
        "patch_w": s * jax.random.normal(keys[0], (patch_dim, ENC_DIM), jnp.float32),
        "patch_b": jnp.zeros((1, ENC_DIM), jnp.float32),
        "pos_embed_enc": sinusoid_pos_embed(NUM_PATCHES, ENC_DIM),
        "enc_blocks": [
            _init_block(keys[1 + i], ENC_DIM, int(MLP_RATIO * ENC_DIM)) for i in range(ENC_DEPTH)
        ],
        "enc_norm_g": jnp.ones((1, ENC_DIM), jnp.float32),
        "enc_norm_b": jnp.zeros((1, ENC_DIM), jnp.float32),
        "enc2ch_w": s * jax.random.normal(keys[1 + ENC_DEPTH], (ENC_DIM, CHANNEL_DIM), jnp.float32),
        "enc2ch_b": jnp.zeros((1, CHANNEL_DIM), jnp.float32),
        "ch2dec_w": s * jax.random.normal(keys[2 + ENC_DEPTH], (CHANNEL_DIM, DEC_DIM), jnp.float32),
        "ch2dec_b": jnp.zeros((1, DEC_DIM), jnp.float32),
        "pos_embed_dec": sinusoid_pos_embed(NUM_PATCHES, DEC_DIM),
        "dec_blocks": [
            _init_block(keys[3 + ENC_DEPTH + i], DEC_DIM, int(MLP_RATIO * DEC_DIM))
            for i in range(DEC_DEPTH)
        ],
        "dec_norm_g": jnp.ones((1, DEC_DIM), jnp.float32),
        "dec_norm_b": jnp.zeros((1, DEC_DIM), jnp.float32),
        "head_w": s * jax.random.normal(keys[4 + ENC_DEPTH + DEC_DEPTH], (DEC_DIM, IMGC_NUMCLASS), jnp.float32),
        "head_b": jnp.zeros((1, IMGC_NUMCLASS), jnp.float32),
    }


# --------------------------------- main ---------------------------------------
if __name__ == "__main__":
    key = jax.random.PRNGKey(0)
    k_img, _ = jax.random.split(key)
    B = 2
    img = jax.random.normal(k_img, (B, IN_CHANS, IMG_SIZE, IMG_SIZE), jnp.float32)  # NCHW
    bm_pos = jnp.zeros((B, NUM_PATCHES), dtype=bool)                                # mask (unused, "Van")

    params = init_params(0)
    wslab, offs = pack_params(params, batch=B)          # packed ONCE, outside jit

    fwd = jax.jit(partial(vit_van_cls_forward, offs=offs))
    out = fwd(wslab, img, bm_pos)
    jax.block_until_ready(out["out_x"])

    assert out["out_x"].shape == (B, IMGC_NUMCLASS)
    assert bool(jnp.all(jnp.isfinite(out["out_x"])))
    print("KERNEL_OK")
</pallas_src>

<mosaic_0001>
module attributes {stable_mosaic.version = 11 : i64} {
  func.func @_fused_vit_kernel(%arg0: memref<1696x128xf32, #tpu.memory_space<vmem>>, %arg1: memref<8x256xf32, #tpu.memory_space<vmem>>, %arg2: memref<2x10xf32, #tpu.memory_space<vmem>>) attributes {dimension_semantics = [], scalar_prefetch = 0 : i64, scratch_operands = 0 : i64, tpu.core_type = #tpu.core_type<tc>} {
    %c1680 = arith.constant 1680 : index
    %c0 = arith.constant 0 : index
    %0 = vector.load %arg0[%c1680, %c0] : memref<1696x128xf32, #tpu.memory_space<vmem>>, vector<8x8xf32>
    %c1688 = arith.constant 1688 : index
    %c0_0 = arith.constant 0 : index
    %1 = vector.load %arg0[%c1688, %c0_0] : memref<1696x128xf32, #tpu.memory_space<vmem>>, vector<2x8xf32>
    %c0_1 = arith.constant 0 : index
    %c0_2 = arith.constant 0 : index
    %2 = vector.load %arg1[%c0_1, %c0_2] : memref<8x256xf32, #tpu.memory_space<vmem>>, vector<8x256xf32>
    %c0_3 = arith.constant 0 : index
    %c0_4 = arith.constant 0 : index
    %3 = vector.load %arg0[%c0_3, %c0_4] : memref<1696x128xf32, #tpu.memory_space<vmem>>, vector<256x32xf32>
    %cst = arith.constant dense<0.000000e+00> : vector<8x32xf32>
    %4 = tpu.matmul %2, %3, %cst {dimension_numbers = #tpu.dot_dimension_numbers<[1], [0], [0], [1], [0, 0, 1, 1], [], []>} : vector<8x256xf32>, vector<256x32xf32>, vector<8x32xf32> -> vector<8x32xf32>
    %c256 = arith.constant 256 : index
    %c0_5 = arith.constant 0 : index
    %5 = vector.load %arg0[%c256, %c0_5] : memref<1696x128xf32, #tpu.memory_space<vmem>>, vector<8x32xf32>
    %6 = arith.addf %4, %5 : vector<8x32xf32>
    %c264 = arith.constant 264 : index
    %c0_6 = arith.constant 0 : index
    %7 = vector.load %arg0[%c264, %c0_6] : memref<1696x128xf32, #tpu.memory_space<vmem>>, vector<1x32xf32>
    %c272 = arith.constant 272 : index
    %c0_7 = arith.constant 0 : index
    %8 = vector.load %arg0[%c272, %c0_7] : memref<1696x128xf32, #tpu.memory_space<vmem>>, vector<1x32xf32>
    %cst_8 = arith.constant dense<0.000000e+00> : vector<8xf32>
    %9 = vector.multi_reduction <add>, %6, %cst_8 [1] : vector<8x32xf32> to vector<8xf32>
    %10 = vector.shape_cast %9 : vector<8xf32> to vector<8x1xf32>
    %cst_9 = arith.constant 3.200000e+01 : f32
    %11 = vector.broadcast %cst_9 : f32 to vector<8x1xf32>
    %12 = arith.divf %10, %11 : vector<8x1xf32>
    %13 = vector.broadcast %12 : vector<8x1xf32> to vector<8x32xf32>
    %14 = arith.subf %6, %13 : vector<8x32xf32>
    %15 = arith.mulf %14, %14 : vector<8x32xf32>
    %cst_10 = arith.constant dense<0.000000e+00> : vector<8xf32>
    %16 = vector.multi_reduction <add>, %15, %cst_10 [1] : vector<8x32xf32> to vector<8xf32>
    %17 = vector.shape_cast %16 : vector<8xf32> to vector<8x1xf32>
    %cst_11 = arith.constant 3.200000e+01 : f32
    %18 = vector.broadcast %cst_11 : f32 to vector<8x1xf32>
    %19 = arith.divf %17, %18 : vector<8x1xf32>
    %cst_12 = arith.constant 9.99999974E-6 : f32
    %20 = vector.broadcast %cst_12 : f32 to vector<8x1xf32>
    %21 = arith.addf %19, %20 : vector<8x1xf32>
    %22 = math.rsqrt %21 : vector<8x1xf32>
    %23 = vector.broadcast %22 : vector<8x1xf32> to vector<8x32xf32>
    %24 = arith.mulf %14, %23 : vector<8x32xf32>
    %25 = vector.broadcast %7 : vector<1x32xf32> to vector<8x32xf32>
    %26 = arith.mulf %24, %25 : vector<8x32xf32>
    %27 = vector.broadcast %8 : vector<1x32xf32> to vector<8x32xf32>
    %28 = arith.addf %26, %27 : vector<8x32xf32>
    %c280 = arith.constant 280 : index
    %c0_13 = arith.constant 0 : index
    %29 = vector.load %arg0[%c280, %c0_13] : memref<1696x128xf32, #tpu.memory_space<vmem>>, vector<32x16xf32>
    %cst_14 = arith.constant dense<0.000000e+00> : vector<8x16xf32>
    %30 = tpu.matmul %28, %29, %cst_14 {dimension_numbers = #tpu.dot_dimension_numbers<[1], [0], [0], [1], [0, 0, 1, 1], [], []>} : vector<8x32xf32>, vector<32x16xf32>, vector<8x16xf32> -> vector<8x16xf32>
    %c312 = arith.constant 312 : index
    %c0_15 = arith.constant 0 : index
    %31 = vector.load %arg0[%c312, %c0_15] : memref<1696x128xf32, #tpu.memory_space<vmem>>, vector<32x16xf32>
    %cst_16 = arith.constant dense<0.000000e+00> : vector<8x16xf32>
    %32 = tpu.matmul %28, %31, %cst_16 {dimension_numbers = #tpu.dot_dimension_numbers<[1], [0], [0], [1], [0, 0, 1, 1], [], []>} : vector<8x32xf32>, vector<32x16xf32>, vector<8x16xf32> -> vector<8x16xf32>
    %c344 = arith.constant 344 : index
    %c0_17 = arith.constant 0 : index
    %33 = vector.load %arg0[%c344, %c0_17] : memref<1696x128xf32, #tpu.memory_space<vmem>>, vector<32x16xf32>
    %cst_18 = arith.constant dense<0.000000e+00> : vector<8x16xf32>
    %34 = tpu.matmul %28, %33, %cst_18 {dimension_numbers = #tpu.dot_dimension_numbers<[1], [0], [0], [1], [0, 0, 1, 1], [], []>} : vector<8x32xf32>, vector<32x16xf32>, vector<8x16xf32> -> vector<8x16xf32>
    %cst_19 = arith.constant dense<0.000000e+00> : vector<8x8xf32>
    %35 = tpu.matmul %30, %32, %cst_19 {dimension_numbers = #tpu.dot_dimension_numbers<[1], [1], [0], [0], [0, 0, 1, 0], [], []>} : vector<8x16xf32>, vector<8x16xf32>, vector<8x8xf32> -> vector<8x8xf32>
    %36 = arith.addf %35, %0 : vector<8x8xf32>
    %cst_20 = arith.constant dense<0xFF800000> : vector<8xf32>
    %37 = vector.multi_reduction <maximumf>, %36, %cst_20 [1] : vector<8x8xf32> to vector<8xf32>
    %38 = vector.shape_cast %37 : vector<8xf32> to vector<8x1xf32>
    %39 = vector.broadcast %38 : vector<8x1xf32> to vector<8x8xf32>
    %40 = arith.subf %36, %39 : vector<8x8xf32>
    %41 = math.exp %40 : vector<8x8xf32>
    %cst_21 = arith.constant dense<0.000000e+00> : vector<8xf32>
    %42 = vector.multi_reduction <add>, %41, %cst_21 [1] : vector<8x8xf32> to vector<8xf32>
    %43 = vector.shape_cast %42 : vector<8xf32> to vector<8x1xf32>
    %44 = vector.broadcast %43 : vector<8x1xf32> to vector<8x8xf32>
    %45 = arith.divf %41, %44 : vector<8x8xf32>
    %cst_22 = arith.constant dense<0.000000e+00> : vector<8x16xf32>
    %46 = tpu.matmul %45, %34, %cst_22 {dimension_numbers = #tpu.dot_dimension_numbers<[1], [0], [0], [1], [0, 0, 1, 1], [], []>} : vector<8x8xf32>, vector<8x16xf32>, vector<8x16xf32> -> vector<8x16xf32>
    %c376 = arith.constant 376 : index
    %c0_23 = arith.constant 0 : index
    %47 = vector.load %arg0[%c376, %c0_23] : memref<1696x128xf32, #tpu.memory_space<vmem>>, vector<16x32xf32>
    %cst_24 = arith.constant dense<0.000000e+00> : vector<8x32xf32>
    %48 = tpu.matmul %46, %47, %cst_24 {dimension_numbers = #tpu.dot_dimension_numbers<[1], [0], [0], [1], [0, 0, 1, 1], [], []>} : vector<8x16xf32>, vector<16x32xf32>, vector<8x32xf32> -> vector<8x32xf32>
    %c392 = arith.constant 392 : index
    %c0_25 = arith.constant 0 : index
    %49 = vector.load %arg0[%c392, %c0_25] : memref<1696x128xf32, #tpu.memory_space<vmem>>, vector<32x16xf32>
    %cst_26 = arith.constant dense<0.000000e+00> : vector<8x16xf32>
    %50 = tpu.matmul %28, %49, %cst_26 {dimension_numbers = #tpu.dot_dimension_numbers<[1], [0], [0], [1], [0, 0, 1, 1], [], []>} : vector<8x32xf32>, vector<32x16xf32>, vector<8x16xf32> -> vector<8x16xf32>
    %c424 = arith.constant 424 : index
    %c0_27 = arith.constant 0 : index
    %51 = vector.load %arg0[%c424, %c0_27] : memref<1696x128xf32, #tpu.memory_space<vmem>>, vector<32x16xf32>
    %cst_28 = arith.constant dense<0.000000e+00> : vector<8x16xf32>
    %52 = tpu.matmul %28, %51, %cst_28 {dimension_numbers = #tpu.dot_dimension_numbers<[1], [0], [0], [1], [0, 0, 1, 1], [], []>} : vector<8x32xf32>, vector<32x16xf32>, vector<8x16xf32> -> vector<8x16xf32>
    %c456 = arith.constant 456 : index
    %c0_29 = arith.constant 0 : index
    %53 = vector.load %arg0[%c456, %c0_29] : memref<1696x128xf32, #tpu.memory_space<vmem>>, vector<32x16xf32>
    %cst_30 = arith.constant dense<0.000000e+00> : vector<8x16xf32>
    %54 = tpu.matmul %28, %53, %cst_30 {dimension_numbers = #tpu.dot_dimension_numbers<[1], [0], [0], [1], [0, 0, 1, 1], [], []>} : vector<8x32xf32>, vector<32x16xf32>, vector<8x16xf32> -> vector<8x16xf32>
    %cst_31 = arith.constant dense<0.000000e+00> : vector<8x8xf32>
    %55 = tpu.matmul %50, %52, %cst_31 {dimension_numbers = #tpu.dot_dimension_numbers<[1], [1], [0], [0], [0, 0, 1, 0], [], []>} : vector<8x16xf32>, vector<8x16xf32>, vector<8x8xf32> -> vector<8x8xf32>
    %56 = arith.addf %55, %0 : vector<8x8xf32>
    %cst_32 = arith.constant dense<0xFF800000> : vector<8xf32>
    %57 = vector.multi_reduction <maximumf>, %56, %cst_32 [1] : vector<8x8xf32> to vector<8xf32>
    %58 = vector.shape_cast %57 : vector<8xf32> to vector<8x1xf32>
    %59 = vector.broadcast %58 : vector<8x1xf32> to vector<8x8xf32>
    %60 = arith.subf %56, %59 : vector<8x8xf32>
    %61 = math.exp %60 : vector<8x8xf32>
    %cst_33 = arith.constant dense<0.000000e+00> : vector<8xf32>
    %62 = vector.multi_reduction <add>, %61, %cst_33 [1] : vector<8x8xf32> to vector<8xf32>
    %63 = vector.shape_cast %62 : vector<8xf32> to vector<8x1xf32>
    %64 = vector.broadcast %63 : vector<8x1xf32> to vector<8x8xf32>
    %65 = arith.divf %61, %64 : vector<8x8xf32>
    %cst_34 = arith.constant dense<0.000000e+00> : vector<8x16xf32>
    %66 = tpu.matmul %65, %54, %cst_34 {dimension_numbers = #tpu.dot_dimension_numbers<[1], [0], [0], [1], [0, 0, 1, 1], [], []>} : vector<8x8xf32>, vector<8x16xf32>, vector<8x16xf32> -> vector<8x16xf32>
    %c488 = arith.constant 488 : index
    %c0_35 = arith.constant 0 : index
    %67 = vector.load %arg0[%c488, %c0_35] : memref<1696x128xf32, #tpu.memory_space<vmem>>, vector<16x32xf32>
    %cst_36 = arith.constant dense<0.000000e+00> : vector<8x32xf32>
    %68 = tpu.matmul %66, %67, %cst_36 {dimension_numbers = #tpu.dot_dimension_numbers<[1], [0], [0], [1], [0, 0, 1, 1], [], []>} : vector<8x16xf32>, vector<16x32xf32>, vector<8x32xf32> -> vector<8x32xf32>
    %69 = arith.addf %48, %68 : vector<8x32xf32>
    %70 = arith.addf %6, %69 : vector<8x32xf32>
    %c504 = arith.constant 504 : index
    %c0_37 = arith.constant 0 : index
    %71 = vector.load %arg0[%c504, %c0_37] : memref<1696x128xf32, #tpu.memory_space<vmem>>, vector<1x32xf32>
    %72 = vector.broadcast %71 : vector<1x32xf32> to vector<8x32xf32>
    %73 = arith.addf %70, %72 : vector<8x32xf32>
    %c512 = arith.constant 512 : index
    %c0_38 = arith.constant 0 : index
    %74 = vector.load %arg0[%c512, %c0_38] : memref<1696x128xf32, #tpu.memory_space<vmem>>, vector<1x32xf32>
    %c520 = arith.constant 520 : index
    %c0_39 = arith.constant 0 : index
    %75 = vector.load %arg0[%c520, %c0_39] : memref<1696x128xf32, #tpu.memory_space<vmem>>, vector<1x32xf32>
    %cst_40 = arith.constant dense<0.000000e+00> : vector<8xf32>
    %76 = vector.multi_reduction <add>, %73, %cst_40 [1] : vector<8x32xf32> to vector<8xf32>
    %77 = vector.shape_cast %76 : vector<8xf32> to vector<8x1xf32>
    %cst_41 = arith.constant 3.200000e+01 : f32
    %78 = vector.broadcast %cst_41 : f32 to vector<8x1xf32>
    %79 = arith.divf %77, %78 : vector<8x1xf32>
    %80 = vector.broadcast %79 : vector<8x1xf32> to vector<8x32xf32>
    %81 = arith.subf %73, %80 : vector<8x32xf32>
    %82 = arith.mulf %81, %81 : vector<8x32xf32>
    %cst_42 = arith.constant dense<0.000000e+00> : vector<8xf32>
    %83 = vector.multi_reduction <add>, %82, %cst_42 [1] : vector<8x32xf32> to vector<8xf32>
    %84 = vector.shape_cast %83 : vector<8xf32> to vector<8x1xf32>
    %cst_43 = arith.constant 3.200000e+01 : f32
    %85 = vector.broadcast %cst_43 : f32 to vector<8x1xf32>
    %86 = arith.divf %84, %85 : vector<8x1xf32>
    %cst_44 = arith.constant 9.99999974E-6 : f32
    %87 = vector.broadcast %cst_44 : f32 to vector<8x1xf32>
    %88 = arith.addf %86, %87 : vector<8x1xf32>
    %89 = math.rsqrt %88 : vector<8x1xf32>
    %90 = vector.broadcast %89 : vector<8x1xf32> to vector<8x32xf32>
    %91 = arith.mulf %81, %90 : vector<8x32xf32>
    %92 = vector.broadcast %74 : vector<1x32xf32> to vector<8x32xf32>
    %93 = arith.mulf %91, %92 : vector<8x32xf32>
    %94 = vector.broadcast %75 : vector<1x32xf32> to vector<8x32xf32>
    %95 = arith.addf %93, %94 : vector<8x32xf32>
    %c528 = arith.constant 528 : index
    %c0_45 = arith.constant 0 : index
    %96 = vector.load %arg0[%c528, %c0_45] : memref<1696x128xf32, #tpu.memory_space<vmem>>, vector<32x128xf32>
    %cst_46 = arith.constant dense<0.000000e+00> : vector<8x128xf32>
    %97 = tpu.matmul %95, %96, %cst_46 {dimension_numbers = #tpu.dot_dimension_numbers<[1], [0], [0], [1], [0, 0, 1, 1], [], []>} : vector<8x32xf32>, vector<32x128xf32>, vector<8x128xf32> -> vector<8x128xf32>
    %c560 = arith.constant 560 : index
    %c0_47 = arith.constant 0 : index
    %98 = vector.load %arg0[%c560, %c0_47] : memref<1696x128xf32, #tpu.memory_space<vmem>>, vector<1x128xf32>
    %99 = vector.broadcast %98 : vector<1x128xf32> to vector<8x128xf32>
    %100 = arith.addf %97, %99 : vector<8x128xf32>
    %cst_48 = arith.constant 5.000000e-01 : f32
    %101 = vector.broadcast %cst_48 : f32 to vector<8x128xf32>
    %102 = arith.mulf %101, %100 : vector<8x128xf32>
    %cst_49 = arith.constant 0.707106769 : f32
    %103 = vector.broadcast %cst_49 : f32 to vector<8x128xf32>
    %104 = arith.mulf %100, %103 : vector<8x128xf32>
    %105 = math.absf %104 : vector<8x128xf32>
    %cst_50 = arith.constant 0.327591091 : f32
    %106 = vector.broadcast %cst_50 : f32 to vector<8x128xf32>
    %107 = arith.mulf %106, %105 : vector<8x128xf32>
    %cst_51 = arith.constant 1.000000e+00 : f32
    %108 = vector.broadcast %cst_51 : f32 to vector<8x128xf32>
    %109 = arith.addf %108, %107 : vector<8x128xf32>
    %cst_52 = arith.constant 1.000000e+00 : f32
    %110 = vector.broadcast %cst_52 : f32 to vector<8x128xf32>
    %111 = arith.divf %110, %109 : vector<8x128xf32>
    %cst_53 = arith.constant 1.06140542 : f32
    %112 = vector.broadcast %cst_53 : f32 to vector<8x128xf32>
    %113 = arith.mulf %111, %112 : vector<8x128xf32>
    %cst_54 = arith.constant -1.45315206 : f32
    %114 = vector.broadcast %cst_54 : f32 to vector<8x128xf32>
    %115 = arith.addf %114, %113 : vector<8x128xf32>
    %116 = arith.mulf %111, %115 : vector<8x128xf32>
    %cst_55 = arith.constant 1.42141378 : f32
    %117 = vector.broadcast %cst_55 : f32 to vector<8x128xf32>
    %118 = arith.addf %117, %116 : vector<8x128xf32>
    %119 = arith.mulf %111, %118 : vector<8x128xf32>
    %cst_56 = arith.constant -0.284496725 : f32
    %120 = vector.broadcast %cst_56 : f32 to vector<8x128xf32>
    %121 = arith.addf %120, %119 : vector<8x128xf32>
    %122 = arith.mulf %111, %121 : vector<8x128xf32>
    %cst_57 = arith.constant 0.254829586 : f32
    %123 = vector.broadcast %cst_57 : f32 to vector<8x128xf32>
    %124 = arith.addf %123, %122 : vector<8x128xf32>
    %125 = arith.mulf %111, %124 : vector<8x128xf32>
    %cst_58 = arith.constant 0.000000e+00 : f32
    %126 = vector.broadcast %cst_58 : f32 to vector<8x128xf32>
    %127 = arith.subf %126, %105 : vector<8x128xf32>
    %128 = arith.mulf %127, %105 : vector<8x128xf32>
    %129 = math.exp %128 : vector<8x128xf32>
    %130 = arith.mulf %125, %129 : vector<8x128xf32>
    %cst_59 = arith.constant 1.000000e+00 : f32
    %131 = vector.broadcast %cst_59 : f32 to vector<8x128xf32>
    %132 = arith.subf %131, %130 : vector<8x128xf32>
    %cst_60 = arith.constant 0.000000e+00 : f32
    %133 = vector.broadcast %cst_60 : f32 to vector<8x128xf32>
    %134 = arith.cmpf oge, %104, %133 : vector<8x128xf32>
    %cst_61 = arith.constant 0.000000e+00 : f32
    %135 = vector.broadcast %cst_61 : f32 to vector<8x128xf32>
    %136 = arith.subf %135, %132 : vector<8x128xf32>
    %137 = arith.select %134, %132, %136 : vector<8x128xi1>, vector<8x128xf32>
    %cst_62 = arith.constant 1.000000e+00 : f32
    %138 = vector.broadcast %cst_62 : f32 to vector<8x128xf32>
    %139 = arith.addf %138, %137 : vector<8x128xf32>
    %140 = arith.mulf %102, %139 : vector<8x128xf32>
    %c568 = arith.constant 568 : index
    %c0_63 = arith.constant 0 : index
    %141 = vector.load %arg0[%c568, %c0_63] : memref<1696x128xf32, #tpu.memory_space<vmem>>, vector<128x32xf32>
    %cst_64 = arith.constant dense<0.000000e+00> : vector<8x32xf32>
    %142 = tpu.matmul %140, %141, %cst_64 {dimension_numbers = #tpu.dot_dimension_numbers<[1], [0], [0], [1], [0, 0, 1, 1], [], []>} : vector<8x128xf32>, vector<128x32xf32>, vector<8x32xf32> -> vector<8x32xf32>
    %143 = arith.addf %73, %142 : vector<8x32xf32>
    %c696 = arith.constant 696 : index
    %c0_65 = arith.constant 0 : index
    %144 = vector.load %arg0[%c696, %c0_65] : memref<1696x128xf32, #tpu.memory_space<vmem>>, vector<1x32xf32>
    %145 = vector.broadcast %144 : vector<1x32xf32> to vector<8x32xf32>
    %146 = arith.addf %143, %145 : vector<8x32xf32>
    %c704 = arith.constant 704 : index
    %c0_66 = arith.constant 0 : index
    %147 = vector.load %arg0[%c704, %c0_66] : memref<1696x128xf32, #tpu.memory_space<vmem>>, vector<1x32xf32>
    %c712 = arith.constant 712 : index
    %c0_67 = arith.constant 0 : index
    %148 = vector.load %arg0[%c712, %c0_67] : memref<1696x128xf32, #tpu.memory_space<vmem>>, vector<1x32xf32>
    %cst_68 = arith.constant dense<0.000000e+00> : vector<8xf32>
    %149 = vector.multi_reduction <add>, %146, %cst_68 [1] : vector<8x32xf32> to vector<8xf32>
    %150 = vector.shape_cast %149 : vector<8xf32> to vector<8x1xf32>
    %cst_69 = arith.constant 3.200000e+01 : f32
    %151 = vector.broadcast %cst_69 : f32 to vector<8x1xf32>
    %152 = arith.divf %150, %151 : vector<8x1xf32>
    %153 = vector.broadcast %152 : vector<8x1xf32> to vector<8x32xf32>
    %154 = arith.subf %146, %153 : vector<8x32xf32>
    %155 = arith.mulf %154, %154 : vector<8x32xf32>
    %cst_70 = arith.constant dense<0.000000e+00> : vector<8xf32>
    %156 = vector.multi_reduction <add>, %155, %cst_70 [1] : vector<8x32xf32> to vector<8xf32>
    %157 = vector.shape_cast %156 : vector<8xf32> to vector<8x1xf32>
    %cst_71 = arith.constant 3.200000e+01 : f32
    %158 = vector.broadcast %cst_71 : f32 to vector<8x1xf32>
    %159 = arith.divf %157, %158 : vector<8x1xf32>
    %cst_72 = arith.constant 9.99999974E-6 : f32
    %160 = vector.broadcast %cst_72 : f32 to vector<8x1xf32>
    %161 = arith.addf %159, %160 : vector<8x1xf32>
    %162 = math.rsqrt %161 : vector<8x1xf32>
    %163 = vector.broadcast %162 : vector<8x1xf32> to vector<8x32xf32>
    %164 = arith.mulf %154, %163 : vector<8x32xf32>
    %165 = vector.broadcast %147 : vector<1x32xf32> to vector<8x32xf32>
    %166 = arith.mulf %164, %165 : vector<8x32xf32>
    %167 = vector.broadcast %148 : vector<1x32xf32> to vector<8x32xf32>
    %168 = arith.addf %166, %167 : vector<8x32xf32>
    %c720 = arith.constant 720 : index
    %c0_73 = arith.constant 0 : index
    %169 = vector.load %arg0[%c720, %c0_73] : memref<1696x128xf32, #tpu.memory_space<vmem>>, vector<32x16xf32>
    %cst_74 = arith.constant dense<0.000000e+00> : vector<8x16xf32>
    %170 = tpu.matmul %168, %169, %cst_74 {dimension_numbers = #tpu.dot_dimension_numbers<[1], [0], [0], [1], [0, 0, 1, 1], [], []>} : vector<8x32xf32>, vector<32x16xf32>, vector<8x16xf32> -> vector<8x16xf32>
    %c752 = arith.constant 752 : index
    %c0_75 = arith.constant 0 : index
    %171 = vector.load %arg0[%c752, %c0_75] : memref<1696x128xf32, #tpu.memory_space<vmem>>, vector<32x16xf32>
    %cst_76 = arith.constant dense<0.000000e+00> : vector<8x16xf32>
    %172 = tpu.matmul %168, %171, %cst_76 {dimension_numbers = #tpu.dot_dimension_numbers<[1], [0], [0], [1], [0, 0, 1, 1], [], []>} : vector<8x32xf32>, vector<32x16xf32>, vector<8x16xf32> -> vector<8x16xf32>
    %c784 = arith.constant 784 : index
    %c0_77 = arith.constant 0 : index
    %173 = vector.load %arg0[%c784, %c0_77] : memref<1696x128xf32, #tpu.memory_space<vmem>>, vector<32x16xf32>
    %cst_78 = arith.constant dense<0.000000e+00> : vector<8x16xf32>
    %174 = tpu.matmul %168, %173, %cst_78 {dimension_numbers = #tpu.dot_dimension_numbers<[1], [0], [0], [1], [0, 0, 1, 1], [], []>} : vector<8x32xf32>, vector<32x16xf32>, vector<8x16xf32> -> vector<8x16xf32>
    %cst_79 = arith.constant dense<0.000000e+00> : vector<8x8xf32>
    %175 = tpu.matmul %170, %172, %cst_79 {dimension_numbers = #tpu.dot_dimension_numbers<[1], [1], [0], [0], [0, 0, 1, 0], [], []>} : vector<8x16xf32>, vector<8x16xf32>, vector<8x8xf32> -> vector<8x8xf32>
    %176 = arith.addf %175, %0 : vector<8x8xf32>
    %cst_80 = arith.constant dense<0xFF800000> : vector<8xf32>
    %177 = vector.multi_reduction <maximumf>, %176, %cst_80 [1] : vector<8x8xf32> to vector<8xf32>
    %178 = vector.shape_cast %177 : vector<8xf32> to vector<8x1xf32>
    %179 = vector.broadcast %178 : vector<8x1xf32> to vector<8x8xf32>
    %180 = arith.subf %176, %179 : vector<8x8xf32>
    %181 = math.exp %180 : vector<8x8xf32>
    %cst_81 = arith.constant dense<0.000000e+00> : vector<8xf32>
    %182 = vector.multi_reduction <add>, %181, %cst_81 [1] : vector<8x8xf32> to vector<8xf32>
    %183 = vector.shape_cast %182 : vector<8xf32> to vector<8x1xf32>
    %184 = vector.broadcast %183 : vector<8x1xf32> to vector<8x8xf32>
    %185 = arith.divf %181, %184 : vector<8x8xf32>
    %cst_82 = arith.constant dense<0.000000e+00> : vector<8x16xf32>
    %186 = tpu.matmul %185, %174, %cst_82 {dimension_numbers = #tpu.dot_dimension_numbers<[1], [0], [0], [1], [0, 0, 1, 1], [], []>} : vector<8x8xf32>, vector<8x16xf32>, vector<8x16xf32> -> vector<8x16xf32>
    %c816 = arith.constant 816 : index
    %c0_83 = arith.constant 0 : index
    %187 = vector.load %arg0[%c816, %c0_83] : memref<1696x128xf32, #tpu.memory_space<vmem>>, vector<16x32xf32>
    %cst_84 = arith.constant dense<0.000000e+00> : vector<8x32xf32>
    %188 = tpu.matmul %186, %187, %cst_84 {dimension_numbers = #tpu.dot_dimension_numbers<[1], [0], [0], [1], [0, 0, 1, 1], [], []>} : vector<8x16xf32>, vector<16x32xf32>, vector<8x32xf32> -> vector<8x32xf32>
    %c832 = arith.constant 832 : index
    %c0_85 = arith.constant 0 : index
    %189 = vector.load %arg0[%c832, %c0_85] : memref<1696x128xf32, #tpu.memory_space<vmem>>, vector<32x16xf32>
    %cst_86 = arith.constant dense<0.000000e+00> : vector<8x16xf32>
    %190 = tpu.matmul %168, %189, %cst_86 {dimension_numbers = #tpu.dot_dimension_numbers<[1], [0], [0], [1], [0, 0, 1, 1], [], []>} : vector<8x32xf32>, vector<32x16xf32>, vector<8x16xf32> -> vector<8x16xf32>
    %c864 = arith.constant 864 : index
    %c0_87 = arith.constant 0 : index
    %191 = vector.load %arg0[%c864, %c0_87] : memref<1696x128xf32, #tpu.memory_space<vmem>>, vector<32x16xf32>
    %cst_88 = arith.constant dense<0.000000e+00> : vector<8x16xf32>
    %192 = tpu.matmul %168, %191, %cst_88 {dimension_numbers = #tpu.dot_dimension_numbers<[1], [0], [0], [1], [0, 0, 1, 1], [], []>} : vector<8x32xf32>, vector<32x16xf32>, vector<8x16xf32> -> vector<8x16xf32>
    %c896 = arith.constant 896 : index
    %c0_89 = arith.constant 0 : index
    %193 = vector.load %arg0[%c896, %c0_89] : memref<1696x128xf32, #tpu.memory_space<vmem>>, vector<32x16xf32>
    %cst_90 = arith.constant dense<0.000000e+00> : vector<8x16xf32>
    %194 = tpu.matmul %168, %193, %cst_90 {dimension_numbers = #tpu.dot_dimension_numbers<[1], [0], [0], [1], [0, 0, 1, 1], [], []>} : vector<8x32xf32>, vector<32x16xf32>, vector<8x16xf32> -> vector<8x16xf32>
    %cst_91 = arith.constant dense<0.000000e+00> : vector<8x8xf32>
    %195 = tpu.matmul %190, %192, %cst_91 {dimension_numbers = #tpu.dot_dimension_numbers<[1], [1], [0], [0], [0, 0, 1, 0], [], []>} : vector<8x16xf32>, vector<8x16xf32>, vector<8x8xf32> -> vector<8x8xf32>
    %196 = arith.addf %195, %0 : vector<8x8xf32>
    %cst_92 = arith.constant dense<0xFF800000> : vector<8xf32>
    %197 = vector.multi_reduction <maximumf>, %196, %cst_92 [1] : vector<8x8xf32> to vector<8xf32>
    %198 = vector.shape_cast %197 : vector<8xf32> to vector<8x1xf32>
    %199 = vector.broadcast %198 : vector<8x1xf32> to vector<8x8xf32>
    %200 = arith.subf %196, %199 : vector<8x8xf32>
    %201 = math.exp %200 : vector<8x8xf32>
    %cst_93 = arith.constant dense<0.000000e+00> : vector<8xf32>
    %202 = vector.multi_reduction <add>, %201, %cst_93 [1] : vector<8x8xf32> to vector<8xf32>
    %203 = vector.shape_cast %202 : vector<8xf32> to vector<8x1xf32>
    %204 = vector.broadcast %203 : vector<8x1xf32> to vector<8x8xf32>
    %205 = arith.divf %201, %204 : vector<8x8xf32>
    %cst_94 = arith.constant dense<0.000000e+00> : vector<8x16xf32>
    %206 = tpu.matmul %205, %194, %cst_94 {dimension_numbers = #tpu.dot_dimension_numbers<[1], [0], [0], [1], [0, 0, 1, 1], [], []>} : vector<8x8xf32>, vector<8x16xf32>, vector<8x16xf32> -> vector<8x16xf32>
    %c928 = arith.constant 928 : index
    %c0_95 = arith.constant 0 : index
    %207 = vector.load %arg0[%c928, %c0_95] : memref<1696x128xf32, #tpu.memory_space<vmem>>, vector<16x32xf32>
    %cst_96 = arith.constant dense<0.000000e+00> : vector<8x32xf32>
    %208 = tpu.matmul %206, %207, %cst_96 {dimension_numbers = #tpu.dot_dimension_numbers<[1], [0], [0], [1], [0, 0, 1, 1], [], []>} : vector<8x16xf32>, vector<16x32xf32>, vector<8x32xf32> -> vector<8x32xf32>
    %209 = arith.addf %188, %208 : vector<8x32xf32>
    %210 = arith.addf %146, %209 : vector<8x32xf32>
    %c944 = arith.constant 944 : index
    %c0_97 = arith.constant 0 : index
    %211 = vector.load %arg0[%c944, %c0_97] : memref<1696x128xf32, #tpu.memory_space<vmem>>, vector<1x32xf32>
    %212 = vector.broadcast %211 : vector<1x32xf32> to vector<8x32xf32>
    %213 = arith.addf %210, %212 : vector<8x32xf32>
    %c952 = arith.constant 952 : index
    %c0_98 = arith.constant 0 : index
    %214 = vector.load %arg0[%c952, %c0_98] : memref<1696x128xf32, #tpu.memory_space<vmem>>, vector<1x32xf32>
    %c960 = arith.constant 960 : index
    %c0_99 = arith.constant 0 : index
    %215 = vector.load %arg0[%c960, %c0_99] : memref<1696x128xf32, #tpu.memory_space<vmem>>, vector<1x32xf32>
    %cst_100 = arith.constant dense<0.000000e+00> : vector<8xf32>
    %216 = vector.multi_reduction <add>, %213, %cst_100 [1] : vector<8x32xf32> to vector<8xf32>
    %217 = vector.shape_cast %216 : vector<8xf32> to vector<8x1xf32>
    %cst_101 = arith.constant 3.200000e+01 : f32
    %218 = vector.broadcast %cst_101 : f32 to vector<8x1xf32>
    %219 = arith.divf %217, %218 : vector<8x1xf32>
    %220 = vector.broadcast %219 : vector<8x1xf32> to vector<8x32xf32>
    %221 = arith.subf %213, %220 : vector<8x32xf32>
    %222 = arith.mulf %221, %221 : vector<8x32xf32>
    %cst_102 = arith.constant dense<0.000000e+00> : vector<8xf32>
    %223 = vector.multi_reduction <add>, %222, %cst_102 [1] : vector<8x32xf32> to vector<8xf32>
    %224 = vector.shape_cast %223 : vector<8xf32> to vector<8x1xf32>
    %cst_103 = arith.constant 3.200000e+01 : f32
    %225 = vector.broadcast %cst_103 : f32 to vector<8x1xf32>
    %226 = arith.divf %224, %225 : vector<8x1xf32>
    %cst_104 = arith.constant 9.99999974E-6 : f32
    %227 = vector.broadcast %cst_104 : f32 to vector<8x1xf32>
    %228 = arith.addf %226, %227 : vector<8x1xf32>
    %229 = math.rsqrt %228 : vector<8x1xf32>
    %230 = vector.broadcast %229 : vector<8x1xf32> to vector<8x32xf32>
    %231 = arith.mulf %221, %230 : vector<8x32xf32>
    %232 = vector.broadcast %214 : vector<1x32xf32> to vector<8x32xf32>
    %233 = arith.mulf %231, %232 : vector<8x32xf32>
    %234 = vector.broadcast %215 : vector<1x32xf32> to vector<8x32xf32>
    %235 = arith.addf %233, %234 : vector<8x32xf32>
    %c968 = arith.constant 968 : index
    %c0_105 = arith.constant 0 : index
    %236 = vector.load %arg0[%c968, %c0_105] : memref<1696x128xf32, #tpu.memory_space<vmem>>, vector<32x128xf32>
    %cst_106 = arith.constant dense<0.000000e+00> : vector<8x128xf32>
    %237 = tpu.matmul %235, %236, %cst_106 {dimension_numbers = #tpu.dot_dimension_numbers<[1], [0], [0], [1], [0, 0, 1, 1], [], []>} : vector<8x32xf32>, vector<32x128xf32>, vector<8x128xf32> -> vector<8x128xf32>
    %c1000 = arith.constant 1000 : index
    %c0_107 = arith.constant 0 : index
    %238 = vector.load %arg0[%c1000, %c0_107] : memref<1696x128xf32, #tpu.memory_space<vmem>>, vector<1x128xf32>
    %239 = vector.broadcast %238 : vector<1x128xf32> to vector<8x128xf32>
    %240 = arith.addf %237, %239 : vector<8x128xf32>
    %cst_108 = arith.constant 5.000000e-01 : f32
    %241 = vector.broadcast %cst_108 : f32 to vector<8x128xf32>
    %242 = arith.mulf %241, %240 : vector<8x128xf32>
    %cst_109 = arith.constant 0.707106769 : f32
    %243 = vector.broadcast %cst_109 : f32 to vector<8x128xf32>
    %244 = arith.mulf %240, %243 : vector<8x128xf32>
    %245 = math.absf %244 : vector<8x128xf32>
    %cst_110 = arith.constant 0.327591091 : f32
    %246 = vector.broadcast %cst_110 : f32 to vector<8x128xf32>
    %247 = arith.mulf %246, %245 : vector<8x128xf32>
    %cst_111 = arith.constant 1.000000e+00 : f32
    %248 = vector.broadcast %cst_111 : f32 to vector<8x128xf32>
    %249 = arith.addf %248, %247 : vector<8x128xf32>
    %cst_112 = arith.constant 1.000000e+00 : f32
    %250 = vector.broadcast %cst_112 : f32 to vector<8x128xf32>
    %251 = arith.divf %250, %249 : vector<8x128xf32>
    %cst_113 = arith.constant 1.06140542 : f32
    %252 = vector.broadcast %cst_113 : f32 to vector<8x128xf32>
    %253 = arith.mulf %251, %252 : vector<8x128xf32>
    %cst_114 = arith.constant -1.45315206 : f32
    %254 = vector.broadcast %cst_114 : f32 to vector<8x128xf32>
    %255 = arith.addf %254, %253 : vector<8x128xf32>
    %256 = arith.mulf %251, %255 : vector<8x128xf32>
    %cst_115 = arith.constant 1.42141378 : f32
    %257 = vector.broadcast %cst_115 : f32 to vector<8x128xf32>
    %258 = arith.addf %257, %256 : vector<8x128xf32>
    %259 = arith.mulf %251, %258 : vector<8x128xf32>
    %cst_116 = arith.constant -0.284496725 : f32
    %260 = vector.broadcast %cst_116 : f32 to vector<8x128xf32>
    %261 = arith.addf %260, %259 : vector<8x128xf32>
    %262 = arith.mulf %251, %261 : vector<8x128xf32>
    %cst_117 = arith.constant 0.254829586 : f32
    %263 = vector.broadcast %cst_117 : f32 to vector<8x128xf32>
    %264 = arith.addf %263, %262 : vector<8x128xf32>
    %265 = arith.mulf %251, %264 : vector<8x128xf32>
    %cst_118 = arith.constant 0.000000e+00 : f32
    %266 = vector.broadcast %cst_118 : f32 to vector<8x128xf32>
    %267 = arith.subf %266, %245 : vector<8x128xf32>
    %268 = arith.mulf %267, %245 : vector<8x128xf32>
    %269 = math.exp %268 : vector<8x128xf32>
    %270 = arith.mulf %265, %269 : vector<8x128xf32>
    %cst_119 = arith.constant 1.000000e+00 : f32
    %271 = vector.broadcast %cst_119 : f32 to vector<8x128xf32>
    %272 = arith.subf %271, %270 : vector<8x128xf32>
    %cst_120 = arith.constant 0.000000e+00 : f32
    %273 = vector.broadcast %cst_120 : f32 to vector<8x128xf32>
    %274 = arith.cmpf oge, %244, %273 : vector<8x128xf32>
    %cst_121 = arith.constant 0.000000e+00 : f32
    %275 = vector.broadcast %cst_121 : f32 to vector<8x128xf32>
    %276 = arith.subf %275, %272 : vector<8x128xf32>
    %277 = arith.select %274, %272, %276 : vector<8x128xi1>, vector<8x128xf32>
    %cst_122 = arith.constant 1.000000e+00 : f32
    %278 = vector.broadcast %cst_122 : f32 to vector<8x128xf32>
    %279 = arith.addf %278, %277 : vector<8x128xf32>
    %280 = arith.mulf %242, %279 : vector<8x128xf32>
    %c1008 = arith.constant 1008 : index
    %c0_123 = arith.constant 0 : index
    %281 = vector.load %arg0[%c1008, %c0_123] : memref<1696x128xf32, #tpu.memory_space<vmem>>, vector<128x32xf32>
    %cst_124 = arith.constant dense<0.000000e+00> : vector<8x32xf32>
    %282 = tpu.matmul %280, %281, %cst_124 {dimension_numbers = #tpu.dot_dimension_numbers<[1], [0], [0], [1], [0, 0, 1, 1], [], []>} : vector<8x128xf32>, vector<128x32xf32>, vector<8x32xf32> -> vector<8x32xf32>
    %283 = arith.addf %213, %282 : vector<8x32xf32>
    %c1136 = arith.constant 1136 : index
    %c0_125 = arith.constant 0 : index
    %284 = vector.load %arg0[%c1136, %c0_125] : memref<1696x128xf32, #tpu.memory_space<vmem>>, vector<1x32xf32>
    %285 = vector.broadcast %284 : vector<1x32xf32> to vector<8x32xf32>
    %286 = arith.addf %283, %285 : vector<8x32xf32>
    %c1144 = arith.constant 1144 : index
    %c0_126 = arith.constant 0 : index
    %287 = vector.load %arg0[%c1144, %c0_126] : memref<1696x128xf32, #tpu.memory_space<vmem>>, vector<1x32xf32>
    %c1152 = arith.constant 1152 : index
    %c0_127 = arith.constant 0 : index
    %288 = vector.load %arg0[%c1152, %c0_127] : memref<1696x128xf32, #tpu.memory_space<vmem>>, vector<1x32xf32>
    %cst_128 = arith.constant dense<0.000000e+00> : vector<8xf32>
    %289 = vector.multi_reduction <add>, %286, %cst_128 [1] : vector<8x32xf32> to vector<8xf32>
    %290 = vector.shape_cast %289 : vector<8xf32> to vector<8x1xf32>
    %cst_129 = arith.constant 3.200000e+01 : f32
    %291 = vector.broadcast %cst_129 : f32 to vector<8x1xf32>
    %292 = arith.divf %290, %291 : vector<8x1xf32>
    %293 = vector.broadcast %292 : vector<8x1xf32> to vector<8x32xf32>
    %294 = arith.subf %286, %293 : vector<8x32xf32>
    %295 = arith.mulf %294, %294 : vector<8x32xf32>
    %cst_130 = arith.constant dense<0.000000e+00> : vector<8xf32>
    %296 = vector.multi_reduction <add>, %295, %cst_130 [1] : vector<8x32xf32> to vector<8xf32>
    %297 = vector.shape_cast %296 : vector<8xf32> to vector<8x1xf32>
    %cst_131 = arith.constant 3.200000e+01 : f32
    %298 = vector.broadcast %cst_131 : f32 to vector<8x1xf32>
    %299 = arith.divf %297, %298 : vector<8x1xf32>
    %cst_132 = arith.constant 9.99999974E-6 : f32
    %300 = vector.broadcast %cst_132 : f32 to vector<8x1xf32>
    %301 = arith.addf %299, %300 : vector<8x1xf32>
    %302 = math.rsqrt %301 : vector<8x1xf32>
    %303 = vector.broadcast %302 : vector<8x1xf32> to vector<8x32xf32>
    %304 = arith.mulf %294, %303 : vector<8x32xf32>
    %305 = vector.broadcast %287 : vector<1x32xf32> to vector<8x32xf32>
    %306 = arith.mulf %304, %305 : vector<8x32xf32>
    %307 = vector.broadcast %288 : vector<1x32xf32> to vector<8x32xf32>
    %308 = arith.addf %306, %307 : vector<8x32xf32>
    %c1160 = arith.constant 1160 : index
    %c0_133 = arith.constant 0 : index
    %309 = vector.load %arg0[%c1160, %c0_133] : memref<1696x128xf32, #tpu.memory_space<vmem>>, vector<32x32xf32>
    %cst_134 = arith.constant dense<0.000000e+00> : vector<8x32xf32>
    %310 = tpu.matmul %308, %309, %cst_134 {dimension_numbers = #tpu.dot_dimension_numbers<[1], [0], [0], [1], [0, 0, 1, 1], [], []>} : vector<8x32xf32>, vector<32x32xf32>, vector<8x32xf32> -> vector<8x32xf32>
    %c1192 = arith.constant 1192 : index
    %c0_135 = arith.constant 0 : index
    %311 = vector.load %arg0[%c1192, %c0_135] : memref<1696x128xf32, #tpu.memory_space<vmem>>, vector<8x32xf32>
    %312 = arith.addf %310, %311 : vector<8x32xf32>
    %c1200 = arith.constant 1200 : index
    %c0_136 = arith.constant 0 : index
    %313 = vector.load %arg0[%c1200, %c0_136] : memref<1696x128xf32, #tpu.memory_space<vmem>>, vector<1x32xf32>
    %c1208 = arith.constant 1208 : index
    %c0_137 = arith.constant 0 : index
    %314 = vector.load %arg0[%c1208, %c0_137] : memref<1696x128xf32, #tpu.memory_space<vmem>>, vector<1x32xf32>
    %cst_138 = arith.constant dense<0.000000e+00> : vector<8xf32>
    %315 = vector.multi_reduction <add>, %312, %cst_138 [1] : vector<8x32xf32> to vector<8xf32>
    %316 = vector.shape_cast %315 : vector<8xf32> to vector<8x1xf32>
    %cst_139 = arith.constant 3.200000e+01 : f32
    %317 = vector.broadcast %cst_139 : f32 to vector<8x1xf32>
    %318 = arith.divf %316, %317 : vector<8x1xf32>
    %319 = vector.broadcast %318 : vector<8x1xf32> to vector<8x32xf32>
    %320 = arith.subf %312, %319 : vector<8x32xf32>
    %321 = arith.mulf %320, %320 : vector<8x32xf32>
    %cst_140 = arith.constant dense<0.000000e+00> : vector<8xf32>
    %322 = vector.multi_reduction <add>, %321, %cst_140 [1] : vector<8x32xf32> to vector<8xf32>
    %323 = vector.shape_cast %322 : vector<8xf32> to vector<8x1xf32>
    %cst_141 = arith.constant 3.200000e+01 : f32
    %324 = vector.broadcast %cst_141 : f32 to vector<8x1xf32>
    %325 = arith.divf %323, %324 : vector<8x1xf32>
    %cst_142 = arith.constant 9.99999974E-6 : f32
    %326 = vector.broadcast %cst_142 : f32 to vector<8x1xf32>
    %327 = arith.addf %325, %326 : vector<8x1xf32>
    %328 = math.rsqrt %327 : vector<8x1xf32>
    %329 = vector.broadcast %328 : vector<8x1xf32> to vector<8x32xf32>
    %330 = arith.mulf %320, %329 : vector<8x32xf32>
    %331 = vector.broadcast %313 : vector<1x32xf32> to vector<8x32xf32>
    %332 = arith.mulf %330, %331 : vector<8x32xf32>
    %333 = vector.broadcast %314 : vector<1x32xf32> to vector<8x32xf32>
    %334 = arith.addf %332, %333 : vector<8x32xf32>
    %c1216 = arith.constant 1216 : index
    %c0_143 = arith.constant 0 : index
    %335 = vector.load %arg0[%c1216, %c0_143] : memref<1696x128xf32, #tpu.memory_space<vmem>>, vector<32x16xf32>
    %cst_144 = arith.constant dense<0.000000e+00> : vector<8x16xf32>
    %336 = tpu.matmul %334, %335, %cst_144 {dimension_numbers = #tpu.dot_dimension_numbers<[1], [0], [0], [1], [0, 0, 1, 1], [], []>} : vector<8x32xf32>, vector<32x16xf32>, vector<8x16xf32> -> vector<8x16xf32>
    %c1248 = arith.constant 1248 : index
    %c0_145 = arith.constant 0 : index
    %337 = vector.load %arg0[%c1248, %c0_145] : memref<1696x128xf32, #tpu.memory_space<vmem>>, vector<32x16xf32>
    %cst_146 = arith.constant dense<0.000000e+00> : vector<8x16xf32>
    %338 = tpu.matmul %334, %337, %cst_146 {dimension_numbers = #tpu.dot_dimension_numbers<[1], [0], [0], [1], [0, 0, 1, 1], [], []>} : vector<8x32xf32>, vector<32x16xf32>, vector<8x16xf32> -> vector<8x16xf32>
    %c1280 = arith.constant 1280 : index
    %c0_147 = arith.constant 0 : index
    %339 = vector.load %arg0[%c1280, %c0_147] : memref<1696x128xf32, #tpu.memory_space<vmem>>, vector<32x16xf32>
    %cst_148 = arith.constant dense<0.000000e+00> : vector<8x16xf32>
    %340 = tpu.matmul %334, %339, %cst_148 {dimension_numbers = #tpu.dot_dimension_numbers<[1], [0], [0], [1], [0, 0, 1, 1], [], []>} : vector<8x32xf32>, vector<32x16xf32>, vector<8x16xf32> -> vector<8x16xf32>
    %cst_149 = arith.constant dense<0.000000e+00> : vector<8x8xf32>
    %341 = tpu.matmul %336, %338, %cst_149 {dimension_numbers = #tpu.dot_dimension_numbers<[1], [1], [0], [0], [0, 0, 1, 0], [], []>} : vector<8x16xf32>, vector<8x16xf32>, vector<8x8xf32> -> vector<8x8xf32>
    %342 = arith.addf %341, %0 : vector<8x8xf32>
    %cst_150 = arith.constant dense<0xFF800000> : vector<8xf32>
    %343 = vector.multi_reduction <maximumf>, %342, %cst_150 [1] : vector<8x8xf32> to vector<8xf32>
    %344 = vector.shape_cast %343 : vector<8xf32> to vector<8x1xf32>
    %345 = vector.broadcast %344 : vector<8x1xf32> to vector<8x8xf32>
    %346 = arith.subf %342, %345 : vector<8x8xf32>
    %347 = math.exp %346 : vector<8x8xf32>
    %cst_151 = arith.constant dense<0.000000e+00> : vector<8xf32>
    %348 = vector.multi_reduction <add>, %347, %cst_151 [1] : vector<8x8xf32> to vector<8xf32>
    %349 = vector.shape_cast %348 : vector<8xf32> to vector<8x1xf32>
    %350 = vector.broadcast %349 : vector<8x1xf32> to vector<8x8xf32>
    %351 = arith.divf %347, %350 : vector<8x8xf32>
    %cst_152 = arith.constant dense<0.000000e+00> : vector<8x16xf32>
    %352 = tpu.matmul %351, %340, %cst_152 {dimension_numbers = #tpu.dot_dimension_numbers<[1], [0], [0], [1], [0, 0, 1, 1], [], []>} : vector<8x8xf32>, vector<8x16xf32>, vector<8x16xf32> -> vector<8x16xf32>
    %c1312 = arith.constant 1312 : index
    %c0_153 = arith.constant 0 : index
    %353 = vector.load %arg0[%c1312, %c0_153] : memref<1696x128xf32, #tpu.memory_space<vmem>>, vector<16x32xf32>
    %cst_154 = arith.constant dense<0.000000e+00> : vector<8x32xf32>
    %354 = tpu.matmul %352, %353, %cst_154 {dimension_numbers = #tpu.dot_dimension_numbers<[1], [0], [0], [1], [0, 0, 1, 1], [], []>} : vector<8x16xf32>, vector<16x32xf32>, vector<8x32xf32> -> vector<8x32xf32>
    %c1328 = arith.constant 1328 : index
    %c0_155 = arith.constant 0 : index
    %355 = vector.load %arg0[%c1328, %c0_155] : memref<1696x128xf32, #tpu.memory_space<vmem>>, vector<32x16xf32>
    %cst_156 = arith.constant dense<0.000000e+00> : vector<8x16xf32>
    %356 = tpu.matmul %334, %355, %cst_156 {dimension_numbers = #tpu.dot_dimension_numbers<[1], [0], [0], [1], [0, 0, 1, 1], [], []>} : vector<8x32xf32>, vector<32x16xf32>, vector<8x16xf32> -> vector<8x16xf32>
    %c1360 = arith.constant 1360 : index
    %c0_157 = arith.constant 0 : index
    %357 = vector.load %arg0[%c1360, %c0_157] : memref<1696x128xf32, #tpu.memory_space<vmem>>, vector<32x16xf32>
    %cst_158 = arith.constant dense<0.000000e+00> : vector<8x16xf32>
    %358 = tpu.matmul %334, %357, %cst_158 {dimension_numbers = #tpu.dot_dimension_numbers<[1], [0], [0], [1], [0, 0, 1, 1], [], []>} : vector<8x32xf32>, vector<32x16xf32>, vector<8x16xf32> -> vector<8x16xf32>
    %c1392 = arith.constant 1392 : index
    %c0_159 = arith.constant 0 : index
    %359 = vector.load %arg0[%c1392, %c0_159] : memref<1696x128xf32, #tpu.memory_space<vmem>>, vector<32x16xf32>
    %cst_160 = arith.constant dense<0.000000e+00> : vector<8x16xf32>
    %360 = tpu.matmul %334, %359, %cst_160 {dimension_numbers = #tpu.dot_dimension_numbers<[1], [0], [0], [1], [0, 0, 1, 1], [], []>} : vector<8x32xf32>, vector<32x16xf32>, vector<8x16xf32> -> vector<8x16xf32>
    %cst_161 = arith.constant dense<0.000000e+00> : vector<8x8xf32>
    %361 = tpu.matmul %356, %358, %cst_161 {dimension_numbers = #tpu.dot_dimension_numbers<[1], [1], [0], [0], [0, 0, 1, 0], [], []>} : vector<8x16xf32>, vector<8x16xf32>, vector<8x8xf32> -> vector<8x8xf32>
    %362 = arith.addf %361, %0 : vector<8x8xf32>
    %cst_162 = arith.constant dense<0xFF800000> : vector<8xf32>
    %363 = vector.multi_reduction <maximumf>, %362, %cst_162 [1] : vector<8x8xf32> to vector<8xf32>
    %364 = vector.shape_cast %363 : vector<8xf32> to vector<8x1xf32>
    %365 = vector.broadcast %364 : vector<8x1xf32> to vector<8x8xf32>
    %366 = arith.subf %362, %365 : vector<8x8xf32>
    %367 = math.exp %366 : vector<8x8xf32>
    %cst_163 = arith.constant dense<0.000000e+00> : vector<8xf32>
    %368 = vector.multi_reduction <add>, %367, %cst_163 [1] : vector<8x8xf32> to vector<8xf32>
    %369 = vector.shape_cast %368 : vector<8xf32> to vector<8x1xf32>
    %370 = vector.broadcast %369 : vector<8x1xf32> to vector<8x8xf32>
    %371 = arith.divf %367, %370 : vector<8x8xf32>
    %cst_164 = arith.constant dense<0.000000e+00> : vector<8x16xf32>
    %372 = tpu.matmul %371, %360, %cst_164 {dimension_numbers = #tpu.dot_dimension_numbers<[1], [0], [0], [1], [0, 0, 1, 1], [], []>} : vector<8x8xf32>, vector<8x16xf32>, vector<8x16xf32> -> vector<8x16xf32>
    %c1424 = arith.constant 1424 : index
    %c0_165 = arith.constant 0 : index
    %373 = vector.load %arg0[%c1424, %c0_165] : memref<1696x128xf32, #tpu.memory_space<vmem>>, vector<16x32xf32>
    %cst_166 = arith.constant dense<0.000000e+00> : vector<8x32xf32>
    %374 = tpu.matmul %372, %373, %cst_166 {dimension_numbers = #tpu.dot_dimension_numbers<[1], [0], [0], [1], [0, 0, 1, 1], [], []>} : vector<8x16xf32>, vector<16x32xf32>, vector<8x32xf32> -> vector<8x32xf32>
    %375 = arith.addf %354, %374 : vector<8x32xf32>
    %376 = arith.addf %312, %375 : vector<8x32xf32>
    %c1440 = arith.constant 1440 : index
    %c0_167 = arith.constant 0 : index
    %377 = vector.load %arg0[%c1440, %c0_167] : memref<1696x128xf32, #tpu.memory_space<vmem>>, vector<1x32xf32>
    %378 = vector.broadcast %377 : vector<1x32xf32> to vector<8x32xf32>
    %379 = arith.addf %376, %378 : vector<8x32xf32>
    %c1448 = arith.constant 1448 : index
    %c0_168 = arith.constant 0 : index
    %380 = vector.load %arg0[%c1448, %c0_168] : memref<1696x128xf32, #tpu.memory_space<vmem>>, vector<1x32xf32>
    %c1456 = arith.constant 1456 : index
    %c0_169 = arith.constant 0 : index
    %381 = vector.load %arg0[%c1456, %c0_169] : memref<1696x128xf32, #tpu.memory_space<vmem>>, vector<1x32xf32>
    %cst_170 = arith.constant dense<0.000000e+00> : vector<8xf32>
    %382 = vector.multi_reduction <add>, %379, %cst_170 [1] : vector<8x32xf32> to vector<8xf32>
    %383 = vector.shape_cast %382 : vector<8xf32> to vector<8x1xf32>
    %cst_171 = arith.constant 3.200000e+01 : f32
    %384 = vector.broadcast %cst_171 : f32 to vector<8x1xf32>
    %385 = arith.divf %383, %384 : vector<8x1xf32>
    %386 = vector.broadcast %385 : vector<8x1xf32> to vector<8x32xf32>
    %387 = arith.subf %379, %386 : vector<8x32xf32>
    %388 = arith.mulf %387, %387 : vector<8x32xf32>
    %cst_172 = arith.constant dense<0.000000e+00> : vector<8xf32>
    %389 = vector.multi_reduction <add>, %388, %cst_172 [1] : vector<8x32xf32> to vector<8xf32>
    %390 = vector.shape_cast %389 : vector<8xf32> to vector<8x1xf32>
    %cst_173 = arith.constant 3.200000e+01 : f32
    %391 = vector.broadcast %cst_173 : f32 to vector<8x1xf32>
    %392 = arith.divf %390, %391 : vector<8x1xf32>
    %cst_174 = arith.constant 9.99999974E-6 : f32
    %393 = vector.broadcast %cst_174 : f32 to vector<8x1xf32>
    %394 = arith.addf %392, %393 : vector<8x1xf32>
    %395 = math.rsqrt %394 : vector<8x1xf32>
    %396 = vector.broadcast %395 : vector<8x1xf32> to vector<8x32xf32>
    %397 = arith.mulf %387, %396 : vector<8x32xf32>
    %398 = vector.broadcast %380 : vector<1x32xf32> to vector<8x32xf32>
    %399 = arith.mulf %397, %398 : vector<8x32xf32>
    %400 = vector.broadcast %381 : vector<1x32xf32> to vector<8x32xf32>
    %401 = arith.addf %399, %400 : vector<8x32xf32>
    %c1464 = arith.constant 1464 : index
    %c0_175 = arith.constant 0 : index
    %402 = vector.load %arg0[%c1464, %c0_175] : memref<1696x128xf32, #tpu.memory_space<vmem>>, vector<32x128xf32>
    %cst_176 = arith.constant dense<0.000000e+00> : vector<8x128xf32>
    %403 = tpu.matmul %401, %402, %cst_176 {dimension_numbers = #tpu.dot_dimension_numbers<[1], [0], [0], [1], [0, 0, 1, 1], [], []>} : vector<8x32xf32>, vector<32x128xf32>, vector<8x128xf32> -> vector<8x128xf32>
    %c1496 = arith.constant 1496 : index
    %c0_177 = arith.constant 0 : index
    %404 = vector.load %arg0[%c1496, %c0_177] : memref<1696x128xf32, #tpu.memory_space<vmem>>, vector<1x128xf32>
    %405 = vector.broadcast %404 : vector<1x128xf32> to vector<8x128xf32>
    %406 = arith.addf %403, %405 : vector<8x128xf32>
    %cst_178 = arith.constant 5.000000e-01 : f32
    %407 = vector.broadcast %cst_178 : f32 to vector<8x128xf32>
    %408 = arith.mulf %407, %406 : vector<8x128xf32>
    %cst_179 = arith.constant 0.707106769 : f32
    %409 = vector.broadcast %cst_179 : f32 to vector<8x128xf32>
    %410 = arith.mulf %406, %409 : vector<8x128xf32>
    %411 = math.absf %410 : vector<8x128xf32>
    %cst_180 = arith.constant 0.327591091 : f32
    %412 = vector.broadcast %cst_180 : f32 to vector<8x128xf32>
    %413 = arith.mulf %412, %411 : vector<8x128xf32>
    %cst_181 = arith.constant 1.000000e+00 : f32
    %414 = vector.broadcast %cst_181 : f32 to vector<8x128xf32>
    %415 = arith.addf %414, %413 : vector<8x128xf32>
    %cst_182 = arith.constant 1.000000e+00 : f32
    %416 = vector.broadcast %cst_182 : f32 to vector<8x128xf32>
    %417 = arith.divf %416, %415 : vector<8x128xf32>
    %cst_183 = arith.constant 1.06140542 : f32
    %418 = vector.broadcast %cst_183 : f32 to vector<8x128xf32>
    %419 = arith.mulf %417, %418 : vector<8x128xf32>
    %cst_184 = arith.constant -1.45315206 : f32
    %420 = vector.broadcast %cst_184 : f32 to vector<8x128xf32>
    %421 = arith.addf %420, %419 : vector<8x128xf32>
    %422 = arith.mulf %417, %421 : vector<8x128xf32>
    %cst_185 = arith.constant 1.42141378 : f32
    %423 = vector.broadcast %cst_185 : f32 to vector<8x128xf32>
    %424 = arith.addf %423, %422 : vector<8x128xf32>
    %425 = arith.mulf %417, %424 : vector<8x128xf32>
    %cst_186 = arith.constant -0.284496725 : f32
    %426 = vector.broadcast %cst_186 : f32 to vector<8x128xf32>
    %427 = arith.addf %426, %425 : vector<8x128xf32>
    %428 = arith.mulf %417, %427 : vector<8x128xf32>
    %cst_187 = arith.constant 0.254829586 : f32
    %429 = vector.broadcast %cst_187 : f32 to vector<8x128xf32>
    %430 = arith.addf %429, %428 : vector<8x128xf32>
    %431 = arith.mulf %417, %430 : vector<8x128xf32>
    %cst_188 = arith.constant 0.000000e+00 : f32
    %432 = vector.broadcast %cst_188 : f32 to vector<8x128xf32>
    %433 = arith.subf %432, %411 : vector<8x128xf32>
    %434 = arith.mulf %433, %411 : vector<8x128xf32>
    %435 = math.exp %434 : vector<8x128xf32>
    %436 = arith.mulf %431, %435 : vector<8x128xf32>
    %cst_189 = arith.constant 1.000000e+00 : f32
    %437 = vector.broadcast %cst_189 : f32 to vector<8x128xf32>
    %438 = arith.subf %437, %436 : vector<8x128xf32>
    %cst_190 = arith.constant 0.000000e+00 : f32
    %439 = vector.broadcast %cst_190 : f32 to vector<8x128xf32>
    %440 = arith.cmpf oge, %410, %439 : vector<8x128xf32>
    %cst_191 = arith.constant 0.000000e+00 : f32
    %441 = vector.broadcast %cst_191 : f32 to vector<8x128xf32>
    %442 = arith.subf %441, %438 : vector<8x128xf32>
    %443 = arith.select %440, %438, %442 : vector<8x128xi1>, vector<8x128xf32>
    %cst_192 = arith.constant 1.000000e+00 : f32
    %444 = vector.broadcast %cst_192 : f32 to vector<8x128xf32>
    %445 = arith.addf %444, %443 : vector<8x128xf32>
    %446 = arith.mulf %408, %445 : vector<8x128xf32>
    %c1504 = arith.constant 1504 : index
    %c0_193 = arith.constant 0 : index
    %447 = vector.load %arg0[%c1504, %c0_193] : memref<1696x128xf32, #tpu.memory_space<vmem>>, vector<128x32xf32>
    %cst_194 = arith.constant dense<0.000000e+00> : vector<8x32xf32>
    %448 = tpu.matmul %446, %447, %cst_194 {dimension_numbers = #tpu.dot_dimension_numbers<[1], [0], [0], [1], [0, 0, 1, 1], [], []>} : vector<8x128xf32>, vector<128x32xf32>, vector<8x32xf32> -> vector<8x32xf32>
    %449 = arith.addf %379, %448 : vector<8x32xf32>
    %c1632 = arith.constant 1632 : index
    %c0_195 = arith.constant 0 : index
    %450 = vector.load %arg0[%c1632, %c0_195] : memref<1696x128xf32, #tpu.memory_space<vmem>>, vector<1x32xf32>
    %451 = vector.broadcast %450 : vector<1x32xf32> to vector<8x32xf32>
    %452 = arith.addf %449, %451 : vector<8x32xf32>
    %cst_196 = arith.constant dense<0.000000e+00> : vector<8xf32>
    %453 = vector.multi_reduction <add>, %452, %cst_196 [1] : vector<8x32xf32> to vector<8xf32>
    %454 = vector.shape_cast %453 : vector<8xf32> to vector<8x1xf32>
    %cst_197 = arith.constant 3.200000e+01 : f32
    %455 = vector.broadcast %cst_197 : f32 to vector<8x1xf32>
    %456 = arith.divf %454, %455 : vector<8x1xf32>
    %457 = vector.broadcast %456 : vector<8x1xf32> to vector<8x32xf32>
    %458 = arith.subf %452, %457 : vector<8x32xf32>
    %459 = arith.mulf %458, %458 : vector<8x32xf32>
    %cst_198 = arith.constant dense<0.000000e+00> : vector<8xf32>
    %460 = vector.multi_reduction <add>, %459, %cst_198 [1] : vector<8x32xf32> to vector<8xf32>
    %461 = vector.shape_cast %460 : vector<8xf32> to vector<8x1xf32>
    %cst_199 = arith.constant 3.200000e+01 : f32
    %462 = vector.broadcast %cst_199 : f32 to vector<8x1xf32>
    %463 = arith.divf %461, %462 : vector<8x1xf32>
    %cst_200 = arith.constant 9.99999974E-6 : f32
    %464 = vector.broadcast %cst_200 : f32 to vector<8x1xf32>
    %465 = arith.addf %463, %464 : vector<8x1xf32>
    %466 = math.rsqrt %465 : vector<8x1xf32>
    %467 = vector.broadcast %466 : vector<8x1xf32> to vector<8x32xf32>
    %468 = arith.mulf %458, %467 : vector<8x32xf32>
    %cst_201 = arith.constant dense<0.000000e+00> : vector<2x32xf32>
    %469 = tpu.matmul %1, %468, %cst_201 {dimension_numbers = #tpu.dot_dimension_numbers<[1], [0], [0], [1], [0, 0, 1, 1], [], []>} : vector<2x8xf32>, vector<8x32xf32>, vector<2x32xf32> -> vector<2x32xf32>
    %c1640 = arith.constant 1640 : index
    %c0_202 = arith.constant 0 : index
    %470 = vector.load %arg0[%c1640, %c0_202] : memref<1696x128xf32, #tpu.memory_space<vmem>>, vector<32x10xf32>
    %cst_203 = arith.constant dense<0.000000e+00> : vector<2x10xf32>
    %471 = tpu.matmul %469, %470, %cst_203 {dimension_numbers = #tpu.dot_dimension_numbers<[1], [0], [0], [1], [0, 0, 1, 1], [], []>} : vector<2x32xf32>, vector<32x10xf32>, vector<2x10xf32> -> vector<2x10xf32>
    %c1672 = arith.constant 1672 : index
    %c0_204 = arith.constant 0 : index
    %472 = vector.load %arg0[%c1672, %c0_204] : memref<1696x128xf32, #tpu.memory_space<vmem>>, vector<1x10xf32>
    %473 = vector.broadcast %472 : vector<1x10xf32> to vector<2x10xf32>
    %474 = arith.addf %471, %473 : vector<2x10xf32>
    %c0_205 = arith.constant 0 : index
    %c0_206 = arith.constant 0 : index
    %475 = vector.load %arg2[%c0_205, %c0_206] : memref<2x10xf32, #tpu.memory_space<vmem>>, vector<2x10xf32>
    tpu.vector_store %arg2[%c0_205, %c0_206], %474 {strides = array<i32>} : memref<2x10xf32, #tpu.memory_space<vmem>>, vector<2x10xf32>,
    return
  }
}

</mosaic_0001>

<llo_original>
// kernel: vit_van_cls_forward.1
$region0: #{vit_van_cls_forward.1}
  #allocation0 [shape = 'u32[]', space=smem, size = 0x4, offset = 0x4, fixed_abs, tag = 'smem constant byte address 0x4 - core index']
  #allocation1 [shape = 'u32[144,128]{1,0:T(1,128)}', space=vmem, size = 0x12000, scoped, tag = 'internal scratch']
  %s0 = inlined_call_operand.hbm [shape: f32[1696,128], index: 0, kind: input, shape index: {}]
  %s1 = inlined_call_operand.vmem [shape: f32[8,256], index: 1, kind: input, shape index: {}]
  %s2 = inlined_call_operand.hbm [shape: f32[2,10], index: 2, kind: output, shape index: {}]
  %s3 = sld [smem:[#allocation0]]
  $region22: #{vit_van_cls_forward.1} parent=0
    _
  %s5 = ssub.s32 1, %s3
  %s6 = scalar_select 0, %s5, %s3
  $region1: #{vit_van_cls_forward.1} parent=0
    #allocation2 [shape = 'u8[868352]{0}', space=vmem, size = 0xd4000, scoped, tag = 'input window, operand 0, single buffered']
    #allocation3 [shape = 's32[1]{0}', space=sflag, size = 0x4, scoped, tag = 'scoped memory for vit_van_cls_forward.1']
    #allocation4 [shape = 's32[1]{0}', space=sflag, size = 0x4, scoped, tag = 'scoped memory for vit_van_cls_forward.1']
    #allocation5 [shape = 'u8[1024]{0}', space=vmem, size = 0x400, scoped, tag = 'output window, operand 0, single buffered']
    %7 = vsyncpa [#allocation3], 0
    %8 = vsyncpa [#allocation4], 0
    // Predicated region
    $region2: #{vit_van_cls_forward.1} parent=1 // pred_check
      _
    $region3: #{vit_van_cls_forward.1} parent=1 // pred_check_branch
      %10 = sbr.rel (0) target = $region5
    $region4: #{vit_van_cls_forward.1} parent=1 // pred_region
      %s12 = ssub.s32 27136, 27136
      %13 = vsyncadd [#allocation3], %s12
      %s14 = sshll.u32 [#allocation2], 4
      %s15 = int_to_ptr.vmem [resolvable:$true] %s14
      %20 = dma.hbm_to_vmem [thread:$0]  %s0, 27136, %s15, [#allocation3], 128, 128, 8
    $region5: #{vit_van_cls_forward.1} parent=1 // pred_fallthru
      _
    // Predicated region
    $region6: #{vit_van_cls_forward.1} parent=1 // pred_check
      _
    $region7: #{vit_van_cls_forward.1} parent=1 // pred_check_branch
      %22 = sbr.rel (0) target = $region9
    $region8: #{vit_van_cls_forward.1} parent=1 // pred_region
      _
    $region9: #{vit_van_cls_forward.1} parent=1 // pred_fallthru
      _
    // Predicated region
    $region10: #{vit_van_cls_forward.1} parent=1 // pred_check
      _
    $region11: #{vit_van_cls_forward.1} parent=1 // pred_check_branch
      %24 = sbr.rel (0) target = $region13
    $region12: #{vit_van_cls_forward.1} parent=1 // pred_region
      %25 = dma.done [#allocation3], 27136
    $region13: #{vit_van_cls_forward.1} parent=1 // pred_fallthru
      _
    %v26 = vld [vmem:[#allocation2 + $0x690] sm:$0xff]
    %v27 = vld [vmem:[#allocation2 + $0x698] sm:$0x3]
    %v28 = vld [vmem:[%s1] sm:$0xff]
    %v29 = vld [vmem:[%s1 + $0x8] sm:$0xff]
    %v30 = vld [vmem:[#allocation2] sm:$0xff]
    %v31 = vld [vmem:[#allocation2 + $0x8] sm:$0xff]
    %v32 = vld [vmem:[#allocation2 + $0x10] sm:$0xff]
    %v33 = vld [vmem:[#allocation2 + $0x18] sm:$0xff]
    %v34 = vld [vmem:[#allocation2 + $0x20] sm:$0xff]
    %v35 = vld [vmem:[#allocation2 + $0x28] sm:$0xff]
    %v36 = vld [vmem:[#allocation2 + $0x30] sm:$0xff]
    %v37 = vld [vmem:[#allocation2 + $0x38] sm:$0xff]
    %v38 = vld [vmem:[#allocation2 + $0x40] sm:$0xff]
    %v39 = vld [vmem:[#allocation2 + $0x48] sm:$0xff]
    %v40 = vld [vmem:[#allocation2 + $0x50] sm:$0xff]
    %v41 = vld [vmem:[#allocation2 + $0x58] sm:$0xff]
    %v42 = vld [vmem:[#allocation2 + $0x60] sm:$0xff]
    %v43 = vld [vmem:[#allocation2 + $0x68] sm:$0xff]
    %v44 = vld [vmem:[#allocation2 + $0x70] sm:$0xff]
    %v45 = vld [vmem:[#allocation2 + $0x78] sm:$0xff]
    %v46 = vld [vmem:[#allocation2 + $0x80] sm:$0xff]
    %v47 = vld [vmem:[#allocation2 + $0x88] sm:$0xff]
    %v48 = vld [vmem:[#allocation2 + $0x90] sm:$0xff]
    %v49 = vld [vmem:[#allocation2 + $0x98] sm:$0xff]
    %v50 = vld [vmem:[#allocation2 + $0xa0] sm:$0xff]
    %v51 = vld [vmem:[#allocation2 + $0xa8] sm:$0xff]
    %v52 = vld [vmem:[#allocation2 + $0xb0] sm:$0xff]
    %v53 = vld [vmem:[#allocation2 + $0xb8] sm:$0xff]
    %v54 = vld [vmem:[#allocation2 + $0xc0] sm:$0xff]
    %v55 = vld [vmem:[#allocation2 + $0xc8] sm:$0xff]
    %v56 = vld [vmem:[#allocation2 + $0xd0] sm:$0xff]
    %v57 = vld [vmem:[#allocation2 + $0xd8] sm:$0xff]
    %v58 = vld [vmem:[#allocation2 + $0xe0] sm:$0xff]
    %v59 = vld [vmem:[#allocation2 + $0xe8] sm:$0xff]
    %v60 = vld [vmem:[#allocation2 + $0xf0] sm:$0xff]
    %v61 = vld [vmem:[#allocation2 + $0xf8] sm:$0xff]
    %v62 = vld [vmem:[#allocation2 + $0x100] sm:$0xff]
    %63 = vmatprep.subr.mxu0 0.0
    %64 = vmatpush1.msra.mxu0 %v30
    %65 = vmatprep.subr.mxu0 0.0
    %66 = vmatpush1.msra.mxu0 %v31
    %67 = vmatprep.subr.mxu0 0.0
    %68 = vmatpush1.msra.mxu0 %v32
    %69 = vmatprep.subr.mxu0 0.0
    %70 = vmatpush1.msra.mxu0 %v33
    %71 = vmatprep.subr.mxu0 0.0
    %72 = vmatpush1.msra.mxu0 %v34
    %73 = vmatprep.subr.mxu0 0.0
    %74 = vmatpush1.msra.mxu0 %v35
    %75 = vmatprep.subr.mxu0 0.0
    %76 = vmatpush1.msra.mxu0 %v36
    %77 = vmatprep.subr.mxu0 0.0
    %78 = vmatpush1.msra.mxu0 %v37
    %79 = vmatprep.subr.mxu0 0.0
    %80 = vmatpush1.msra.mxu0 %v38
    %81 = vmatprep.subr.mxu0 0.0
    %82 = vmatpush1.msra.mxu0 %v39
    %83 = vmatprep.subr.mxu0 0.0
    %84 = vmatpush1.msra.mxu0 %v40
    %85 = vmatprep.subr.mxu0 0.0
    %86 = vmatpush1.msra.mxu0 %v41
    %87 = vmatprep.subr.mxu0 0.0
    %88 = vmatpush1.msra.mxu0 %v42
    %89 = vmatprep.subr.mxu0 0.0
    %90 = vmatpush1.msra.mxu0 %v43
    %91 = vmatprep.subr.mxu0 0.0
    %92 = vmatpush1.msra.mxu0 %v44
    %93 = vmatprep.subr.mxu0 0.0
    %94 = vmatpush1.msra.mxu0 %v45
    %95 = vmatprep.subr.mxu0 0.0
    %96 = vmatpush1.msra.mxu0 %v46
    %97 = vmatprep.subr.mxu0 0.0
    %98 = vmatpush1.msra.mxu0 %v47
    %99 = vmatprep.subr.mxu0 0.0
    %100 = vmatpush1.msra.mxu0 %v48
    %101 = vmatprep.subr.mxu0 0.0
    %102 = vmatpush1.msra.mxu0 %v49
    %103 = vmatprep.subr.mxu0 0.0
    %104 = vmatpush1.msra.mxu0 %v50
    %105 = vmatprep.subr.mxu0 0.0
    %106 = vmatpush1.msra.mxu0 %v51
    %107 = vmatprep.subr.mxu0 0.0
    %108 = vmatpush1.msra.mxu0 %v52
    %109 = vmatprep.subr.mxu0 0.0
    %110 = vmatpush1.msra.mxu0 %v53
    %111 = vmatprep.subr.mxu0 0.0
    %112 = vmatpush1.msra.mxu0 %v54
    %113 = vmatprep.subr.mxu0 0.0
    %114 = vmatpush1.msra.mxu0 %v55
    %115 = vmatprep.subr.mxu0 0.0
    %116 = vmatpush1.msra.mxu0 %v56
    %117 = vmatprep.subr.mxu0 0.0
    %118 = vmatpush1.msra.mxu0 %v57
    %119 = vmatprep.subr.mxu0 0.0
    %120 = vmatpush1.msra.mxu0 %v58
    %121 = vmatprep.subr.mxu0 0.0
    %122 = vmatpush1.msra.mxu0 %v59
    %123 = vmatprep.subr.mxu0 0.0
    %124 = vmatpush1.msra.mxu0 %v60
    %125 = vmatprep.subr.mxu0 0.0
    %126 = vmatpush1.msra.mxu0 %v61
    %127 = vmatprep.mubr.f32.mxu0 %v29
    %128 = vmatmul.mubr.f32.gmra.mrb[0].mxu0 %v28
    %v129 = vpop.f32.mrb[0].mxu0
    %v130 = vadd.f32 %v62, %v129
    %v131 = vpop.f32.mrb[0].mxu0
    %132 = vdwg.mxu0
    %v133 = vld [vmem:[#allocation2 + $0x108] sm:$0x1]
    %v134 = vld [vmem:[#allocation2 + $0x110] sm:$0x1]
    %vm135 = vcmask 261120
    %v136 = vsel %vm135, %v130, 0.0
    %137 = vadd.xlane.f32.xlu0 %v136
    %v138 = vpop.xlane.xlu0 %137
    %v139 = vrcp.pop 32.0
    %v140 = vmul.f32 %v138, %v139
    %v141 = vsub.f32 %v130, %v140
    %v142 = vmul.f32 %v141, %v141
    %v143 = vsel %vm135, %v142, 0.0
    %144 = vadd.xlane.f32.xlu0 %v143
    %v145 = vpop.xlane.xlu0 %144
    %v146 = vmul.f32 %v145, %v139
    %v147 = vadd.f32 %v146, 1e-05
    %v148 = vrsqrt.pop %v147
    %v149 = vmul.f32 %v141, %v148
    %v150 = vlaneseq
    %v151 = vshrl.u32 %v150, 7
    %v152 = vsub.s32 0, %v151
    %v153 = vrot.slane %v133, %v152
    %v154 = vmul.f32 %v149, %v153
    %v155 = vlaneseq
    %v156 = vshrl.u32 %v155, 7
    %v157 = vsub.s32 0, %v156
    %v158 = vrot.slane %v134, %v157
    %v159 = vadd.f32 %v154, %v158
    %v160 = vld [vmem:[#allocation2 + $0x118] sm:$0xff]
    %v161 = vld [vmem:[#allocation2 + $0x120] sm:$0xff]
    %v162 = vld [vmem:[#allocation2 + $0x128] sm:$0xff]
    %v163 = vld [vmem:[#allocation2 + $0x130] sm:$0xff]
    %v165 = vsel %vm135, %v159, 0
    %167 = vmatprep.subr.mxu0 0.0
    %168 = vmatpush1.msra.mxu0 %v160
    %169 = vmatprep.subr.mxu0 0.0
    %170 = vmatpush1.msra.mxu0 %v161
    %171 = vmatprep.subr.mxu0 0.0
    %172 = vmatpush1.msra.mxu0 %v162
    %173 = vmatprep.subr.mxu0 0.0
    %174 = vmatpush1.msra.mxu0 %v163
    %175 = vmatprep.subr.mxu0 0.0
    %176 = vmatpush1.msra.mxu0 0.0
    %177 = vmatprep.subr.mxu0 0.0
    %178 = vmatpush1.msra.mxu0 0.0
    %179 = vmatprep.subr.mxu0 0.0
    %180 = vmatpush1.msra.mxu0 0.0
    %181 = vmatprep.subr.mxu0 0.0
    %182 = vmatpush1.msra.mxu0 0.0
    %183 = vmatprep.subr.mxu0 0.0
    %184 = vmatpush1.msra.mxu0 0.0
    %185 = vmatprep.subr.mxu0 0.0
    %186 = vmatpush1.msra.mxu0 0.0
    %187 = vmatprep.subr.mxu0 0.0
    %188 = vmatpush1.msra.mxu0 0.0
    %189 = vmatprep.subr.mxu0 0.0
    %190 = vmatpush1.msra.mxu0 0.0
    %191 = vmatprep.subr.mxu0 0.0
    %192 = vmatpush1.msra.mxu0 0.0
    %193 = vmatprep.subr.mxu0 0.0
    %194 = vmatpush1.msra.mxu0 0.0
    %195 = vmatprep.subr.mxu0 0.0
    %196 = vmatpush1.msra.mxu0 0.0
    %197 = vmatprep.subr.mxu0 0.0
    %198 = vmatpush1.msra.mxu0 0.0
    %199 = vmatprep.subr.mxu0 0.0
    %200 = vmatpush1.msra.mxu0 0.0
    %201 = vmatprep.subr.mxu0 0.0
    %202 = vmatpush1.msra.mxu0 0.0
    %203 = vmatprep.subr.mxu0 0.0
    %204 = vmatpush1.msra.mxu0 0.0
    %205 = vmatprep.subr.mxu0 0.0
    %206 = vmatpush1.msra.mxu0 0.0
    %207 = vmatprep.subr.mxu0 0.0
    %208 = vmatpush1.msra.mxu0 0.0
    %209 = vmatprep.subr.mxu0 0.0
    %210 = vmatpush1.msra.mxu0 0.0
    %211 = vmatprep.subr.mxu0 0.0
    %212 = vmatpush1.msra.mxu0 0.0
    %213 = vmatprep.subr.mxu0 0.0
    %214 = vmatpush1.msra.mxu0 0.0
    %215 = vmatprep.subr.mxu0 0.0
    %216 = vmatpush1.msra.mxu0 0.0
    %217 = vmatprep.subr.mxu0 0.0
    %218 = vmatpush1.msra.mxu0 0.0
    %219 = vmatprep.subr.mxu0 0.0
    %220 = vmatpush1.msra.mxu0 0.0
    %221 = vmatprep.subr.mxu0 0.0
    %222 = vmatpush1.msra.mxu0 0.0
    %223 = vmatprep.subr.mxu0 0.0
    %224 = vmatpush1.msra.mxu0 0.0
    %225 = vmatprep.subr.mxu0 0.0
    %226 = vmatpush1.msra.mxu0 0.0
    %227 = vmatprep.subr.mxu0 0.0
    %228 = vmatpush1.msra.mxu0 0.0
    %229 = vmatprep.subr.mxu0 0.0
    %230 = vmatpush1.msra.mxu0 0.0
    %231 = vmatprep.mubr.f32.mxu0 0.0
    %232 = vmatmul.mubr.f32.gmra.mrb[0].mxu0 %v165
    %v233 = vpop.f32.mrb[0].mxu0
    %v234 = vadd.f32 0.0, %v233
    %v235 = vpop.f32.mrb[0].mxu0
    %236 = vdwg.mxu0
    %v237 = vld [vmem:[#allocation2 + $0x138] sm:$0xff]
    %v238 = vld [vmem:[#allocation2 + $0x140] sm:$0xff]
    %v239 = vld [vmem:[#allocation2 + $0x148] sm:$0xff]
    %v240 = vld [vmem:[#allocation2 + $0x150] sm:$0xff]
    %241 = vmatprep.subr.mxu0 0.0
    %242 = vmatpush1.msra.mxu0 %v237
    %243 = vmatprep.subr.mxu0 0.0
    %244 = vmatpush1.msra.mxu0 %v238
    %245 = vmatprep.subr.mxu0 0.0
    %246 = vmatpush1.msra.mxu0 %v239
    %247 = vmatprep.subr.mxu0 0.0
    %248 = vmatpush1.msra.mxu0 %v240
    %249 = vmatprep.subr.mxu0 0.0
    %250 = vmatpush1.msra.mxu0 0.0
    %251 = vmatprep.subr.mxu0 0.0
    %252 = vmatpush1.msra.mxu0 0.0
    %253 = vmatprep.subr.mxu0 0.0
    %254 = vmatpush1.msra.mxu0 0.0
    %255 = vmatprep.subr.mxu0 0.0
    %256 = vmatpush1.msra.mxu0 0.0
    %257 = vmatprep.subr.mxu0 0.0
    %258 = vmatpush1.msra.mxu0 0.0
    %259 = vmatprep.subr.mxu0 0.0
    %260 = vmatpush1.msra.mxu0 0.0
    %261 = vmatprep.subr.mxu0 0.0
    %262 = vmatpush1.msra.mxu0 0.0
    %263 = vmatprep.subr.mxu0 0.0
    %264 = vmatpush1.msra.mxu0 0.0
    %265 = vmatprep.subr.mxu0 0.0
    %266 = vmatpush1.msra.mxu0 0.0
    %267 = vmatprep.subr.mxu0 0.0
    %268 = vmatpush1.msra.mxu0 0.0
    %269 = vmatprep.subr.mxu0 0.0
    %270 = vmatpush1.msra.mxu0 0.0
    %271 = vmatprep.subr.mxu0 0.0
    %272 = vmatpush1.msra.mxu0 0.0
    %273 = vmatprep.subr.mxu0 0.0
    %274 = vmatpush1.msra.mxu0 0.0
    %275 = vmatprep.subr.mxu0 0.0
    %276 = vmatpush1.msra.mxu0 0.0
    %277 = vmatprep.subr.mxu0 0.0
    %278 = vmatpush1.msra.mxu0 0.0
    %279 = vmatprep.subr.mxu0 0.0
    %280 = vmatpush1.msra.mxu0 0.0
    %281 = vmatprep.subr.mxu0 0.0
    %282 = vmatpush1.msra.mxu0 0.0
    %283 = vmatprep.subr.mxu0 0.0
    %284 = vmatpush1.msra.mxu0 0.0
    %285 = vmatprep.subr.mxu0 0.0
    %286 = vmatpush1.msra.mxu0 0.0
    %287 = vmatprep.subr.mxu0 0.0
    %288 = vmatpush1.msra.mxu0 0.0
    %289 = vmatprep.subr.mxu0 0.0
    %290 = vmatpush1.msra.mxu0 0.0
    %291 = vmatprep.subr.mxu0 0.0
    %292 = vmatpush1.msra.mxu0 0.0
    %293 = vmatprep.subr.mxu0 0.0
    %294 = vmatpush1.msra.mxu0 0.0
    %295 = vmatprep.subr.mxu0 0.0
    %296 = vmatpush1.msra.mxu0 0.0
    %297 = vmatprep.subr.mxu0 0.0
    %298 = vmatpush1.msra.mxu0 0.0
    %299 = vmatprep.subr.mxu0 0.0
    %300 = vmatpush1.msra.mxu0 0.0
    %301 = vmatprep.subr.mxu0 0.0
    %302 = vmatpush1.msra.mxu0 0.0
    %303 = vmatprep.subr.mxu0 0.0
    %304 = vmatpush1.msra.mxu0 0.0
    %305 = vmatprep.mubr.f32.mxu0 0.0
    %306 = vmatmul.mubr.f32.gmra.mrb[0].mxu0 %v165
    %v307 = vpop.f32.mrb[0].mxu0
    %v308 = vadd.f32 0.0, %v307
    %v309 = vpop.f32.mrb[0].mxu0
    %310 = vdwg.mxu0
    %v311 = vld [vmem:[#allocation2 + $0x158] sm:$0xff]
    %v312 = vld [vmem:[#allocation2 + $0x160] sm:$0xff]
    %v313 = vld [vmem:[#allocation2 + $0x168] sm:$0xff]
    %v314 = vld [vmem:[#allocation2 + $0x170] sm:$0xff]
    %315 = vmatprep.subr.mxu0 0.0
    %316 = vmatpush1.msra.mxu0 %v311
    %317 = vmatprep.subr.mxu0 0.0
    %318 = vmatpush1.msra.mxu0 %v312
    %319 = vmatprep.subr.mxu0 0.0
    %320 = vmatpush1.msra.mxu0 %v313
    %321 = vmatprep.subr.mxu0 0.0
    %322 = vmatpush1.msra.mxu0 %v314
    %323 = vmatprep.subr.mxu0 0.0
    %324 = vmatpush1.msra.mxu0 0.0
    %325 = vmatprep.subr.mxu0 0.0
    %326 = vmatpush1.msra.mxu0 0.0
    %327 = vmatprep.subr.mxu0 0.0
    %328 = vmatpush1.msra.mxu0 0.0
    %329 = vmatprep.subr.mxu0 0.0
    %330 = vmatpush1.msra.mxu0 0.0
    %331 = vmatprep.subr.mxu0 0.0
    %332 = vmatpush1.msra.mxu0 0.0
    %333 = vmatprep.subr.mxu0 0.0
    %334 = vmatpush1.msra.mxu0 0.0
    %335 = vmatprep.subr.mxu0 0.0
    %336 = vmatpush1.msra.mxu0 0.0
    %337 = vmatprep.subr.mxu0 0.0
    %338 = vmatpush1.msra.mxu0 0.0
    %339 = vmatprep.subr.mxu0 0.0
    %340 = vmatpush1.msra.mxu0 0.0
    %341 = vmatprep.subr.mxu0 0.0
    %342 = vmatpush1.msra.mxu0 0.0
    %343 = vmatprep.subr.mxu0 0.0
    %344 = vmatpush1.msra.mxu0 0.0
    %345 = vmatprep.subr.mxu0 0.0
    %346 = vmatpush1.msra.mxu0 0.0
    %347 = vmatprep.subr.mxu0 0.0
    %348 = vmatpush1.msra.mxu0 0.0
    %349 = vmatprep.subr.mxu0 0.0
    %350 = vmatpush1.msra.mxu0 0.0
    %351 = vmatprep.subr.mxu0 0.0
    %352 = vmatpush1.msra.mxu0 0.0
    %353 = vmatprep.subr.mxu0 0.0
    %354 = vmatpush1.msra.mxu0 0.0
    %355 = vmatprep.subr.mxu0 0.0
    %356 = vmatpush1.msra.mxu0 0.0
    %357 = vmatprep.subr.mxu0 0.0
    %358 = vmatpush1.msra.mxu0 0.0
    %359 = vmatprep.subr.mxu0 0.0
    %360 = vmatpush1.msra.mxu0 0.0
    %361 = vmatprep.subr.mxu0 0.0
    %362 = vmatpush1.msra.mxu0 0.0
    %363 = vmatprep.subr.mxu0 0.0
    %364 = vmatpush1.msra.mxu0 0.0
    %365 = vmatprep.subr.mxu0 0.0
    %366 = vmatpush1.msra.mxu0 0.0
    %367 = vmatprep.subr.mxu0 0.0
    %368 = vmatpush1.msra.mxu0 0.0
    %369 = vmatprep.subr.mxu0 0.0
    %370 = vmatpush1.msra.mxu0 0.0
    %371 = vmatprep.subr.mxu0 0.0
    %372 = vmatpush1.msra.mxu0 0.0
    %373 = vmatprep.subr.mxu0 0.0
    %374 = vmatpush1.msra.mxu0 0.0
    %375 = vmatprep.subr.mxu0 0.0
    %376 = vmatpush1.msra.mxu0 0.0
    %377 = vmatprep.subr.mxu0 0.0
    %378 = vmatpush1.msra.mxu0 0.0
    %379 = vmatprep.mubr.f32.mxu0 0.0
    %380 = vmatmul.mubr.f32.gmra.mrb[0].mxu0 %v165
    %v381 = vpop.f32.mrb[0].mxu0
    %v382 = vadd.f32 0.0, %v381
    %v383 = vpop.f32.mrb[0].mxu0
    %384 = vdwg.mxu0
    %vm385 = vcmask 130048
    %v387 = vsel %vm385, %v234, 0
    %v390 = vsel %vm385, %v308, 0
    %392 = vmatprep.subr.mxu0 0.0
    %393 = vmatpush1.xpose.msra.mxu0 %v390
    %394 = vmatprep.subr.mxu0 0.0
    %395 = vmatpush1.xpose.msra.mxu0 0.0
    %396 = vmatprep.subr.mxu0 0.0
    %397 = vmatpush1.xpose.msra.mxu0 0.0
    %398 = vmatprep.subr.mxu0 0.0
    %399 = vmatpush1.xpose.msra.mxu0 0.0
    %400 = vmatprep.subr.mxu0 0.0
    %401 = vmatpush1.xpose.msra.mxu0 0.0
    %402 = vmatprep.subr.mxu0 0.0
    %403 = vmatpush1.xpose.msra.mxu0 0.0
    %404 = vmatprep.subr.mxu0 0.0
    %405 = vmatpush1.xpose.msra.mxu0 0.0
    %406 = vmatprep.subr.mxu0 0.0
    %407 = vmatpush1.xpose.msra.mxu0 0.0
    %408 = vmatprep.subr.mxu0 0.0
    %409 = vmatpush1.xpose.msra.mxu0 0.0
    %410 = vmatprep.subr.mxu0 0.0
    %411 = vmatpush1.xpose.msra.mxu0 0.0
    %412 = vmatprep.subr.mxu0 0.0
    %413 = vmatpush1.xpose.msra.mxu0 0.0
    %414 = vmatprep.subr.mxu0 0.0
    %415 = vmatpush1.xpose.msra.mxu0 0.0
    %416 = vmatprep.subr.mxu0 0.0
    %417 = vmatpush1.xpose.msra.mxu0 0.0
    %418 = vmatprep.subr.mxu0 0.0
    %419 = vmatpush1.xpose.msra.mxu0 0.0
    %420 = vmatprep.subr.mxu0 0.0
    %421 = vmatpush1.xpose.msra.mxu0 0.0
    %422 = vmatprep.subr.mxu0 0.0
    %423 = vmatpush1.xpose.msra.mxu0 0.0
    %424 = vmatprep.subr.mxu0 0.0
    %425 = vmatpush1.xpose.msra.mxu0 0.0
    %426 = vmatprep.subr.mxu0 0.0
    %427 = vmatpush1.xpose.msra.mxu0 0.0
    %428 = vmatprep.subr.mxu0 0.0
    %429 = vmatpush1.xpose.msra.mxu0 0.0
    %430 = vmatprep.subr.mxu0 0.0
    %431 = vmatpush1.xpose.msra.mxu0 0.0
    %432 = vmatprep.subr.mxu0 0.0
    %433 = vmatpush1.xpose.msra.mxu0 0.0
    %434 = vmatprep.subr.mxu0 0.0
    %435 = vmatpush1.xpose.msra.mxu0 0.0
    %436 = vmatprep.subr.mxu0 0.0
    %437 = vmatpush1.xpose.msra.mxu0 0.0
    %438 = vmatprep.subr.mxu0 0.0
    %439 = vmatpush1.xpose.msra.mxu0 0.0
    %440 = vmatprep.subr.mxu0 0.0
    %441 = vmatpush1.xpose.msra.mxu0 0.0
    %442 = vmatprep.subr.mxu0 0.0
    %443 = vmatpush1.xpose.msra.mxu0 0.0
    %444 = vmatprep.subr.mxu0 0.0
    %445 = vmatpush1.xpose.msra.mxu0 0.0
    %446 = vmatprep.subr.mxu0 0.0
    %447 = vmatpush1.xpose.msra.mxu0 0.0
    %448 = vmatprep.subr.mxu0 0.0
    %449 = vmatpush1.xpose.msra.mxu0 0.0
    %450 = vmatprep.subr.mxu0 0.0
    %451 = vmatpush1.xpose.msra.mxu0 0.0
    %452 = vmatprep.subr.mxu0 0.0
    %453 = vmatpush1.xpose.msra.mxu0 0.0
    %454 = vmatprep.subr.mxu0 0.0
    %455 = vmatpush1.xpose.msra.mxu0 0.0
    %456 = vmatprep.mubr.f32.mxu0 0.0
    %457 = vmatmul.mubr.f32.gmra.mrb[0].mxu0 %v387
    %v458 = vpop.f32.mrb[0].mxu0
    %v459 = vadd.f32 %v26, %v458
    %v460 = vpop.f32.mrb[0].mxu0
    %461 = vdwg.mxu0
    %vm462 = vcmask 64512
    %v463 = vsel %vm462, %v459, -inf
    %464 = vmax.xlane.f32.xlu0 %v463
    %v465 = vpop.xlane.xlu0 %464
    %v466 = vsub.f32 %v459, %v465
    %v467 = vmul.f32 %v466, 1.442695
    %v468 = vpow.pop %v467
    %v469 = vsel %vm462, %v468, 0.0
    %470 = vadd.xlane.f32.xlu0 %v469
    %v471 = vpop.xlane.xlu0 %470
    %v472 = vrcp.pop %v471
    %v473 = vmul.f32 %v468, %v472
    %v475 = vsel %vm462, %v473, 0
    %477 = vmatprep.subr.mxu0 0.0
    %478 = vmatpush1.msra.mxu0 %v382
    %479 = vmatprep.subr.mxu0 0.0
    %480 = vmatpush1.msra.mxu0 0.0
    %481 = vmatprep.subr.mxu0 0.0
    %482 = vmatpush1.msra.mxu0 0.0
    %483 = vmatprep.subr.mxu0 0.0
    %484 = vmatpush1.msra.mxu0 0.0
    %485 = vmatprep.subr.mxu0 0.0
    %486 = vmatpush1.msra.mxu0 0.0
    %487 = vmatprep.subr.mxu0 0.0
    %488 = vmatpush1.msra.mxu0 0.0
    %489 = vmatprep.subr.mxu0 0.0
    %490 = vmatpush1.msra.mxu0 0.0
    %491 = vmatprep.subr.mxu0 0.0
    %492 = vmatpush1.msra.mxu0 0.0
    %493 = vmatprep.subr.mxu0 0.0
    %494 = vmatpush1.msra.mxu0 0.0
    %495 = vmatprep.subr.mxu0 0.0
    %496 = vmatpush1.msra.mxu0 0.0
    %497 = vmatprep.subr.mxu0 0.0
    %498 = vmatpush1.msra.mxu0 0.0
    %499 = vmatprep.subr.mxu0 0.0
    %500 = vmatpush1.msra.mxu0 0.0
    %501 = vmatprep.subr.mxu0 0.0
    %502 = vmatpush1.msra.mxu0 0.0
    %503 = vmatprep.subr.mxu0 0.0
    %504 = vmatpush1.msra.mxu0 0.0
    %505 = vmatprep.subr.mxu0 0.0
    %506 = vmatpush1.msra.mxu0 0.0
    %507 = vmatprep.subr.mxu0 0.0
    %508 = vmatpush1.msra.mxu0 0.0
    %509 = vmatprep.subr.mxu0 0.0
    %510 = vmatpush1.msra.mxu0 0.0
    %511 = vmatprep.subr.mxu0 0.0
    %512 = vmatpush1.msra.mxu0 0.0
    %513 = vmatprep.subr.mxu0 0.0
    %514 = vmatpush1.msra.mxu0 0.0
    %515 = vmatprep.subr.mxu0 0.0
    %516 = vmatpush1.msra.mxu0 0.0
    %517 = vmatprep.subr.mxu0 0.0
    %518 = vmatpush1.msra.mxu0 0.0
    %519 = vmatprep.subr.mxu0 0.0
    %520 = vmatpush1.msra.mxu0 0.0
    %521 = vmatprep.subr.mxu0 0.0
    %522 = vmatpush1.msra.mxu0 0.0
    %523 = vmatprep.subr.mxu0 0.0
    %524 = vmatpush1.msra.mxu0 0.0
    %525 = vmatprep.subr.mxu0 0.0
    %526 = vmatpush1.msra.mxu0 0.0
    %527 = vmatprep.subr.mxu0 0.0
    %528 = vmatpush1.msra.mxu0 0.0
    %529 = vmatprep.subr.mxu0 0.0
    %530 = vmatpush1.msra.mxu0 0.0
    %531 = vmatprep.subr.mxu0 0.0
    %532 = vmatpush1.msra.mxu0 0.0
    %533 = vmatprep.subr.mxu0 0.0
    %534 = vmatpush1.msra.mxu0 0.0
    %535 = vmatprep.subr.mxu0 0.0
    %536 = vmatpush1.msra.mxu0 0.0
    %537 = vmatprep.subr.mxu0 0.0
    %538 = vmatpush1.msra.mxu0 0.0
    %539 = vmatprep.subr.mxu0 0.0
    %540 = vmatpush1.msra.mxu0 0.0
    %541 = vmatprep.mubr.f32.mxu0 0.0
    %542 = vmatmul.mubr.f32.gmra.mrb[0].mxu0 %v475
    %v543 = vpop.f32.mrb[0].mxu0
    %v544 = vadd.f32 0.0, %v543
    %v545 = vpop.f32.mrb[0].mxu0
    %546 = vdwg.mxu0
    %v547 = vld [vmem:[#allocation2 + $0x178] sm:$0xff]
    %v548 = vld [vmem:[#allocation2 + $0x180] sm:$0xff]
    %v549 = vld [vmem:[#allocation2 + $0x188] sm:$0xff]
    %v550 = vld [vmem:[#allocation2 + $0x190] sm:$0xff]
    %v551 = vld [vmem:[#allocation2 + $0x198] sm:$0xff]
    %v552 = vld [vmem:[#allocation2 + $0x1a0] sm:$0xff]
    %553 = vmatprep.subr.mxu0 0.0
    %554 = vmatpush1.msra.mxu0 %v549
    %555 = vmatprep.subr.mxu0 0.0
    %556 = vmatpush1.msra.mxu0 %v550
    %557 = vmatprep.subr.mxu0 0.0
    %558 = vmatpush1.msra.mxu0 %v551
    %559 = vmatprep.subr.mxu0 0.0
    %560 = vmatpush1.msra.mxu0 %v552
    %561 = vmatprep.subr.mxu0 0.0
    %562 = vmatpush1.msra.mxu0 0.0
    %563 = vmatprep.subr.mxu0 0.0
    %564 = vmatpush1.msra.mxu0 0.0
    %565 = vmatprep.subr.mxu0 0.0
    %566 = vmatpush1.msra.mxu0 0.0
    %567 = vmatprep.subr.mxu0 0.0
    %568 = vmatpush1.msra.mxu0 0.0
    %569 = vmatprep.subr.mxu0 0.0
    %570 = vmatpush1.msra.mxu0 0.0
    %571 = vmatprep.subr.mxu0 0.0
    %572 = vmatpush1.msra.mxu0 0.0
    %573 = vmatprep.subr.mxu0 0.0
    %574 = vmatpush1.msra.mxu0 0.0
    %575 = vmatprep.subr.mxu0 0.0
    %576 = vmatpush1.msra.mxu0 0.0
    %577 = vmatprep.subr.mxu0 0.0
    %578 = vmatpush1.msra.mxu0 0.0
    %579 = vmatprep.subr.mxu0 0.0
    %580 = vmatpush1.msra.mxu0 0.0
    %581 = vmatprep.subr.mxu0 0.0
    %582 = vmatpush1.msra.mxu0 0.0
    %583 = vmatprep.subr.mxu0 0.0
    %584 = vmatpush1.msra.mxu0 0.0
    %585 = vmatprep.subr.mxu0 0.0
    %586 = vmatpush1.msra.mxu0 0.0
    %587 = vmatprep.subr.mxu0 0.0
    %588 = vmatpush1.msra.mxu0 0.0
    %589 = vmatprep.subr.mxu0 0.0
    %590 = vmatpush1.msra.mxu0 0.0
    %591 = vmatprep.subr.mxu0 0.0
    %592 = vmatpush1.msra.mxu0 0.0
    %593 = vmatprep.subr.mxu0 0.0
    %594 = vmatpush1.msra.mxu0 0.0
    %595 = vmatprep.subr.mxu0 0.0
    %596 = vmatpush1.msra.mxu0 0.0
    %597 = vmatprep.subr.mxu0 0.0
    %598 = vmatpush1.msra.mxu0 0.0
    %599 = vmatprep.subr.mxu0 0.0
    %600 = vmatpush1.msra.mxu0 0.0
    %601 = vmatprep.subr.mxu0 0.0
    %602 = vmatpush1.msra.mxu0 0.0
    %603 = vmatprep.subr.mxu0 0.0
    %604 = vmatpush1.msra.mxu0 0.0
    %605 = vmatprep.subr.mxu0 0.0
    %606 = vmatpush1.msra.mxu0 0.0
    %607 = vmatprep.subr.mxu0 0.0
    %608 = vmatpush1.msra.mxu0 0.0
    %609 = vmatprep.subr.mxu0 0.0
    %610 = vmatpush1.msra.mxu0 0.0
    %611 = vmatprep.subr.mxu0 0.0
    %612 = vmatpush1.msra.mxu0 0.0
    %613 = vmatprep.subr.mxu0 0.0
    %614 = vmatpush1.msra.mxu0 0.0
    %615 = vmatprep.subr.mxu0 0.0
    %616 = vmatpush1.msra.mxu0 0.0
    %617 = vmatprep.mubr.f32.mxu0 0.0
    %618 = vmatmul.mubr.f32.gmra.mrb[0].mxu0 %v165
    %v619 = vpop.f32.mrb[0].mxu0
    %v620 = vadd.f32 0.0, %v619
    %v621 = vpop.f32.mrb[0].mxu0
    %622 = vdwg.mxu0
    %v623 = vld [vmem:[#allocation2 + $0x1a8] sm:$0xff]
    %v624 = vld [vmem:[#allocation2 + $0x1b0] sm:$0xff]
    %v625 = vld [vmem:[#allocation2 + $0x1b8] sm:$0xff]
    %v626 = vld [vmem:[#allocation2 + $0x1c0] sm:$0xff]
    %627 = vmatprep.subr.mxu0 0.0
    %628 = vmatpush1.msra.mxu0 %v623
    %629 = vmatprep.subr.mxu0 0.0
    %630 = vmatpush1.msra.mxu0 %v624
    %631 = vmatprep.subr.mxu0 0.0
    %632 = vmatpush1.msra.mxu0 %v625
    %633 = vmatprep.subr.mxu0 0.0
    %634 = vmatpush1.msra.mxu0 %v626
    %635 = vmatprep.subr.mxu0 0.0
    %636 = vmatpush1.msra.mxu0 0.0
    %637 = vmatprep.subr.mxu0 0.0
    %638 = vmatpush1.msra.mxu0 0.0
    %639 = vmatprep.subr.mxu0 0.0
    %640 = vmatpush1.msra.mxu0 0.0
    %641 = vmatprep.subr.mxu0 0.0
    %642 = vmatpush1.msra.mxu0 0.0
    %643 = vmatprep.subr.mxu0 0.0
    %644 = vmatpush1.msra.mxu0 0.0
    %645 = vmatprep.subr.mxu0 0.0
    %646 = vmatpush1.msra.mxu0 0.0
    %647 = vmatprep.subr.mxu0 0.0
    %648 = vmatpush1.msra.mxu0 0.0
    %649 = vmatprep.subr.mxu0 0.0
    %650 = vmatpush1.msra.mxu0 0.0
    %651 = vmatprep.subr.mxu0 0.0
    %652 = vmatpush1.msra.mxu0 0.0
    %653 = vmatprep.subr.mxu0 0.0
    %654 = vmatpush1.msra.mxu0 0.0
    %655 = vmatprep.subr.mxu0 0.0
    %656 = vmatpush1.msra.mxu0 0.0
    %657 = vmatprep.subr.mxu0 0.0
    %658 = vmatpush1.msra.mxu0 0.0
    %659 = vmatprep.subr.mxu0 0.0
    %660 = vmatpush1.msra.mxu0 0.0
    %661 = vmatprep.subr.mxu0 0.0
    %662 = vmatpush1.msra.mxu0 0.0
    %663 = vmatprep.subr.mxu0 0.0
    %664 = vmatpush1.msra.mxu0 0.0
    %665 = vmatprep.subr.mxu0 0.0
    %666 = vmatpush1.msra.mxu0 0.0
    %667 = vmatprep.subr.mxu0 0.0
    %668 = vmatpush1.msra.mxu0 0.0
    %669 = vmatprep.subr.mxu0 0.0
    %670 = vmatpush1.msra.mxu0 0.0
    %671 = vmatprep.subr.mxu0 0.0
    %672 = vmatpush1.msra.mxu0 0.0
    %673 = vmatprep.subr.mxu0 0.0
    %674 = vmatpush1.msra.mxu0 0.0
    %675 = vmatprep.subr.mxu0 0.0
    %676 = vmatpush1.msra.mxu0 0.0
    %677 = vmatprep.subr.mxu0 0.0
    %678 = vmatpush1.msra.mxu0 0.0
    %679 = vmatprep.subr.mxu0 0.0
    %680 = vmatpush1.msra.mxu0 0.0
    %681 = vmatprep.subr.mxu0 0.0
    %682 = vmatpush1.msra.mxu0 0.0
    %683 = vmatprep.subr.mxu0 0.0
    %684 = vmatpush1.msra.mxu0 0.0
    %685 = vmatprep.subr.mxu0 0.0
    %686 = vmatpush1.msra.mxu0 0.0
    %687 = vmatprep.subr.mxu0 0.0
    %688 = vmatpush1.msra.mxu0 0.0
    %689 = vmatprep.subr.mxu0 0.0
    %690 = vmatpush1.msra.mxu0 0.0
    %691 = vmatprep.mubr.f32.mxu0 0.0
    %692 = vmatmul.mubr.f32.gmra.mrb[0].mxu0 %v165
    %v693 = vpop.f32.mrb[0].mxu0
    %v694 = vadd.f32 0.0, %v693
    %v695 = vpop.f32.mrb[0].mxu0
    %696 = vdwg.mxu0
    %v697 = vld [vmem:[#allocation2 + $0x1c8] sm:$0xff]
    %v698 = vld [vmem:[#allocation2 + $0x1d0] sm:$0xff]
    %v699 = vld [vmem:[#allocation2 + $0x1d8] sm:$0xff]
    %v700 = vld [vmem:[#allocation2 + $0x1e0] sm:$0xff]
    %701 = vmatprep.subr.mxu0 0.0
    %702 = vmatpush1.msra.mxu0 %v697
    %703 = vmatprep.subr.mxu0 0.0
    %704 = vmatpush1.msra.mxu0 %v698
    %705 = vmatprep.subr.mxu0 0.0
    %706 = vmatpush1.msra.mxu0 %v699
    %707 = vmatprep.subr.mxu0 0.0
    %708 = vmatpush1.msra.mxu0 %v700
    %709 = vmatprep.subr.mxu0 0.0
    %710 = vmatpush1.msra.mxu0 0.0
    %711 = vmatprep.subr.mxu0 0.0
    %712 = vmatpush1.msra.mxu0 0.0
    %713 = vmatprep.subr.mxu0 0.0
    %714 = vmatpush1.msra.mxu0 0.0
    %715 = vmatprep.subr.mxu0 0.0
    %716 = vmatpush1.msra.mxu0 0.0
    %717 = vmatprep.subr.mxu0 0.0
    %718 = vmatpush1.msra.mxu0 0.0
    %719 = vmatprep.subr.mxu0 0.0
    %720 = vmatpush1.msra.mxu0 0.0
    %721 = vmatprep.subr.mxu0 0.0
    %722 = vmatpush1.msra.mxu0 0.0
    %723 = vmatprep.subr.mxu0 0.0
    %724 = vmatpush1.msra.mxu0 0.0
    %725 = vmatprep.subr.mxu0 0.0
    %726 = vmatpush1.msra.mxu0 0.0
    %727 = vmatprep.subr.mxu0 0.0
    %728 = vmatpush1.msra.mxu0 0.0
    %729 = vmatprep.subr.mxu0 0.0
    %730 = vmatpush1.msra.mxu0 0.0
    %731 = vmatprep.subr.mxu0 0.0
    %732 = vmatpush1.msra.mxu0 0.0
    %733 = vmatprep.subr.mxu0 0.0
    %734 = vmatpush1.msra.mxu0 0.0
    %735 = vmatprep.subr.mxu0 0.0
    %736 = vmatpush1.msra.mxu0 0.0
    %737 = vmatprep.subr.mxu0 0.0
    %738 = vmatpush1.msra.mxu0 0.0
    %739 = vmatprep.subr.mxu0 0.0
    %740 = vmatpush1.msra.mxu0 0.0
    %741 = vmatprep.subr.mxu0 0.0
    %742 = vmatpush1.msra.mxu0 0.0
    %743 = vmatprep.subr.mxu0 0.0
    %744 = vmatpush1.msra.mxu0 0.0
    %745 = vmatprep.subr.mxu0 0.0
    %746 = vmatpush1.msra.mxu0 0.0
    %747 = vmatprep.subr.mxu0 0.0
    %748 = vmatpush1.msra.mxu0 0.0
    %749 = vmatprep.subr.mxu0 0.0
    %750 = vmatpush1.msra.mxu0 0.0
    %751 = vmatprep.subr.mxu0 0.0
    %752 = vmatpush1.msra.mxu0 0.0
    %753 = vmatprep.subr.mxu0 0.0
    %754 = vmatpush1.msra.mxu0 0.0
    %755 = vmatprep.subr.mxu0 0.0
    %756 = vmatpush1.msra.mxu0 0.0
    %757 = vmatprep.subr.mxu0 0.0
    %758 = vmatpush1.msra.mxu0 0.0
    %759 = vmatprep.subr.mxu0 0.0
    %760 = vmatpush1.msra.mxu0 0.0
    %761 = vmatprep.subr.mxu0 0.0
    %762 = vmatpush1.msra.mxu0 0.0
    %763 = vmatprep.subr.mxu0 0.0
    %764 = vmatpush1.msra.mxu0 0.0
    %765 = vmatprep.mubr.f32.mxu0 0.0
    %766 = vmatmul.mubr.f32.gmra.mrb[0].mxu0 %v165
    %v767 = vpop.f32.mrb[0].mxu0
    %v768 = vadd.f32 0.0, %v767
    %v769 = vpop.f32.mrb[0].mxu0
    %770 = vdwg.mxu0
    %v772 = vsel %vm385, %v620, 0
    %v775 = vsel %vm385, %v694, 0
    %777 = vmatprep.subr.mxu0 0.0
    %778 = vmatpush1.xpose.msra.mxu0 %v775
    %779 = vmatprep.subr.mxu0 0.0
    %780 = vmatpush1.xpose.msra.mxu0 0.0
    %781 = vmatprep.subr.mxu0 0.0
    %782 = vmatpush1.xpose.msra.mxu0 0.0
    %783 = vmatprep.subr.mxu0 0.0
    %784 = vmatpush1.xpose.msra.mxu0 0.0
    %785 = vmatprep.subr.mxu0 0.0
    %786 = vmatpush1.xpose.msra.mxu0 0.0
    %787 = vmatprep.subr.mxu0 0.0
    %788 = vmatpush1.xpose.msra.mxu0 0.0
    %789 = vmatprep.subr.mxu0 0.0
    %790 = vmatpush1.xpose.msra.mxu0 0.0
    %791 = vmatprep.subr.mxu0 0.0
    %792 = vmatpush1.xpose.msra.mxu0 0.0
    %793 = vmatprep.subr.mxu0 0.0
    %794 = vmatpush1.xpose.msra.mxu0 0.0
    %795 = vmatprep.subr.mxu0 0.0
    %796 = vmatpush1.xpose.msra.mxu0 0.0
    %797 = vmatprep.subr.mxu0 0.0
    %798 = vmatpush1.xpose.msra.mxu0 0.0
    %799 = vmatprep.subr.mxu0 0.0
    %800 = vmatpush1.xpose.msra.mxu0 0.0
    %801 = vmatprep.subr.mxu0 0.0
    %802 = vmatpush1.xpose.msra.mxu0 0.0
    %803 = vmatprep.subr.mxu0 0.0
    %804 = vmatpush1.xpose.msra.mxu0 0.0
    %805 = vmatprep.subr.mxu0 0.0
    %806 = vmatpush1.xpose.msra.mxu0 0.0
    %807 = vmatprep.subr.mxu0 0.0
    %808 = vmatpush1.xpose.msra.mxu0 0.0
    %809 = vmatprep.subr.mxu0 0.0
    %810 = vmatpush1.xpose.msra.mxu0 0.0
    %811 = vmatprep.subr.mxu0 0.0
    %812 = vmatpush1.xpose.msra.mxu0 0.0
    %813 = vmatprep.subr.mxu0 0.0
    %814 = vmatpush1.xpose.msra.mxu0 0.0
    %815 = vmatprep.subr.mxu0 0.0
    %816 = vmatpush1.xpose.msra.mxu0 0.0
    %817 = vmatprep.subr.mxu0 0.0
    %818 = vmatpush1.xpose.msra.mxu0 0.0
    %819 = vmatprep.subr.mxu0 0.0
    %820 = vmatpush1.xpose.msra.mxu0 0.0
    %821 = vmatprep.subr.mxu0 0.0
    %822 = vmatpush1.xpose.msra.mxu0 0.0
    %823 = vmatprep.subr.mxu0 0.0
    %824 = vmatpush1.xpose.msra.mxu0 0.0
    %825 = vmatprep.subr.mxu0 0.0
    %826 = vmatpush1.xpose.msra.mxu0 0.0
    %827 = vmatprep.subr.mxu0 0.0
    %828 = vmatpush1.xpose.msra.mxu0 0.0
    %829 = vmatprep.subr.mxu0 0.0
    %830 = vmatpush1.xpose.msra.mxu0 0.0
    %831 = vmatprep.subr.mxu0 0.0
    %832 = vmatpush1.xpose.msra.mxu0 0.0
    %833 = vmatprep.subr.mxu0 0.0
    %834 = vmatpush1.xpose.msra.mxu0 0.0
    %835 = vmatprep.subr.mxu0 0.0
    %836 = vmatpush1.xpose.msra.mxu0 0.0
    %837 = vmatprep.subr.mxu0 0.0
    %838 = vmatpush1.xpose.msra.mxu0 0.0
    %839 = vmatprep.subr.mxu0 0.0
    %840 = vmatpush1.xpose.msra.mxu0 0.0
    %841 = vmatprep.mubr.f32.mxu0 0.0
    %842 = vmatmul.mubr.f32.gmra.mrb[0].mxu0 %v772
    %v843 = vpop.f32.mrb[0].mxu0
    %v844 = vadd.f32 %v26, %v843
    %v845 = vpop.f32.mrb[0].mxu0
    %846 = vdwg.mxu0
    %v847 = vsel %vm462, %v844, -inf
    %848 = vmax.xlane.f32.xlu0 %v847
    %v849 = vpop.xlane.xlu0 %848
    %v850 = vsub.f32 %v844, %v849
    %v851 = vmul.f32 %v850, 1.442695
    %v852 = vpow.pop %v851
    %v853 = vsel %vm462, %v852, 0.0
    %854 = vadd.xlane.f32.xlu0 %v853
    %v855 = vpop.xlane.xlu0 %854
    %v856 = vrcp.pop %v855
    %v857 = vmul.f32 %v852, %v856
    %v859 = vsel %vm462, %v857, 0
    %861 = vmatprep.subr.mxu0 0.0
    %862 = vmatpush1.msra.mxu0 %v768
    %863 = vmatprep.subr.mxu0 0.0
    %864 = vmatpush1.msra.mxu0 0.0
    %865 = vmatprep.subr.mxu0 0.0
    %866 = vmatpush1.msra.mxu0 0.0
    %867 = vmatprep.subr.mxu0 0.0
    %868 = vmatpush1.msra.mxu0 0.0
    %869 = vmatprep.subr.mxu0 0.0
    %870 = vmatpush1.msra.mxu0 0.0
    %871 = vmatprep.subr.mxu0 0.0
    %872 = vmatpush1.msra.mxu0 0.0
    %873 = vmatprep.subr.mxu0 0.0
    %874 = vmatpush1.msra.mxu0 0.0
    %875 = vmatprep.subr.mxu0 0.0
    %876 = vmatpush1.msra.mxu0 0.0
    %877 = vmatprep.subr.mxu0 0.0
    %878 = vmatpush1.msra.mxu0 0.0
    %879 = vmatprep.subr.mxu0 0.0
    %880 = vmatpush1.msra.mxu0 0.0
    %881 = vmatprep.subr.mxu0 0.0
    %882 = vmatpush1.msra.mxu0 0.0
    %883 = vmatprep.subr.mxu0 0.0
    %884 = vmatpush1.msra.mxu0 0.0
    %885 = vmatprep.subr.mxu0 0.0
    %886 = vmatpush1.msra.mxu0 0.0
    %887 = vmatprep.subr.mxu0 0.0
    %888 = vmatpush1.msra.mxu0 0.0
    %889 = vmatprep.subr.mxu0 0.0
    %890 = vmatpush1.msra.mxu0 0.0
    %891 = vmatprep.subr.mxu0 0.0
    %892 = vmatpush1.msra.mxu0 0.0
    %893 = vmatprep.subr.mxu0 0.0
    %894 = vmatpush1.msra.mxu0 0.0
    %895 = vmatprep.subr.mxu0 0.0
    %896 = vmatpush1.msra.mxu0 0.0
    %897 = vmatprep.subr.mxu0 0.0
    %898 = vmatpush1.msra.mxu0 0.0
    %899 = vmatprep.subr.mxu0 0.0
    %900 = vmatpush1.msra.mxu0 0.0
    %901 = vmatprep.subr.mxu0 0.0
    %902 = vmatpush1.msra.mxu0 0.0
    %903 = vmatprep.subr.mxu0 0.0
    %904 = vmatpush1.msra.mxu0 0.0
    %905 = vmatprep.subr.mxu0 0.0
    %906 = vmatpush1.msra.mxu0 0.0
    %907 = vmatprep.subr.mxu0 0.0
    %908 = vmatpush1.msra.mxu0 0.0
    %909 = vmatprep.subr.mxu0 0.0
    %910 = vmatpush1.msra.mxu0 0.0
    %911 = vmatprep.subr.mxu0 0.0
    %912 = vmatpush1.msra.mxu0 0.0
    %913 = vmatprep.subr.mxu0 0.0
    %914 = vmatpush1.msra.mxu0 0.0
    %915 = vmatprep.subr.mxu0 0.0
    %916 = vmatpush1.msra.mxu0 0.0
    %917 = vmatprep.subr.mxu0 0.0
    %918 = vmatpush1.msra.mxu0 0.0
    %919 = vmatprep.subr.mxu0 0.0
    %920 = vmatpush1.msra.mxu0 0.0
    %921 = vmatprep.subr.mxu0 0.0
    %922 = vmatpush1.msra.mxu0 0.0
    %923 = vmatprep.subr.mxu0 0.0
    %924 = vmatpush1.msra.mxu0 0.0
    %925 = vmatprep.mubr.f32.mxu0 0.0
    %926 = vmatmul.mubr.f32.gmra.mrb[0].mxu0 %v859
    %v927 = vpop.f32.mrb[0].mxu0
    %v928 = vadd.f32 0.0, %v927
    %v929 = vpop.f32.mrb[0].mxu0
    %930 = vdwg.mxu0
    %v931 = vld [vmem:[#allocation2 + $0x1e8] sm:$0xff]
    %v932 = vld [vmem:[#allocation2 + $0x1f0] sm:$0xff]
    %v934 = vsel %vm385, %v928, 0
    %936 = vmatprep.subr.mxu0 0.0
    %937 = vmatpush1.msra.mxu0 %v931
    %938 = vmatprep.subr.mxu0 0.0
    %939 = vmatpush1.msra.mxu0 %v932
    %940 = vmatprep.subr.mxu0 0.0
    %941 = vmatpush1.msra.mxu0 0.0
    %942 = vmatprep.subr.mxu0 0.0
    %943 = vmatpush1.msra.mxu0 0.0
    %944 = vmatprep.subr.mxu0 0.0
    %945 = vmatpush1.msra.mxu0 0.0
    %946 = vmatprep.subr.mxu0 0.0
    %947 = vmatpush1.msra.mxu0 0.0
    %948 = vmatprep.subr.mxu0 0.0
    %949 = vmatpush1.msra.mxu0 0.0
    %950 = vmatprep.subr.mxu0 0.0
    %951 = vmatpush1.msra.mxu0 0.0
    %952 = vmatprep.subr.mxu0 0.0
    %953 = vmatpush1.msra.mxu0 0.0
    %954 = vmatprep.subr.mxu0 0.0
    %955 = vmatpush1.msra.mxu0 0.0
    %956 = vmatprep.subr.mxu0 0.0
    %957 = vmatpush1.msra.mxu0 0.0
    %958 = vmatprep.subr.mxu0 0.0
    %959 = vmatpush1.msra.mxu0 0.0
    %960 = vmatprep.subr.mxu0 0.0
    %961 = vmatpush1.msra.mxu0 0.0
    %962 = vmatprep.subr.mxu0 0.0
    %963 = vmatpush1.msra.mxu0 0.0
    %964 = vmatprep.subr.mxu0 0.0
    %965 = vmatpush1.msra.mxu0 0.0
    %966 = vmatprep.subr.mxu0 0.0
    %967 = vmatpush1.msra.mxu0 0.0
    %968 = vmatprep.subr.mxu0 0.0
    %969 = vmatpush1.msra.mxu0 0.0
    %970 = vmatprep.subr.mxu0 0.0
    %971 = vmatpush1.msra.mxu0 0.0
    %972 = vmatprep.subr.mxu0 0.0
    %973 = vmatpush1.msra.mxu0 0.0
    %974 = vmatprep.subr.mxu0 0.0
    %975 = vmatpush1.msra.mxu0 0.0
    %976 = vmatprep.subr.mxu0 0.0
    %977 = vmatpush1.msra.mxu0 0.0
    %978 = vmatprep.subr.mxu0 0.0
    %979 = vmatpush1.msra.mxu0 0.0
    %980 = vmatprep.subr.mxu0 0.0
    %981 = vmatpush1.msra.mxu0 0.0
    %982 = vmatprep.subr.mxu0 0.0
    %983 = vmatpush1.msra.mxu0 0.0
    %984 = vmatprep.subr.mxu0 0.0
    %985 = vmatpush1.msra.mxu0 0.0
    %986 = vmatprep.subr.mxu0 0.0
    %987 = vmatpush1.msra.mxu0 0.0
    %988 = vmatprep.subr.mxu0 0.0
    %989 = vmatpush1.msra.mxu0 0.0
    %990 = vmatprep.subr.mxu0 0.0
    %991 = vmatpush1.msra.mxu0 0.0
    %992 = vmatprep.subr.mxu0 0.0
    %993 = vmatpush1.msra.mxu0 0.0
    %994 = vmatprep.subr.mxu0 0.0
    %995 = vmatpush1.msra.mxu0 0.0
    %996 = vmatprep.subr.mxu0 0.0
    %997 = vmatpush1.msra.mxu0 0.0
    %998 = vmatprep.subr.mxu0 0.0
    %999 = vmatpush1.msra.mxu0 0.0
    %1000 = vmatprep.mubr.f32.mxu0 0.0
    %1001 = vmatmul.mubr.f32.gmra.mrb[0].mxu0 %v934
    %v1002 = vpop.f32.mrb[0].mxu0
    %v1003 = vadd.f32 0.0, %v1002
    %v1004 = vpop.f32.mrb[0].mxu0
    %1005 = vdwg.mxu0
    %v1007 = vsel %vm385, %v544, 0
    %1009 = vmatprep.subr.mxu0 0.0
    %1010 = vmatpush1.msra.mxu0 %v547
    %1011 = vmatprep.subr.mxu0 0.0
    %1012 = vmatpush1.msra.mxu0 %v548
    %1013 = vmatprep.subr.mxu0 0.0
    %1014 = vmatpush1.msra.mxu0 0.0
    %1015 = vmatprep.subr.mxu0 0.0
    %1016 = vmatpush1.msra.mxu0 0.0
    %1017 = vmatprep.subr.mxu0 0.0
    %1018 = vmatpush1.msra.mxu0 0.0
    %1019 = vmatprep.subr.mxu0 0.0
    %1020 = vmatpush1.msra.mxu0 0.0
    %1021 = vmatprep.subr.mxu0 0.0
    %1022 = vmatpush1.msra.mxu0 0.0
    %1023 = vmatprep.subr.mxu0 0.0
    %1024 = vmatpush1.msra.mxu0 0.0
    %1025 = vmatprep.subr.mxu0 0.0
    %1026 = vmatpush1.msra.mxu0 0.0
    %1027 = vmatprep.subr.mxu0 0.0
    %1028 = vmatpush1.msra.mxu0 0.0
    %1029 = vmatprep.subr.mxu0 0.0
    %1030 = vmatpush1.msra.mxu0 0.0
    %1031 = vmatprep.subr.mxu0 0.0
    %1032 = vmatpush1.msra.mxu0 0.0
    %1033 = vmatprep.subr.mxu0 0.0
    %1034 = vmatpush1.msra.mxu0 0.0
    %1035 = vmatprep.subr.mxu0 0.0
    %1036 = vmatpush1.msra.mxu0 0.0
    %1037 = vmatprep.subr.mxu0 0.0
    %1038 = vmatpush1.msra.mxu0 0.0
    %1039 = vmatprep.subr.mxu0 0.0
    %1040 = vmatpush1.msra.mxu0 0.0
    %1041 = vmatprep.subr.mxu0 0.0
    %1042 = vmatpush1.msra.mxu0 0.0
    %1043 = vmatprep.subr.mxu0 0.0
    %1044 = vmatpush1.msra.mxu0 0.0
    %1045 = vmatprep.subr.mxu0 0.0
    %1046 = vmatpush1.msra.mxu0 0.0
    %1047 = vmatprep.subr.mxu0 0.0
    %1048 = vmatpush1.msra.mxu0 0.0
    %1049 = vmatprep.subr.mxu0 0.0
    %1050 = vmatpush1.msra.mxu0 0.0
    %1051 = vmatprep.subr.mxu0 0.0
    %1052 = vmatpush1.msra.mxu0 0.0
    %1053 = vmatprep.subr.mxu0 0.0
    %1054 = vmatpush1.msra.mxu0 0.0
    %1055 = vmatprep.subr.mxu0 0.0
    %1056 = vmatpush1.msra.mxu0 0.0
    %1057 = vmatprep.subr.mxu0 0.0
    %1058 = vmatpush1.msra.mxu0 0.0
    %1059 = vmatprep.subr.mxu0 0.0
    %1060 = vmatpush1.msra.mxu0 0.0
    %1061 = vmatprep.subr.mxu0 0.0
    %1062 = vmatpush1.msra.mxu0 0.0
    %1063 = vmatprep.subr.mxu0 0.0
    %1064 = vmatpush1.msra.mxu0 0.0
    %1065 = vmatprep.subr.mxu0 0.0
    %1066 = vmatpush1.msra.mxu0 0.0
    %1067 = vmatprep.subr.mxu0 0.0
    %1068 = vmatpush1.msra.mxu0 0.0
    %1069 = vmatprep.subr.mxu0 0.0
    %1070 = vmatpush1.msra.mxu0 0.0
    %1071 = vmatprep.subr.mxu0 0.0
    %1072 = vmatpush1.msra.mxu0 0.0
    %1073 = vmatprep.mubr.f32.mxu0 0.0
    %1074 = vmatmul.mubr.f32.gmra.mrb[0].mxu0 %v1007
    %v1075 = vpop.f32.mrb[0].mxu0
    %v1076 = vadd.f32 %v1003, %v1075
    %v1077 = vpop.f32.mrb[0].mxu0
    %1078 = vdwg.mxu0
    %v1079 = vadd.f32 %v130, %v1076
    %v1080 = vld [vmem:[#allocation2 + $0x1f8] sm:$0x1]
    %v1081 = vlaneseq
    %v1082 = vshrl.u32 %v1081, 7
    %v1083 = vsub.s32 0, %v1082
    %v1084 = vrot.slane %v1080, %v1083
    %v1085 = vadd.f32 %v1079, %v1084
    %v1086 = vld [vmem:[#allocation2 + $0x200] sm:$0x1]
    %v1087 = vld [vmem:[#allocation2 + $0x208] sm:$0x1]
    %v1088 = vsel %vm135, %v1085, 0.0
    %1089 = vadd.xlane.f32.xlu0 %v1088
    %v1090 = vpop.xlane.xlu0 %1089
    %v1091 = vmul.f32 %v1090, %v139
    %v1092 = vsub.f32 %v1085, %v1091
    %v1093 = vmul.f32 %v1092, %v1092
    %v1094 = vsel %vm135, %v1093, 0.0
    %1095 = vadd.xlane.f32.xlu0 %v1094
    %v1096 = vpop.xlane.xlu0 %1095
    %v1097 = vmul.f32 %v1096, %v139
    %v1098 = vadd.f32 %v1097, 1e-05
    %v1099 = vrsqrt.pop %v1098
    %v1100 = vmul.f32 %v1092, %v1099
    %v1101 = vlaneseq
    %v1102 = vshrl.u32 %v1101, 7
    %v1103 = vsub.s32 0, %v1102
    %v1104 = vrot.slane %v1086, %v1103
    %v1105 = vmul.f32 %v1100, %v1104
    %v1106 = vlaneseq
    %v1107 = vshrl.u32 %v1106, 7
    %v1108 = vsub.s32 0, %v1107
    %v1109 = vrot.slane %v1087, %v1108
    %v1110 = vadd.f32 %v1105, %v1109
    %v1111 = vld [vmem:[#allocation2 + $0x210] sm:$0xff]
    %v1112 = vld [vmem:[#allocation2 + $0x218] sm:$0xff]
    %v1113 = vld [vmem:[#allocation2 + $0x220] sm:$0xff]
    %v1114 = vld [vmem:[#allocation2 + $0x228] sm:$0xff]
    %v1115 = vld [vmem:[#allocation2 + $0x230] sm:$0x1]
    %v1116 = vlaneseq
    %v1117 = vshrl.u32 %v1116, 7
    %v1118 = vsub.s32 0, %v1117
    %v1119 = vrot.slane %v1115, %v1118
    %v1121 = vsel %vm135, %v1110, 0
    %1123 = vmatprep.subr.mxu0 0.0
    %1124 = vmatpush1.msra.mxu0 %v1111
    %1125 = vmatprep.subr.mxu0 0.0
    %1126 = vmatpush1.msra.mxu0 %v1112
    %1127 = vmatprep.subr.mxu0 0.0
    %1128 = vmatpush1.msra.mxu0 %v1113
    %1129 = vmatprep.subr.mxu0 0.0
    %1130 = vmatpush1.msra.mxu0 %v1114
    %1131 = vmatprep.subr.mxu0 0.0
    %1132 = vmatpush1.msra.mxu0 0.0
    %1133 = vmatprep.subr.mxu0 0.0
    %1134 = vmatpush1.msra.mxu0 0.0
    %1135 = vmatprep.subr.mxu0 0.0
    %1136 = vmatpush1.msra.mxu0 0.0
    %1137 = vmatprep.subr.mxu0 0.0
    %1138 = vmatpush1.msra.mxu0 0.0
    %1139 = vmatprep.subr.mxu0 0.0
    %1140 = vmatpush1.msra.mxu0 0.0
    %1141 = vmatprep.subr.mxu0 0.0
    %1142 = vmatpush1.msra.mxu0 0.0
    %1143 = vmatprep.subr.mxu0 0.0
    %1144 = vmatpush1.msra.mxu0 0.0
    %1145 = vmatprep.subr.mxu0 0.0
    %1146 = vmatpush1.msra.mxu0 0.0
    %1147 = vmatprep.subr.mxu0 0.0
    %1148 = vmatpush1.msra.mxu0 0.0
    %1149 = vmatprep.subr.mxu0 0.0
    %1150 = vmatpush1.msra.mxu0 0.0
    %1151 = vmatprep.subr.mxu0 0.0
    %1152 = vmatpush1.msra.mxu0 0.0
    %1153 = vmatprep.subr.mxu0 0.0
    %1154 = vmatpush1.msra.mxu0 0.0
    %1155 = vmatprep.subr.mxu0 0.0
    %1156 = vmatpush1.msra.mxu0 0.0
    %1157 = vmatprep.subr.mxu0 0.0
    %1158 = vmatpush1.msra.mxu0 0.0
    %1159 = vmatprep.subr.mxu0 0.0
    %1160 = vmatpush1.msra.mxu0 0.0
    %1161 = vmatprep.subr.mxu0 0.0
    %1162 = vmatpush1.msra.mxu0 0.0
    %1163 = vmatprep.subr.mxu0 0.0
    %1164 = vmatpush1.msra.mxu0 0.0
    %1165 = vmatprep.subr.mxu0 0.0
    %1166 = vmatpush1.msra.mxu0 0.0
    %1167 = vmatprep.subr.mxu0 0.0
    %1168 = vmatpush1.msra.mxu0 0.0
    %1169 = vmatprep.subr.mxu0 0.0
    %1170 = vmatpush1.msra.mxu0 0.0
    %1171 = vmatprep.subr.mxu0 0.0
    %1172 = vmatpush1.msra.mxu0 0.0
    %1173 = vmatprep.subr.mxu0 0.0
    %1174 = vmatpush1.msra.mxu0 0.0
    %1175 = vmatprep.subr.mxu0 0.0
    %1176 = vmatpush1.msra.mxu0 0.0
    %1177 = vmatprep.subr.mxu0 0.0
    %1178 = vmatpush1.msra.mxu0 0.0
    %1179 = vmatprep.subr.mxu0 0.0
    %1180 = vmatpush1.msra.mxu0 0.0
    %1181 = vmatprep.subr.mxu0 0.0
    %1182 = vmatpush1.msra.mxu0 0.0
    %1183 = vmatprep.subr.mxu0 0.0
    %1184 = vmatpush1.msra.mxu0 0.0
    %1185 = vmatprep.subr.mxu0 0.0
    %1186 = vmatpush1.msra.mxu0 0.0
    %1187 = vmatprep.mubr.f32.mxu0 0.0
    %1188 = vmatmul.mubr.f32.gmra.mrb[0].mxu0 %v1121
    %v1189 = vpop.f32.mrb[0].mxu0
    %v1190 = vadd.f32 %v1119, %v1189
    %v1191 = vpop.f32.mrb[0].mxu0
    %1192 = vdwg.mxu0
    %v1193 = vmul.f32 %v1190, 0.5
    %v1194 = vmul.f32 %v1190, 0.70710677
    %v1195 = vand.u32 2147483647, %v1194
    %v1196 = vmul.f32 %v1195, 0.3275911
    %v1197 = vadd.f32 %v1196, 1.0
    %v1198 = vrcp.pop %v1197
    %v1199 = vmul.f32 1.0, %v1198
    %v1200 = vmul.f32 %v1199, 1.0614054
    %v1201 = vadd.f32 %v1200, -1.4531521
    %v1202 = vmul.f32 %v1199, %v1201
    %v1203 = vadd.f32 %v1202, 1.4214138
    %v1204 = vmul.f32 %v1199, %v1203
    %v1205 = vadd.f32 %v1204, -0.28449672
    %v1206 = vmul.f32 %v1199, %v1205
    %v1207 = vadd.f32 %v1206, 0.2548296
    %v1208 = vmul.f32 %v1199, %v1207
    %v1209 = vsub.f32 0.0, %v1195
    %v1210 = vmul.f32 %v1209, %v1195
    %v1211 = vmul.f32 %v1210, 1.442695
    %v1212 = vpow.pop %v1211
    %v1213 = vmul.f32 %v1208, %v1212
    %v1214 = vsub.f32 1.0, %v1213
    %vm1215 = vcmp.ge.f32.partialorder %v1194, 0.0
    %v1216 = vsub.f32 0.0, %v1214
    %v1217 = vsel %vm1215, %v1214, %v1216
    %v1218 = vadd.f32 %v1217, 1.0
    %v1219 = vmul.f32 %v1193, %v1218
    %v1220 = vld [vmem:[#allocation2 + $0x238] sm:$0xff]
    %v1221 = vld [vmem:[#allocation2 + $0x240] sm:$0xff]
    %v1222 = vld [vmem:[#allocation2 + $0x248] sm:$0xff]
    %v1223 = vld [vmem:[#allocation2 + $0x250] sm:$0xff]
    %v1224 = vld [vmem:[#allocation2 + $0x258] sm:$0xff]
    %v1225 = vld [vmem:[#allocation2 + $0x260] sm:$0xff]
    %v1226 = vld [vmem:[#allocation2 + $0x268] sm:$0xff]
    %v1227 = vld [vmem:[#allocation2 + $0x270] sm:$0xff]
    %v1228 = vld [vmem:[#allocation2 + $0x278] sm:$0xff]
    %v1229 = vld [vmem:[#allocation2 + $0x280] sm:$0xff]
    %v1230 = vld [vmem:[#allocation2 + $0x288] sm:$0xff]
    %v1231 = vld [vmem:[#allocation2 + $0x290] sm:$0xff]
    %v1232 = vld [vmem:[#allocation2 + $0x298] sm:$0xff]
    %v1233 = vld [vmem:[#allocation2 + $0x2a0] sm:$0xff]
    %v1234 = vld [vmem:[#allocation2 + $0x2a8] sm:$0xff]
    %v1235 = vld [vmem:[#allocation2 + $0x2b0] sm:$0xff]
    %1236 = vmatprep.subr.mxu0 0.0
    %1237 = vmatpush1.msra.mxu0 %v1220
    %1238 = vmatprep.subr.mxu0 0.0
    %1239 = vmatpush1.msra.mxu0 %v1221
    %1240 = vmatprep.subr.mxu0 0.0
    %1241 = vmatpush1.msra.mxu0 %v1222
    %1242 = vmatprep.subr.mxu0 0.0
    %1243 = vmatpush1.msra.mxu0 %v1223
    %1244 = vmatprep.subr.mxu0 0.0
    %1245 = vmatpush1.msra.mxu0 %v1224
    %1246 = vmatprep.subr.mxu0 0.0
    %1247 = vmatpush1.msra.mxu0 %v1225
    %1248 = vmatprep.subr.mxu0 0.0
    %1249 = vmatpush1.msra.mxu0 %v1226
    %1250 = vmatprep.subr.mxu0 0.0
    %1251 = vmatpush1.msra.mxu0 %v1227
    %1252 = vmatprep.subr.mxu0 0.0
    %1253 = vmatpush1.msra.mxu0 %v1228
    %1254 = vmatprep.subr.mxu0 0.0
    %1255 = vmatpush1.msra.mxu0 %v1229
    %1256 = vmatprep.subr.mxu0 0.0
    %1257 = vmatpush1.msra.mxu0 %v1230
    %1258 = vmatprep.subr.mxu0 0.0
    %1259 = vmatpush1.msra.mxu0 %v1231
    %1260 = vmatprep.subr.mxu0 0.0
    %1261 = vmatpush1.msra.mxu0 %v1232
    %1262 = vmatprep.subr.mxu0 0.0
    %1263 = vmatpush1.msra.mxu0 %v1233
    %1264 = vmatprep.subr.mxu0 0.0
    %1265 = vmatpush1.msra.mxu0 %v1234
    %1266 = vmatprep.subr.mxu0 0.0
    %1267 = vmatpush1.msra.mxu0 %v1235
    %1268 = vmatprep.subr.mxu0 0.0
    %1269 = vmatpush1.msra.mxu0 0.0
    %1270 = vmatprep.subr.mxu0 0.0
    %1271 = vmatpush1.msra.mxu0 0.0
    %1272 = vmatprep.subr.mxu0 0.0
    %1273 = vmatpush1.msra.mxu0 0.0
    %1274 = vmatprep.subr.mxu0 0.0
    %1275 = vmatpush1.msra.mxu0 0.0
    %1276 = vmatprep.subr.mxu0 0.0
    %1277 = vmatpush1.msra.mxu0 0.0
    %1278 = vmatprep.subr.mxu0 0.0
    %1279 = vmatpush1.msra.mxu0 0.0
    %1280 = vmatprep.subr.mxu0 0.0
    %1281 = vmatpush1.msra.mxu0 0.0
    %1282 = vmatprep.subr.mxu0 0.0
    %1283 = vmatpush1.msra.mxu0 0.0
    %1284 = vmatprep.subr.mxu0 0.0
    %1285 = vmatpush1.msra.mxu0 0.0
    %1286 = vmatprep.subr.mxu0 0.0
    %1287 = vmatpush1.msra.mxu0 0.0
    %1288 = vmatprep.subr.mxu0 0.0
    %1289 = vmatpush1.msra.mxu0 0.0
    %1290 = vmatprep.subr.mxu0 0.0
    %1291 = vmatpush1.msra.mxu0 0.0
    %1292 = vmatprep.subr.mxu0 0.0
    %1293 = vmatpush1.msra.mxu0 0.0
    %1294 = vmatprep.subr.mxu0 0.0
    %1295 = vmatpush1.msra.mxu0 0.0
    %1296 = vmatprep.subr.mxu0 0.0
    %1297 = vmatpush1.msra.mxu0 0.0
    %1298 = vmatprep.subr.mxu0 0.0
    %1299 = vmatpush1.msra.mxu0 0.0
    %1300 = vmatprep.mubr.f32.mxu0 0.0
    %1301 = vmatmul.mubr.f32.gmra.mrb[0].mxu0 %v1219
    %v1302 = vpop.f32.mrb[0].mxu0
    %v1303 = vadd.f32 0.0, %v1302
    %v1304 = vpop.f32.mrb[0].mxu0
    %1305 = vdwg.mxu0
    %v1306 = vadd.f32 %v1085, %v1303
    %v1307 = vld [vmem:[#allocation2 + $0x2b8] sm:$0x1]
    %v1308 = vlaneseq
    %v1309 = vshrl.u32 %v1308, 7
    %v1310 = vsub.s32 0, %v1309
    %v1311 = vrot.slane %v1307, %v1310
    %v1312 = vadd.f32 %v1306, %v1311
    %v1313 = vld [vmem:[#allocation2 + $0x2c0] sm:$0x1]
    %v1314 = vld [vmem:[#allocation2 + $0x2c8] sm:$0x1]
    %v1315 = vsel %vm135, %v1312, 0.0
    %1316 = vadd.xlane.f32.xlu0 %v1315
    %v1317 = vpop.xlane.xlu0 %1316
    %v1318 = vmul.f32 %v1317, %v139
    %v1319 = vsub.f32 %v1312, %v1318
    %v1320 = vmul.f32 %v1319, %v1319
    %v1321 = vsel %vm135, %v1320, 0.0
    %1322 = vadd.xlane.f32.xlu0 %v1321
    %v1323 = vpop.xlane.xlu0 %1322
    %v1324 = vmul.f32 %v1323, %v139
    %v1325 = vadd.f32 %v1324, 1e-05
    %v1326 = vrsqrt.pop %v1325
    %v1327 = vmul.f32 %v1319, %v1326
    %v1328 = vlaneseq
    %v1329 = vshrl.u32 %v1328, 7
    %v1330 = vsub.s32 0, %v1329
    %v1331 = vrot.slane %v1313, %v1330
    %v1332 = vmul.f32 %v1327, %v1331
    %v1333 = vlaneseq
    %v1334 = vshrl.u32 %v1333, 7
    %v1335 = vsub.s32 0, %v1334
    %v1336 = vrot.slane %v1314, %v1335
    %v1337 = vadd.f32 %v1332, %v1336
    %v1338 = vld [vmem:[#allocation2 + $0x2d0] sm:$0xff]
    %v1339 = vld [vmem:[#allocation2 + $0x2d8] sm:$0xff]
    %v1340 = vld [vmem:[#allocation2 + $0x2e0] sm:$0xff]
    %v1341 = vld [vmem:[#allocation2 + $0x2e8] sm:$0xff]
    %v1343 = vsel %vm135, %v1337, 0
    %1345 = vmatprep.subr.mxu0 0.0
    %1346 = vmatpush1.msra.mxu0 %v1338
    %1347 = vmatprep.subr.mxu0 0.0
    %1348 = vmatpush1.msra.mxu0 %v1339
    %1349 = vmatprep.subr.mxu0 0.0
    %1350 = vmatpush1.msra.mxu0 %v1340
    %1351 = vmatprep.subr.mxu0 0.0
    %1352 = vmatpush1.msra.mxu0 %v1341
    %1353 = vmatprep.subr.mxu0 0.0
    %1354 = vmatpush1.msra.mxu0 0.0
    %1355 = vmatprep.subr.mxu0 0.0
    %1356 = vmatpush1.msra.mxu0 0.0
    %1357 = vmatprep.subr.mxu0 0.0
    %1358 = vmatpush1.msra.mxu0 0.0
    %1359 = vmatprep.subr.mxu0 0.0
    %1360 = vmatpush1.msra.mxu0 0.0
    %1361 = vmatprep.subr.mxu0 0.0
    %1362 = vmatpush1.msra.mxu0 0.0
    %1363 = vmatprep.subr.mxu0 0.0
    %1364 = vmatpush1.msra.mxu0 0.0
    %1365 = vmatprep.subr.mxu0 0.0
    %1366 = vmatpush1.msra.mxu0 0.0
    %1367 = vmatprep.subr.mxu0 0.0
    %1368 = vmatpush1.msra.mxu0 0.0
    %1369 = vmatprep.subr.mxu0 0.0
    %1370 = vmatpush1.msra.mxu0 0.0
    %1371 = vmatprep.subr.mxu0 0.0
    %1372 = vmatpush1.msra.mxu0 0.0
    %1373 = vmatprep.subr.mxu0 0.0
    %1374 = vmatpush1.msra.mxu0 0.0
    %1375 = vmatprep.subr.mxu0 0.0
    %1376 = vmatpush1.msra.mxu0 0.0
    %1377 = vmatprep.subr.mxu0 0.0
    %1378 = vmatpush1.msra.mxu0 0.0
    %1379 = vmatprep.subr.mxu0 0.0
    %1380 = vmatpush1.msra.mxu0 0.0
    %1381 = vmatprep.subr.mxu0 0.0
    %1382 = vmatpush1.msra.mxu0 0.0
    %1383 = vmatprep.subr.mxu0 0.0
    %1384 = vmatpush1.msra.mxu0 0.0
    %1385 = vmatprep.subr.mxu0 0.0
    %1386 = vmatpush1.msra.mxu0 0.0
    %1387 = vmatprep.subr.mxu0 0.0
    %1388 = vmatpush1.msra.mxu0 0.0
    %1389 = vmatprep.subr.mxu0 0.0
    %1390 = vmatpush1.msra.mxu0 0.0
    %1391 = vmatprep.subr.mxu0 0.0
    %1392 = vmatpush1.msra.mxu0 0.0
    %1393 = vmatprep.subr.mxu0 0.0
    %1394 = vmatpush1.msra.mxu0 0.0
    %1395 = vmatprep.subr.mxu0 0.0
    %1396 = vmatpush1.msra.mxu0 0.0
    %1397 = vmatprep.subr.mxu0 0.0
    %1398 = vmatpush1.msra.mxu0 0.0
    %1399 = vmatprep.subr.mxu0 0.0
    %1400 = vmatpush1.msra.mxu0 0.0
    %1401 = vmatprep.subr.mxu0 0.0
    %1402 = vmatpush1.msra.mxu0 0.0
    %1403 = vmatprep.subr.mxu0 0.0
    %1404 = vmatpush1.msra.mxu0 0.0
    %1405 = vmatprep.subr.mxu0 0.0
    %1406 = vmatpush1.msra.mxu0 0.0
    %1407 = vmatprep.subr.mxu0 0.0
    %1408 = vmatpush1.msra.mxu0 0.0
    %1409 = vmatprep.mubr.f32.mxu0 0.0
    %1410 = vmatmul.mubr.f32.gmra.mrb[0].mxu0 %v1343
    %v1411 = vpop.f32.mrb[0].mxu0
    %v1412 = vadd.f32 0.0, %v1411
    %v1413 = vpop.f32.mrb[0].mxu0
    %1414 = vdwg.mxu0
    %v1415 = vld [vmem:[#allocation2 + $0x2f0] sm:$0xff]
    %v1416 = vld [vmem:[#allocation2 + $0x2f8] sm:$0xff]
    %v1417 = vld [vmem:[#allocation2 + $0x300] sm:$0xff]
    %v1418 = vld [vmem:[#allocation2 + $0x308] sm:$0xff]
    %1419 = vmatprep.subr.mxu0 0.0
    %1420 = vmatpush1.msra.mxu0 %v1415
    %1421 = vmatprep.subr.mxu0 0.0
    %1422 = vmatpush1.msra.mxu0 %v1416
    %1423 = vmatprep.subr.mxu0 0.0
    %1424 = vmatpush1.msra.mxu0 %v1417
    %1425 = vmatprep.subr.mxu0 0.0
    %1426 = vmatpush1.msra.mxu0 %v1418
    %1427 = vmatprep.subr.mxu0 0.0
    %1428 = vmatpush1.msra.mxu0 0.0
    %1429 = vmatprep.subr.mxu0 0.0
    %1430 = vmatpush1.msra.mxu0 0.0
    %1431 = vmatprep.subr.mxu0 0.0
    %1432 = vmatpush1.msra.mxu0 0.0
    %1433 = vmatprep.subr.mxu0 0.0
    %1434 = vmatpush1.msra.mxu0 0.0
    %1435 = vmatprep.subr.mxu0 0.0
    %1436 = vmatpush1.msra.mxu0 0.0
    %1437 = vmatprep.subr.mxu0 0.0
    %1438 = vmatpush1.msra.mxu0 0.0
    %1439 = vmatprep.subr.mxu0 0.0
    %1440 = vmatpush1.msra.mxu0 0.0
    %1441 = vmatprep.subr.mxu0 0.0
    %1442 = vmatpush1.msra.mxu0 0.0
    %1443 = vmatprep.subr.mxu0 0.0
    %1444 = vmatpush1.msra.mxu0 0.0
    %1445 = vmatprep.subr.mxu0 0.0
    %1446 = vmatpush1.msra.mxu0 0.0
    %1447 = vmatprep.subr.mxu0 0.0
    %1448 = vmatpush1.msra.mxu0 0.0
    %1449 = vmatprep.subr.mxu0 0.0
    %1450 = vmatpush1.msra.mxu0 0.0
    %1451 = vmatprep.subr.mxu0 0.0
    %1452 = vmatpush1.msra.mxu0 0.0
    %1453 = vmatprep.subr.mxu0 0.0
    %1454 = vmatpush1.msra.mxu0 0.0
    %1455 = vmatprep.subr.mxu0 0.0
    %1456 = vmatpush1.msra.mxu0 0.0
    %1457 = vmatprep.subr.mxu0 0.0
    %1458 = vmatpush1.msra.mxu0 0.0
    %1459 = vmatprep.subr.mxu0 0.0
    %1460 = vmatpush1.msra.mxu0 0.0
    %1461 = vmatprep.subr.mxu0 0.0
    %1462 = vmatpush1.msra.mxu0 0.0
    %1463 = vmatprep.subr.mxu0 0.0
    %1464 = vmatpush1.msra.mxu0 0.0
    %1465 = vmatprep.subr.mxu0 0.0
    %1466 = vmatpush1.msra.mxu0 0.0
    %1467 = vmatprep.subr.mxu0 0.0
    %1468 = vmatpush1.msra.mxu0 0.0
    %1469 = vmatprep.subr.mxu0 0.0
    %1470 = vmatpush1.msra.mxu0 0.0
    %1471 = vmatprep.subr.mxu0 0.0
    %1472 = vmatpush1.msra.mxu0 0.0
    %1473 = vmatprep.subr.mxu0 0.0
    %1474 = vmatpush1.msra.mxu0 0.0
    %1475 = vmatprep.subr.mxu0 0.0
    %1476 = vmatpush1.msra.mxu0 0.0
    %1477 = vmatprep.subr.mxu0 0.0
    %1478 = vmatpush1.msra.mxu0 0.0
    %1479 = vmatprep.subr.mxu0 0.0
    %1480 = vmatpush1.msra.mxu0 0.0
    %1481 = vmatprep.subr.mxu0 0.0
    %1482 = vmatpush1.msra.mxu0 0.0
    %1483 = vmatprep.mubr.f32.mxu0 0.0
    %1484 = vmatmul.mubr.f32.gmra.mrb[0].mxu0 %v1343
    %v1485 = vpop.f32.mrb[0].mxu0
    %v1486 = vadd.f32 0.0, %v1485
    %v1487 = vpop.f32.mrb[0].mxu0
    %1488 = vdwg.mxu0
    %v1489 = vld [vmem:[#allocation2 + $0x310] sm:$0xff]
    %v1490 = vld [vmem:[#allocation2 + $0x318] sm:$0xff]
    %v1491 = vld [vmem:[#allocation2 + $0x320] sm:$0xff]
    %v1492 = vld [vmem:[#allocation2 + $0x328] sm:$0xff]
    %1493 = vmatprep.subr.mxu0 0.0
    %1494 = vmatpush1.msra.mxu0 %v1489
    %1495 = vmatprep.subr.mxu0 0.0
    %1496 = vmatpush1.msra.mxu0 %v1490
    %1497 = vmatprep.subr.mxu0 0.0
    %1498 = vmatpush1.msra.mxu0 %v1491
    %1499 = vmatprep.subr.mxu0 0.0
    %1500 = vmatpush1.msra.mxu0 %v1492
    %1501 = vmatprep.subr.mxu0 0.0
    %1502 = vmatpush1.msra.mxu0 0.0
    %1503 = vmatprep.subr.mxu0 0.0
    %1504 = vmatpush1.msra.mxu0 0.0
    %1505 = vmatprep.subr.mxu0 0.0
    %1506 = vmatpush1.msra.mxu0 0.0
    %1507 = vmatprep.subr.mxu0 0.0
    %1508 = vmatpush1.msra.mxu0 0.0
    %1509 = vmatprep.subr.mxu0 0.0
    %1510 = vmatpush1.msra.mxu0 0.0
    %1511 = vmatprep.subr.mxu0 0.0
    %1512 = vmatpush1.msra.mxu0 0.0
    %1513 = vmatprep.subr.mxu0 0.0
    %1514 = vmatpush1.msra.mxu0 0.0
    %1515 = vmatprep.subr.mxu0 0.0
    %1516 = vmatpush1.msra.mxu0 0.0
    %1517 = vmatprep.subr.mxu0 0.0
    %1518 = vmatpush1.msra.mxu0 0.0
    %1519 = vmatprep.subr.mxu0 0.0
    %1520 = vmatpush1.msra.mxu0 0.0
    %1521 = vmatprep.subr.mxu0 0.0
    %1522 = vmatpush1.msra.mxu0 0.0
    %1523 = vmatprep.subr.mxu0 0.0
    %1524 = vmatpush1.msra.mxu0 0.0
    %1525 = vmatprep.subr.mxu0 0.0
    %1526 = vmatpush1.msra.mxu0 0.0
    %1527 = vmatprep.subr.mxu0 0.0
    %1528 = vmatpush1.msra.mxu0 0.0
    %1529 = vmatprep.subr.mxu0 0.0
    %1530 = vmatpush1.msra.mxu0 0.0
    %1531 = vmatprep.subr.mxu0 0.0
    %1532 = vmatpush1.msra.mxu0 0.0
    %1533 = vmatprep.subr.mxu0 0.0
    %1534 = vmatpush1.msra.mxu0 0.0
    %1535 = vmatprep.subr.mxu0 0.0
    %1536 = vmatpush1.msra.mxu0 0.0
    %1537 = vmatprep.subr.mxu0 0.0
    %1538 = vmatpush1.msra.mxu0 0.0
    %1539 = vmatprep.subr.mxu0 0.0
    %1540 = vmatpush1.msra.mxu0 0.0
    %1541 = vmatprep.subr.mxu0 0.0
    %1542 = vmatpush1.msra.mxu0 0.0
    %1543 = vmatprep.subr.mxu0 0.0
    %1544 = vmatpush1.msra.mxu0 0.0
    %1545 = vmatprep.subr.mxu0 0.0
    %1546 = vmatpush1.msra.mxu0 0.0
    %1547 = vmatprep.subr.mxu0 0.0
    %1548 = vmatpush1.msra.mxu0 0.0
    %1549 = vmatprep.subr.mxu0 0.0
    %1550 = vmatpush1.msra.mxu0 0.0
    %1551 = vmatprep.subr.mxu0 0.0
    %1552 = vmatpush1.msra.mxu0 0.0
    %1553 = vmatprep.subr.mxu0 0.0
    %1554 = vmatpush1.msra.mxu0 0.0
    %1555 = vmatprep.subr.mxu0 0.0
    %1556 = vmatpush1.msra.mxu0 0.0
    %1557 = vmatprep.mubr.f32.mxu0 0.0
    %1558 = vmatmul.mubr.f32.gmra.mrb[0].mxu0 %v1343
    %v1559 = vpop.f32.mrb[0].mxu0
    %v1560 = vadd.f32 0.0, %v1559
    %v1561 = vpop.f32.mrb[0].mxu0
    %1562 = vdwg.mxu0
    %v1564 = vsel %vm385, %v1412, 0
    %v1567 = vsel %vm385, %v1486, 0
    %1569 = vmatprep.subr.mxu0 0.0
    %1570 = vmatpush1.xpose.msra.mxu0 %v1567
    %1571 = vmatprep.subr.mxu0 0.0
    %1572 = vmatpush1.xpose.msra.mxu0 0.0
    %1573 = vmatprep.subr.mxu0 0.0
    %1574 = vmatpush1.xpose.msra.mxu0 0.0
    %1575 = vmatprep.subr.mxu0 0.0
    %1576 = vmatpush1.xpose.msra.mxu0 0.0
    %1577 = vmatprep.subr.mxu0 0.0
    %1578 = vmatpush1.xpose.msra.mxu0 0.0
    %1579 = vmatprep.subr.mxu0 0.0
    %1580 = vmatpush1.xpose.msra.mxu0 0.0
    %1581 = vmatprep.subr.mxu0 0.0
    %1582 = vmatpush1.xpose.msra.mxu0 0.0
    %1583 = vmatprep.subr.mxu0 0.0
    %1584 = vmatpush1.xpose.msra.mxu0 0.0
    %1585 = vmatprep.subr.mxu0 0.0
    %1586 = vmatpush1.xpose.msra.mxu0 0.0
    %1587 = vmatprep.subr.mxu0 0.0
    %1588 = vmatpush1.xpose.msra.mxu0 0.0
    %1589 = vmatprep.subr.mxu0 0.0
    %1590 = vmatpush1.xpose.msra.mxu0 0.0
    %1591 = vmatprep.subr.mxu0 0.0
    %1592 = vmatpush1.xpose.msra.mxu0 0.0
    %1593 = vmatprep.subr.mxu0 0.0
    %1594 = vmatpush1.xpose.msra.mxu0 0.0
    %1595 = vmatprep.subr.mxu0 0.0
    %1596 = vmatpush1.xpose.msra.mxu0 0.0
    %1597 = vmatprep.subr.mxu0 0.0
    %1598 = vmatpush1.xpose.msra.mxu0 0.0
    %1599 = vmatprep.subr.mxu0 0.0
    %1600 = vmatpush1.xpose.msra.mxu0 0.0
    %1601 = vmatprep.subr.mxu0 0.0
    %1602 = vmatpush1.xpose.msra.mxu0 0.0
    %1603 = vmatprep.subr.mxu0 0.0
    %1604 = vmatpush1.xpose.msra.mxu0 0.0
    %1605 = vmatprep.subr.mxu0 0.0
    %1606 = vmatpush1.xpose.msra.mxu0 0.0
    %1607 = vmatprep.subr.mxu0 0.0
    %1608 = vmatpush1.xpose.msra.mxu0 0.0
    %1609 = vmatprep.subr.mxu0 0.0
    %1610 = vmatpush1.xpose.msra.mxu0 0.0
    %1611 = vmatprep.subr.mxu0 0.0
    %1612 = vmatpush1.xpose.msra.mxu0 0.0
    %1613 = vmatprep.subr.mxu0 0.0
    %1614 = vmatpush1.xpose.msra.mxu0 0.0
    %1615 = vmatprep.subr.mxu0 0.0
    %1616 = vmatpush1.xpose.msra.mxu0 0.0
    %1617 = vmatprep.subr.mxu0 0.0
    %1618 = vmatpush1.xpose.msra.mxu0 0.0
    %1619 = vmatprep.subr.mxu0 0.0
    %1620 = vmatpush1.xpose.msra.mxu0 0.0
    %1621 = vmatprep.subr.mxu0 0.0
    %1622 = vmatpush1.xpose.msra.mxu0 0.0
    %1623 = vmatprep.subr.mxu0 0.0
    %1624 = vmatpush1.xpose.msra.mxu0 0.0
    %1625 = vmatprep.subr.mxu0 0.0
    %1626 = vmatpush1.xpose.msra.mxu0 0.0
    %1627 = vmatprep.subr.mxu0 0.0
    %1628 = vmatpush1.xpose.msra.mxu0 0.0
    %1629 = vmatprep.subr.mxu0 0.0
    %1630 = vmatpush1.xpose.msra.mxu0 0.0
    %1631 = vmatprep.subr.mxu0 0.0
    %1632 = vmatpush1.xpose.msra.mxu0 0.0
    %1633 = vmatprep.mubr.f32.mxu0 0.0
    %1634 = vmatmul.mubr.f32.gmra.mrb[0].mxu0 %v1564
    %v1635 = vpop.f32.mrb[0].mxu0
    %v1636 = vadd.f32 %v26, %v1635
    %v1637 = vpop.f32.mrb[0].mxu0
    %1638 = vdwg.mxu0
    %v1639 = vsel %vm462, %v1636, -inf
    %1640 = vmax.xlane.f32.xlu0 %v1639
    %v1641 = vpop.xlane.xlu0 %1640
    %v1642 = vsub.f32 %v1636, %v1641
    %v1643 = vmul.f32 %v1642, 1.442695
    %v1644 = vpow.pop %v1643
    %v1645 = vsel %vm462, %v1644, 0.0
    %1646 = vadd.xlane.f32.xlu0 %v1645
    %v1647 = vpop.xlane.xlu0 %1646
    %v1648 = vrcp.pop %v1647
    %v1649 = vmul.f32 %v1644, %v1648
    %v1651 = vsel %vm462, %v1649, 0
    %1653 = vmatprep.subr.mxu0 0.0
    %1654 = vmatpush1.msra.mxu0 %v1560
    %1655 = vmatprep.subr.mxu0 0.0
    %1656 = vmatpush1.msra.mxu0 0.0
    %1657 = vmatprep.subr.mxu0 0.0
    %1658 = vmatpush1.msra.mxu0 0.0
    %1659 = vmatprep.subr.mxu0 0.0
    %1660 = vmatpush1.msra.mxu0 0.0
    %1661 = vmatprep.subr.mxu0 0.0
    %1662 = vmatpush1.msra.mxu0 0.0
    %1663 = vmatprep.subr.mxu0 0.0
    %1664 = vmatpush1.msra.mxu0 0.0
    %1665 = vmatprep.subr.mxu0 0.0
    %1666 = vmatpush1.msra.mxu0 0.0
    %1667 = vmatprep.subr.mxu0 0.0
    %1668 = vmatpush1.msra.mxu0 0.0
    %1669 = vmatprep.subr.mxu0 0.0
    %1670 = vmatpush1.msra.mxu0 0.0
    %1671 = vmatprep.subr.mxu0 0.0
    %1672 = vmatpush1.msra.mxu0 0.0
    %1673 = vmatprep.subr.mxu0 0.0
    %1674 = vmatpush1.msra.mxu0 0.0
    %1675 = vmatprep.subr.mxu0 0.0
    %1676 = vmatpush1.msra.mxu0 0.0
    %1677 = vmatprep.subr.mxu0 0.0
    %1678 = vmatpush1.msra.mxu0 0.0
    %1679 = vmatprep.subr.mxu0 0.0
    %1680 = vmatpush1.msra.mxu0 0.0
    %1681 = vmatprep.subr.mxu0 0.0
    %1682 = vmatpush1.msra.mxu0 0.0
    %1683 = vmatprep.subr.mxu0 0.0
    %1684 = vmatpush1.msra.mxu0 0.0
    %1685 = vmatprep.subr.mxu0 0.0
    %1686 = vmatpush1.msra.mxu0 0.0
    %1687 = vmatprep.subr.mxu0 0.0
    %1688 = vmatpush1.msra.mxu0 0.0
    %1689 = vmatprep.subr.mxu0 0.0
    %1690 = vmatpush1.msra.mxu0 0.0
    %1691 = vmatprep.subr.mxu0 0.0
    %1692 = vmatpush1.msra.mxu0 0.0
    %1693 = vmatprep.subr.mxu0 0.0
    %1694 = vmatpush1.msra.mxu0 0.0
    %1695 = vmatprep.subr.mxu0 0.0
    %1696 = vmatpush1.msra.mxu0 0.0
    %1697 = vmatprep.subr.mxu0 0.0
    %1698 = vmatpush1.msra.mxu0 0.0
    %1699 = vmatprep.subr.mxu0 0.0
    %1700 = vmatpush1.msra.mxu0 0.0
    %1701 = vmatprep.subr.mxu0 0.0
    %1702 = vmatpush1.msra.mxu0 0.0
    %1703 = vmatprep.subr.mxu0 0.0
    %1704 = vmatpush1.msra.mxu0 0.0
    %1705 = vmatprep.subr.mxu0 0.0
    %1706 = vmatpush1.msra.mxu0 0.0
    %1707 = vmatprep.subr.mxu0 0.0
    %1708 = vmatpush1.msra.mxu0 0.0
    %1709 = vmatprep.subr.mxu0 0.0
    %1710 = vmatpush1.msra.mxu0 0.0
    %1711 = vmatprep.subr.mxu0 0.0
    %1712 = vmatpush1.msra.mxu0 0.0
    %1713 = vmatprep.subr.mxu0 0.0
    %1714 = vmatpush1.msra.mxu0 0.0
    %1715 = vmatprep.subr.mxu0 0.0
    %1716 = vmatpush1.msra.mxu0 0.0
    %1717 = vmatprep.mubr.f32.mxu0 0.0
    %1718 = vmatmul.mubr.f32.gmra.mrb[0].mxu0 %v1651
    %v1719 = vpop.f32.mrb[0].mxu0
    %v1720 = vadd.f32 0.0, %v1719
    %v1721 = vpop.f32.mrb[0].mxu0
    %1722 = vdwg.mxu0
    %v1723 = vld [vmem:[#allocation2 + $0x330] sm:$0xff]
    %v1724 = vld [vmem:[#allocation2 + $0x338] sm:$0xff]
    %v1725 = vld [vmem:[#allocation2 + $0x340] sm:$0xff]
    %v1726 = vld [vmem:[#allocation2 + $0x348] sm:$0xff]
    %v1727 = vld [vmem:[#allocation2 + $0x350] sm:$0xff]
    %v1728 = vld [vmem:[#allocation2 + $0x358] sm:$0xff]
    %1729 = vmatprep.subr.mxu0 0.0
    %1730 = vmatpush1.msra.mxu0 %v1725
    %1731 = vmatprep.subr.mxu0 0.0
    %1732 = vmatpush1.msra.mxu0 %v1726
    %1733 = vmatprep.subr.mxu0 0.0
    %1734 = vmatpush1.msra.mxu0 %v1727
    %1735 = vmatprep.subr.mxu0 0.0
    %1736 = vmatpush1.msra.mxu0 %v1728
    %1737 = vmatprep.subr.mxu0 0.0
    %1738 = vmatpush1.msra.mxu0 0.0
    %1739 = vmatprep.subr.mxu0 0.0
    %1740 = vmatpush1.msra.mxu0 0.0
    %1741 = vmatprep.subr.mxu0 0.0
    %1742 = vmatpush1.msra.mxu0 0.0
    %1743 = vmatprep.subr.mxu0 0.0
    %1744 = vmatpush1.msra.mxu0 0.0
    %1745 = vmatprep.subr.mxu0 0.0
    %1746 = vmatpush1.msra.mxu0 0.0
    %1747 = vmatprep.subr.mxu0 0.0
    %1748 = vmatpush1.msra.mxu0 0.0
    %1749 = vmatprep.subr.mxu0 0.0
    %1750 = vmatpush1.msra.mxu0 0.0
    %1751 = vmatprep.subr.mxu0 0.0
    %1752 = vmatpush1.msra.mxu0 0.0
    %1753 = vmatprep.subr.mxu0 0.0
    %1754 = vmatpush1.msra.mxu0 0.0
    %1755 = vmatprep.subr.mxu0 0.0
    %1756 = vmatpush1.msra.mxu0 0.0
    %1757 = vmatprep.subr.mxu0 0.0
    %1758 = vmatpush1.msra.mxu0 0.0
    %1759 = vmatprep.subr.mxu0 0.0
    %1760 = vmatpush1.msra.mxu0 0.0
    %1761 = vmatprep.subr.mxu0 0.0
    %1762 = vmatpush1.msra.mxu0 0.0
    %1763 = vmatprep.subr.mxu0 0.0
    %1764 = vmatpush1.msra.mxu0 0.0
    %1765 = vmatprep.subr.mxu0 0.0
    %1766 = vmatpush1.msra.mxu0 0.0
    %1767 = vmatprep.subr.mxu0 0.0
    %1768 = vmatpush1.msra.mxu0 0.0
    %1769 = vmatprep.subr.mxu0 0.0
    %1770 = vmatpush1.msra.mxu0 0.0
    %1771 = vmatprep.subr.mxu0 0.0
    %1772 = vmatpush1.msra.mxu0 0.0
    %1773 = vmatprep.subr.mxu0 0.0
    %1774 = vmatpush1.msra.mxu0 0.0
    %1775 = vmatprep.subr.mxu0 0.0
    %1776 = vmatpush1.msra.mxu0 0.0
    %1777 = vmatprep.subr.mxu0 0.0
    %1778 = vmatpush1.msra.mxu0 0.0
    %1779 = vmatprep.subr.mxu0 0.0
    %1780 = vmatpush1.msra.mxu0 0.0
    %1781 = vmatprep.subr.mxu0 0.0
    %1782 = vmatpush1.msra.mxu0 0.0
    %1783 = vmatprep.subr.mxu0 0.0
    %1784 = vmatpush1.msra.mxu0 0.0
    %1785 = vmatprep.subr.mxu0 0.0
    %1786 = vmatpush1.msra.mxu0 0.0
    %1787 = vmatprep.subr.mxu0 0.0
    %1788 = vmatpush1.msra.mxu0 0.0
    %1789 = vmatprep.subr.mxu0 0.0
    %1790 = vmatpush1.msra.mxu0 0.0
    %1791 = vmatprep.subr.mxu0 0.0
    %1792 = vmatpush1.msra.mxu0 0.0
    %1793 = vmatprep.mubr.f32.mxu0 0.0
    %1794 = vmatmul.mubr.f32.gmra.mrb[0].mxu0 %v1343
    %v1795 = vpop.f32.mrb[0].mxu0
    %v1796 = vadd.f32 0.0, %v1795
    %v1797 = vpop.f32.mrb[0].mxu0
    %1798 = vdwg.mxu0
    %v1799 = vld [vmem:[#allocation2 + $0x360] sm:$0xff]
    %v1800 = vld [vmem:[#allocation2 + $0x368] sm:$0xff]
    %v1801 = vld [vmem:[#allocation2 + $0x370] sm:$0xff]
    %v1802 = vld [vmem:[#allocation2 + $0x378] sm:$0xff]
    %1803 = vmatprep.subr.mxu0 0.0
    %1804 = vmatpush1.msra.mxu0 %v1799
    %1805 = vmatprep.subr.mxu0 0.0
    %1806 = vmatpush1.msra.mxu0 %v1800
    %1807 = vmatprep.subr.mxu0 0.0
    %1808 = vmatpush1.msra.mxu0 %v1801
    %1809 = vmatprep.subr.mxu0 0.0
    %1810 = vmatpush1.msra.mxu0 %v1802
    %1811 = vmatprep.subr.mxu0 0.0
    %1812 = vmatpush1.msra.mxu0 0.0
    %1813 = vmatprep.subr.mxu0 0.0
    %1814 = vmatpush1.msra.mxu0 0.0
    %1815 = vmatprep.subr.mxu0 0.0
    %1816 = vmatpush1.msra.mxu0 0.0
    %1817 = vmatprep.subr.mxu0 0.0
    %1818 = vmatpush1.msra.mxu0 0.0
    %1819 = vmatprep.subr.mxu0 0.0
    %1820 = vmatpush1.msra.mxu0 0.0
    %1821 = vmatprep.subr.mxu0 0.0
    %1822 = vmatpush1.msra.mxu0 0.0
    %1823 = vmatprep.subr.mxu0 0.0
    %1824 = vmatpush1.msra.mxu0 0.0
    %1825 = vmatprep.subr.mxu0 0.0
    %1826 = vmatpush1.msra.mxu0 0.0
    %1827 = vmatprep.subr.mxu0 0.0
    %1828 = vmatpush1.msra.mxu0 0.0
    %1829 = vmatprep.subr.mxu0 0.0
    %1830 = vmatpush1.msra.mxu0 0.0
    %1831 = vmatprep.subr.mxu0 0.0
    %1832 = vmatpush1.msra.mxu0 0.0
    %1833 = vmatprep.subr.mxu0 0.0
    %1834 = vmatpush1.msra.mxu0 0.0
    %1835 = vmatprep.subr.mxu0 0.0
    %1836 = vmatpush1.msra.mxu0 0.0
    %1837 = vmatprep.subr.mxu0 0.0
    %1838 = vmatpush1.msra.mxu0 0.0
    %1839 = vmatprep.subr.mxu0 0.0
    %1840 = vmatpush1.msra.mxu0 0.0
    %1841 = vmatprep.subr.mxu0 0.0
    %1842 = vmatpush1.msra.mxu0 0.0
    %1843 = vmatprep.subr.mxu0 0.0
    %1844 = vmatpush1.msra.mxu0 0.0
    %1845 = vmatprep.subr.mxu0 0.0
    %1846 = vmatpush1.msra.mxu0 0.0
    %1847 = vmatprep.subr.mxu0 0.0
    %1848 = vmatpush1.msra.mxu0 0.0
    %1849 = vmatprep.subr.mxu0 0.0
    %1850 = vmatpush1.msra.mxu0 0.0
    %1851 = vmatprep.subr.mxu0 0.0
    %1852 = vmatpush1.msra.mxu0 0.0
    %1853 = vmatprep.subr.mxu0 0.0
    %1854 = vmatpush1.msra.mxu0 0.0
    %1855 = vmatprep.subr.mxu0 0.0
    %1856 = vmatpush1.msra.mxu0 0.0
    %1857 = vmatprep.subr.mxu0 0.0
    %1858 = vmatpush1.msra.mxu0 0.0
    %1859 = vmatprep.subr.mxu0 0.0
    %1860 = vmatpush1.msra.mxu0 0.0
    %1861 = vmatprep.subr.mxu0 0.0
    %1862 = vmatpush1.msra.mxu0 0.0
    %1863 = vmatprep.subr.mxu0 0.0
    %1864 = vmatpush1.msra.mxu0 0.0
    %1865 = vmatprep.subr.mxu0 0.0
    %1866 = vmatpush1.msra.mxu0 0.0
    %1867 = vmatprep.mubr.f32.mxu0 0.0
    %1868 = vmatmul.mubr.f32.gmra.mrb[0].mxu0 %v1343
    %v1869 = vpop.f32.mrb[0].mxu0
    %v1870 = vadd.f32 0.0, %v1869
    %v1871 = vpop.f32.mrb[0].mxu0
    %1872 = vdwg.mxu0
    %v1873 = vld [vmem:[#allocation2 + $0x380] sm:$0xff]
    %v1874 = vld [vmem:[#allocation2 + $0x388] sm:$0xff]
    %v1875 = vld [vmem:[#allocation2 + $0x390] sm:$0xff]
    %v1876 = vld [vmem:[#allocation2 + $0x398] sm:$0xff]
    %1877 = vmatprep.subr.mxu0 0.0
    %1878 = vmatpush1.msra.mxu0 %v1873
    %1879 = vmatprep.subr.mxu0 0.0
    %1880 = vmatpush1.msra.mxu0 %v1874
    %1881 = vmatprep.subr.mxu0 0.0
    %1882 = vmatpush1.msra.mxu0 %v1875
    %1883 = vmatprep.subr.mxu0 0.0
    %1884 = vmatpush1.msra.mxu0 %v1876
    %1885 = vmatprep.subr.mxu0 0.0
    %1886 = vmatpush1.msra.mxu0 0.0
    %1887 = vmatprep.subr.mxu0 0.0
    %1888 = vmatpush1.msra.mxu0 0.0
    %1889 = vmatprep.subr.mxu0 0.0
    %1890 = vmatpush1.msra.mxu0 0.0
    %1891 = vmatprep.subr.mxu0 0.0
    %1892 = vmatpush1.msra.mxu0 0.0
    %1893 = vmatprep.subr.mxu0 0.0
    %1894 = vmatpush1.msra.mxu0 0.0
    %1895 = vmatprep.subr.mxu0 0.0
    %1896 = vmatpush1.msra.mxu0 0.0
    %1897 = vmatprep.subr.mxu0 0.0
    %1898 = vmatpush1.msra.mxu0 0.0
    %1899 = vmatprep.subr.mxu0 0.0
    %1900 = vmatpush1.msra.mxu0 0.0
    %1901 = vmatprep.subr.mxu0 0.0
    %1902 = vmatpush1.msra.mxu0 0.0
    %1903 = vmatprep.subr.mxu0 0.0
    %1904 = vmatpush1.msra.mxu0 0.0
    %1905 = vmatprep.subr.mxu0 0.0
    %1906 = vmatpush1.msra.mxu0 0.0
    %1907 = vmatprep.subr.mxu0 0.0
    %1908 = vmatpush1.msra.mxu0 0.0
    %1909 = vmatprep.subr.mxu0 0.0
    %1910 = vmatpush1.msra.mxu0 0.0
    %1911 = vmatprep.subr.mxu0 0.0
    %1912 = vmatpush1.msra.mxu0 0.0
    %1913 = vmatprep.subr.mxu0 0.0
    %1914 = vmatpush1.msra.mxu0 0.0
    %1915 = vmatprep.subr.mxu0 0.0
    %1916 = vmatpush1.msra.mxu0 0.0
    %1917 = vmatprep.subr.mxu0 0.0
    %1918 = vmatpush1.msra.mxu0 0.0
    %1919 = vmatprep.subr.mxu0 0.0
    %1920 = vmatpush1.msra.mxu0 0.0
    %1921 = vmatprep.subr.mxu0 0.0
    %1922 = vmatpush1.msra.mxu0 0.0
    %1923 = vmatprep.subr.mxu0 0.0
    %1924 = vmatpush1.msra.mxu0 0.0
    %1925 = vmatprep.subr.mxu0 0.0
    %1926 = vmatpush1.msra.mxu0 0.0
    %1927 = vmatprep.subr.mxu0 0.0
    %1928 = vmatpush1.msra.mxu0 0.0
    %1929 = vmatprep.subr.mxu0 0.0
    %1930 = vmatpush1.msra.mxu0 0.0
    %1931 = vmatprep.subr.mxu0 0.0
    %1932 = vmatpush1.msra.mxu0 0.0
    %1933 = vmatprep.subr.mxu0 0.0
    %1934 = vmatpush1.msra.mxu0 0.0
    %1935 = vmatprep.subr.mxu0 0.0
    %1936 = vmatpush1.msra.mxu0 0.0
    %1937 = vmatprep.subr.mxu0 0.0
    %1938 = vmatpush1.msra.mxu0 0.0
    %1939 = vmatprep.subr.mxu0 0.0
    %1940 = vmatpush1.msra.mxu0 0.0
    %1941 = vmatprep.mubr.f32.mxu0 0.0
    %1942 = vmatmul.mubr.f32.gmra.mrb[0].mxu0 %v1343
    %v1943 = vpop.f32.mrb[0].mxu0
    %v1944 = vadd.f32 0.0, %v1943
    %v1945 = vpop.f32.mrb[0].mxu0
    %1946 = vdwg.mxu0
    %v1948 = vsel %vm385, %v1796, 0
    %v1951 = vsel %vm385, %v1870, 0
    %1953 = vmatprep.subr.mxu0 0.0
    %1954 = vmatpush1.xpose.msra.mxu0 %v1951
    %1955 = vmatprep.subr.mxu0 0.0
    %1956 = vmatpush1.xpose.msra.mxu0 0.0
    %1957 = vmatprep.subr.mxu0 0.0
    %1958 = vmatpush1.xpose.msra.mxu0 0.0
    %1959 = vmatprep.subr.mxu0 0.0
    %1960 = vmatpush1.xpose.msra.mxu0 0.0
    %1961 = vmatprep.subr.mxu0 0.0
    %1962 = vmatpush1.xpose.msra.mxu0 0.0
    %1963 = vmatprep.subr.mxu0 0.0
    %1964 = vmatpush1.xpose.msra.mxu0 0.0
    %1965 = vmatprep.subr.mxu0 0.0
    %1966 = vmatpush1.xpose.msra.mxu0 0.0
    %1967 = vmatprep.subr.mxu0 0.0
    %1968 = vmatpush1.xpose.msra.mxu0 0.0
    %1969 = vmatprep.subr.mxu0 0.0
    %1970 = vmatpush1.xpose.msra.mxu0 0.0
    %1971 = vmatprep.subr.mxu0 0.0
    %1972 = vmatpush1.xpose.msra.mxu0 0.0
    %1973 = vmatprep.subr.mxu0 0.0
    %1974 = vmatpush1.xpose.msra.mxu0 0.0
    %1975 = vmatprep.subr.mxu0 0.0
    %1976 = vmatpush1.xpose.msra.mxu0 0.0
    %1977 = vmatprep.subr.mxu0 0.0
    %1978 = vmatpush1.xpose.msra.mxu0 0.0
    %1979 = vmatprep.subr.mxu0 0.0
    %1980 = vmatpush1.xpose.msra.mxu0 0.0
    %1981 = vmatprep.subr.mxu0 0.0
    %1982 = vmatpush1.xpose.msra.mxu0 0.0
    %1983 = vmatprep.subr.mxu0 0.0
    %1984 = vmatpush1.xpose.msra.mxu0 0.0
    %1985 = vmatprep.subr.mxu0 0.0
    %1986 = vmatpush1.xpose.msra.mxu0 0.0
    %1987 = vmatprep.subr.mxu0 0.0
    %1988 = vmatpush1.xpose.msra.mxu0 0.0
    %1989 = vmatprep.subr.mxu0 0.0
    %1990 = vmatpush1.xpose.msra.mxu0 0.0
    %1991 = vmatprep.subr.mxu0 0.0
    %1992 = vmatpush1.xpose.msra.mxu0 0.0
    %1993 = vmatprep.subr.mxu0 0.0
    %1994 = vmatpush1.xpose.msra.mxu0 0.0
    %1995 = vmatprep.subr.mxu0 0.0
    %1996 = vmatpush1.xpose.msra.mxu0 0.0
    %1997 = vmatprep.subr.mxu0 0.0
    %1998 = vmatpush1.xpose.msra.mxu0 0.0
    %1999 = vmatprep.subr.mxu0 0.0
    %2000 = vmatpush1.xpose.msra.mxu0 0.0
    %2001 = vmatprep.subr.mxu0 0.0
    %2002 = vmatpush1.xpose.msra.mxu0 0.0
    %2003 = vmatprep.subr.mxu0 0.0
    %2004 = vmatpush1.xpose.msra.mxu0 0.0
    %2005 = vmatprep.subr.mxu0 0.0
    %2006 = vmatpush1.xpose.msra.mxu0 0.0
    %2007 = vmatprep.subr.mxu0 0.0
    %2008 = vmatpush1.xpose.msra.mxu0 0.0
    %2009 = vmatprep.subr.mxu0 0.0
    %2010 = vmatpush1.xpose.msra.mxu0 0.0
    %2011 = vmatprep.subr.mxu0 0.0
    %2012 = vmatpush1.xpose.msra.mxu0 0.0
    %2013 = vmatprep.subr.mxu0 0.0
    %2014 = vmatpush1.xpose.msra.mxu0 0.0
    %2015 = vmatprep.subr.mxu0 0.0
    %2016 = vmatpush1.xpose.msra.mxu0 0.0
    %2017 = vmatprep.mubr.f32.mxu0 0.0
    %2018 = vmatmul.mubr.f32.gmra.mrb[0].mxu0 %v1948
    %v2019 = vpop.f32.mrb[0].mxu0
    %v2020 = vadd.f32 %v26, %v2019
    %v2021 = vpop.f32.mrb[0].mxu0
    %2022 = vdwg.mxu0
    %v2023 = vsel %vm462, %v2020, -inf
    %2024 = vmax.xlane.f32.xlu0 %v2023
    %v2025 = vpop.xlane.xlu0 %2024
    %v2026 = vsub.f32 %v2020, %v2025
    %v2027 = vmul.f32 %v2026, 1.442695
    %v2028 = vpow.pop %v2027
    %v2029 = vsel %vm462, %v2028, 0.0
    %2030 = vadd.xlane.f32.xlu0 %v2029
    %v2031 = vpop.xlane.xlu0 %2030
    %v2032 = vrcp.pop %v2031
    %v2033 = vmul.f32 %v2028, %v2032
    %v2035 = vsel %vm462, %v2033, 0
    %2037 = vmatprep.subr.mxu0 0.0
    %2038 = vmatpush1.msra.mxu0 %v1944
    %2039 = vmatprep.subr.mxu0 0.0
    %2040 = vmatpush1.msra.mxu0 0.0
    %2041 = vmatprep.subr.mxu0 0.0
    %2042 = vmatpush1.msra.mxu0 0.0
    %2043 = vmatprep.subr.mxu0 0.0
    %2044 = vmatpush1.msra.mxu0 0.0
    %2045 = vmatprep.subr.mxu0 0.0
    %2046 = vmatpush1.msra.mxu0 0.0
    %2047 = vmatprep.subr.mxu0 0.0
    %2048 = vmatpush1.msra.mxu0 0.0
    %2049 = vmatprep.subr.mxu0 0.0
    %2050 = vmatpush1.msra.mxu0 0.0
    %2051 = vmatprep.subr.mxu0 0.0
    %2052 = vmatpush1.msra.mxu0 0.0
    %2053 = vmatprep.subr.mxu0 0.0
    %2054 = vmatpush1.msra.mxu0 0.0
    %2055 = vmatprep.subr.mxu0 0.0
    %2056 = vmatpush1.msra.mxu0 0.0
    %2057 = vmatprep.subr.mxu0 0.0
    %2058 = vmatpush1.msra.mxu0 0.0
    %2059 = vmatprep.subr.mxu0 0.0
    %2060 = vmatpush1.msra.mxu0 0.0
    %2061 = vmatprep.subr.mxu0 0.0
    %2062 = vmatpush1.msra.mxu0 0.0
    %2063 = vmatprep.subr.mxu0 0.0
    %2064 = vmatpush1.msra.mxu0 0.0
    %2065 = vmatprep.subr.mxu0 0.0
    %2066 = vmatpush1.msra.mxu0 0.0
    %2067 = vmatprep.subr.mxu0 0.0
    %2068 = vmatpush1.msra.mxu0 0.0
    %2069 = vmatprep.subr.mxu0 0.0
    %2070 = vmatpush1.msra.mxu0 0.0
    %2071 = vmatprep.subr.mxu0 0.0
    %2072 = vmatpush1.msra.mxu0 0.0
    %2073 = vmatprep.subr.mxu0 0.0
    %2074 = vmatpush1.msra.mxu0 0.0
    %2075 = vmatprep.subr.mxu0 0.0
    %2076 = vmatpush1.msra.mxu0 0.0
    %2077 = vmatprep.subr.mxu0 0.0
    %2078 = vmatpush1.msra.mxu0 0.0
    %2079 = vmatprep.subr.mxu0 0.0
    %2080 = vmatpush1.msra.mxu0 0.0
    %2081 = vmatprep.subr.mxu0 0.0
    %2082 = vmatpush1.msra.mxu0 0.0
    %2083 = vmatprep.subr.mxu0 0.0
    %2084 = vmatpush1.msra.mxu0 0.0
    %2085 = vmatprep.subr.mxu0 0.0
    %2086 = vmatpush1.msra.mxu0 0.0
    %2087 = vmatprep.subr.mxu0 0.0
    %2088 = vmatpush1.msra.mxu0 0.0
    %2089 = vmatprep.subr.mxu0 0.0
    %2090 = vmatpush1.msra.mxu0 0.0
    %2091 = vmatprep.subr.mxu0 0.0
    %2092 = vmatpush1.msra.mxu0 0.0
    %2093 = vmatprep.subr.mxu0 0.0
    %2094 = vmatpush1.msra.mxu0 0.0
    %2095 = vmatprep.subr.mxu0 0.0
    %2096 = vmatpush1.msra.mxu0 0.0
    %2097 = vmatprep.subr.mxu0 0.0
    %2098 = vmatpush1.msra.mxu0 0.0
    %2099 = vmatprep.subr.mxu0 0.0
    %2100 = vmatpush1.msra.mxu0 0.0
    %2101 = vmatprep.mubr.f32.mxu0 0.0
    %2102 = vmatmul.mubr.f32.gmra.mrb[0].mxu0 %v2035
    %v2103 = vpop.f32.mrb[0].mxu0
    %v2104 = vadd.f32 0.0, %v2103
    %v2105 = vpop.f32.mrb[0].mxu0
    %2106 = vdwg.mxu0
    %v2107 = vld [vmem:[#allocation2 + $0x3a0] sm:$0xff]
    %v2108 = vld [vmem:[#allocation2 + $0x3a8] sm:$0xff]
    %v2110 = vsel %vm385, %v2104, 0
    %2112 = vmatprep.subr.mxu0 0.0
    %2113 = vmatpush1.msra.mxu0 %v2107
    %2114 = vmatprep.subr.mxu0 0.0
    %2115 = vmatpush1.msra.mxu0 %v2108
    %2116 = vmatprep.subr.mxu0 0.0
    %2117 = vmatpush1.msra.mxu0 0.0
    %2118 = vmatprep.subr.mxu0 0.0
    %2119 = vmatpush1.msra.mxu0 0.0
    %2120 = vmatprep.subr.mxu0 0.0
    %2121 = vmatpush1.msra.mxu0 0.0
    %2122 = vmatprep.subr.mxu0 0.0
    %2123 = vmatpush1.msra.mxu0 0.0
    %2124 = vmatprep.subr.mxu0 0.0
    %2125 = vmatpush1.msra.mxu0 0.0
    %2126 = vmatprep.subr.mxu0 0.0
    %2127 = vmatpush1.msra.mxu0 0.0
    %2128 = vmatprep.subr.mxu0 0.0
    %2129 = vmatpush1.msra.mxu0 0.0
    %2130 = vmatprep.subr.mxu0 0.0
    %2131 = vmatpush1.msra.mxu0 0.0
    %2132 = vmatprep.subr.mxu0 0.0
    %2133 = vmatpush1.msra.mxu0 0.0
    %2134 = vmatprep.subr.mxu0 0.0
    %2135 = vmatpush1.msra.mxu0 0.0
    %2136 = vmatprep.subr.mxu0 0.0
    %2137 = vmatpush1.msra.mxu0 0.0
    %2138 = vmatprep.subr.mxu0 0.0
    %2139 = vmatpush1.msra.mxu0 0.0
    %2140 = vmatprep.subr.mxu0 0.0
    %2141 = vmatpush1.msra.mxu0 0.0
    %2142 = vmatprep.subr.mxu0 0.0
    %2143 = vmatpush1.msra.mxu0 0.0
    %2144 = vmatprep.subr.mxu0 0.0
    %2145 = vmatpush1.msra.mxu0 0.0
    %2146 = vmatprep.subr.mxu0 0.0
    %2147 = vmatpush1.msra.mxu0 0.0
    %2148 = vmatprep.subr.mxu0 0.0
    %2149 = vmatpush1.msra.mxu0 0.0
    %2150 = vmatprep.subr.mxu0 0.0
    %2151 = vmatpush1.msra.mxu0 0.0
    %2152 = vmatprep.subr.mxu0 0.0
    %2153 = vmatpush1.msra.mxu0 0.0
    %2154 = vmatprep.subr.mxu0 0.0
    %2155 = vmatpush1.msra.mxu0 0.0
    %2156 = vmatprep.subr.mxu0 0.0
    %2157 = vmatpush1.msra.mxu0 0.0
    %2158 = vmatprep.subr.mxu0 0.0
    %2159 = vmatpush1.msra.mxu0 0.0
    %2160 = vmatprep.subr.mxu0 0.0
    %2161 = vmatpush1.msra.mxu0 0.0
    %2162 = vmatprep.subr.mxu0 0.0
    %2163 = vmatpush1.msra.mxu0 0.0
    %2164 = vmatprep.subr.mxu0 0.0
    %2165 = vmatpush1.msra.mxu0 0.0
    %2166 = vmatprep.subr.mxu0 0.0
    %2167 = vmatpush1.msra.mxu0 0.0
    %2168 = vmatprep.subr.mxu0 0.0
    %2169 = vmatpush1.msra.mxu0 0.0
    %2170 = vmatprep.subr.mxu0 0.0
    %2171 = vmatpush1.msra.mxu0 0.0
    %2172 = vmatprep.subr.mxu0 0.0
    %2173 = vmatpush1.msra.mxu0 0.0
    %2174 = vmatprep.subr.mxu0 0.0
    %2175 = vmatpush1.msra.mxu0 0.0
    %2176 = vmatprep.mubr.f32.mxu0 0.0
    %2177 = vmatmul.mubr.f32.gmra.mrb[0].mxu0 %v2110
    %v2178 = vpop.f32.mrb[0].mxu0
    %v2179 = vadd.f32 0.0, %v2178
    %v2180 = vpop.f32.mrb[0].mxu0
    %2181 = vdwg.mxu0
    %v2183 = vsel %vm385, %v1720, 0
    %2185 = vmatprep.subr.mxu0 0.0
    %2186 = vmatpush1.msra.mxu0 %v1723
    %2187 = vmatprep.subr.mxu0 0.0
    %2188 = vmatpush1.msra.mxu0 %v1724
    %2189 = vmatprep.subr.mxu0 0.0
    %2190 = vmatpush1.msra.mxu0 0.0
    %2191 = vmatprep.subr.mxu0 0.0
    %2192 = vmatpush1.msra.mxu0 0.0
    %2193 = vmatprep.subr.mxu0 0.0
    %2194 = vmatpush1.msra.mxu0 0.0
    %2195 = vmatprep.subr.mxu0 0.0
    %2196 = vmatpush1.msra.mxu0 0.0
    %2197 = vmatprep.subr.mxu0 0.0
    %2198 = vmatpush1.msra.mxu0 0.0
    %2199 = vmatprep.subr.mxu0 0.0
    %2200 = vmatpush1.msra.mxu0 0.0
    %2201 = vmatprep.subr.mxu0 0.0
    %2202 = vmatpush1.msra.mxu0 0.0
    %2203 = vmatprep.subr.mxu0 0.0
    %2204 = vmatpush1.msra.mxu0 0.0
    %2205 = vmatprep.subr.mxu0 0.0
    %2206 = vmatpush1.msra.mxu0 0.0
    %2207 = vmatprep.subr.mxu0 0.0
    %2208 = vmatpush1.msra.mxu0 0.0
    %2209 = vmatprep.subr.mxu0 0.0
    %2210 = vmatpush1.msra.mxu0 0.0
    %2211 = vmatprep.subr.mxu0 0.0
    %2212 = vmatpush1.msra.mxu0 0.0
    %2213 = vmatprep.subr.mxu0 0.0
    %2214 = vmatpush1.msra.mxu0 0.0
    %2215 = vmatprep.subr.mxu0 0.0
    %2216 = vmatpush1.msra.mxu0 0.0
    %2217 = vmatprep.subr.mxu0 0.0
    %2218 = vmatpush1.msra.mxu0 0.0
    %2219 = vmatprep.subr.mxu0 0.0
    %2220 = vmatpush1.msra.mxu0 0.0
    %2221 = vmatprep.subr.mxu0 0.0
    %2222 = vmatpush1.msra.mxu0 0.0
    %2223 = vmatprep.subr.mxu0 0.0
    %2224 = vmatpush1.msra.mxu0 0.0
    %2225 = vmatprep.subr.mxu0 0.0
    %2226 = vmatpush1.msra.mxu0 0.0
    %2227 = vmatprep.subr.mxu0 0.0
    %2228 = vmatpush1.msra.mxu0 0.0
    %2229 = vmatprep.subr.mxu0 0.0
    %2230 = vmatpush1.msra.mxu0 0.0
    %2231 = vmatprep.subr.mxu0 0.0
    %2232 = vmatpush1.msra.mxu0 0.0
    %2233 = vmatprep.subr.mxu0 0.0
    %2234 = vmatpush1.msra.mxu0 0.0
    %2235 = vmatprep.subr.mxu0 0.0
    %2236 = vmatpush1.msra.mxu0 0.0
    %2237 = vmatprep.subr.mxu0 0.0
    %2238 = vmatpush1.msra.mxu0 0.0
    %2239 = vmatprep.subr.mxu0 0.0
    %2240 = vmatpush1.msra.mxu0 0.0
    %2241 = vmatprep.subr.mxu0 0.0
    %2242 = vmatpush1.msra.mxu0 0.0
    %2243 = vmatprep.subr.mxu0 0.0
    %2244 = vmatpush1.msra.mxu0 0.0
    %2245 = vmatprep.subr.mxu0 0.0
    %2246 = vmatpush1.msra.mxu0 0.0
    %2247 = vmatprep.subr.mxu0 0.0
    %2248 = vmatpush1.msra.mxu0 0.0
    %2249 = vmatprep.mubr.f32.mxu0 0.0
    %2250 = vmatmul.mubr.f32.gmra.mrb[0].mxu0 %v2183
    %v2251 = vpop.f32.mrb[0].mxu0
    %v2252 = vadd.f32 %v2179, %v2251
    %v2253 = vpop.f32.mrb[0].mxu0
    %2254 = vdwg.mxu0
    %v2255 = vadd.f32 %v1312, %v2252
    %v2256 = vld [vmem:[#allocation2 + $0x3b0] sm:$0x1]
    %v2257 = vlaneseq
    %v2258 = vshrl.u32 %v2257, 7
    %v2259 = vsub.s32 0, %v2258
    %v2260 = vrot.slane %v2256, %v2259
    %v2261 = vadd.f32 %v2255, %v2260
    %v2262 = vld [vmem:[#allocation2 + $0x3b8] sm:$0x1]
    %v2263 = vld [vmem:[#allocation2 + $0x3c0] sm:$0x1]
    %v2264 = vsel %vm135, %v2261, 0.0
    %2265 = vadd.xlane.f32.xlu0 %v2264
    %v2266 = vpop.xlane.xlu0 %2265
    %v2267 = vmul.f32 %v2266, %v139
    %v2268 = vsub.f32 %v2261, %v2267
    %v2269 = vmul.f32 %v2268, %v2268
    %v2270 = vsel %vm135, %v2269, 0.0
    %2271 = vadd.xlane.f32.xlu0 %v2270
    %v2272 = vpop.xlane.xlu0 %2271
    %v2273 = vmul.f32 %v2272, %v139
    %v2274 = vadd.f32 %v2273, 1e-05
    %v2275 = vrsqrt.pop %v2274
    %v2276 = vmul.f32 %v2268, %v2275
    %v2277 = vlaneseq
    %v2278 = vshrl.u32 %v2277, 7
    %v2279 = vsub.s32 0, %v2278
    %v2280 = vrot.slane %v2262, %v2279
    %v2281 = vmul.f32 %v2276, %v2280
    %v2282 = vlaneseq
    %v2283 = vshrl.u32 %v2282, 7
    %v2284 = vsub.s32 0, %v2283
    %v2285 = vrot.slane %v2263, %v2284
    %v2286 = vadd.f32 %v2281, %v2285
    %v2287 = vld [vmem:[#allocation2 + $0x3c8] sm:$0xff]
    %v2288 = vld [vmem:[#allocation2 + $0x3d0] sm:$0xff]
    %v2289 = vld [vmem:[#allocation2 + $0x3d8] sm:$0xff]
    %v2290 = vld [vmem:[#allocation2 + $0x3e0] sm:$0xff]
    %v2291 = vld [vmem:[#allocation2 + $0x3e8] sm:$0x1]
    %v2292 = vlaneseq
    %v2293 = vshrl.u32 %v2292, 7
    %v2294 = vsub.s32 0, %v2293
    %v2295 = vrot.slane %v2291, %v2294
    %v2297 = vsel %vm135, %v2286, 0
    %2299 = vmatprep.subr.mxu0 0.0
    %2300 = vmatpush1.msra.mxu0 %v2287
    %2301 = vmatprep.subr.mxu0 0.0
    %2302 = vmatpush1.msra.mxu0 %v2288
    %2303 = vmatprep.subr.mxu0 0.0
    %2304 = vmatpush1.msra.mxu0 %v2289
    %2305 = vmatprep.subr.mxu0 0.0
    %2306 = vmatpush1.msra.mxu0 %v2290
    %2307 = vmatprep.subr.mxu0 0.0
    %2308 = vmatpush1.msra.mxu0 0.0
    %2309 = vmatprep.subr.mxu0 0.0
    %2310 = vmatpush1.msra.mxu0 0.0
    %2311 = vmatprep.subr.mxu0 0.0
    %2312 = vmatpush1.msra.mxu0 0.0
    %2313 = vmatprep.subr.mxu0 0.0
    %2314 = vmatpush1.msra.mxu0 0.0
    %2315 = vmatprep.subr.mxu0 0.0
    %2316 = vmatpush1.msra.mxu0 0.0
    %2317 = vmatprep.subr.mxu0 0.0
    %2318 = vmatpush1.msra.mxu0 0.0
    %2319 = vmatprep.subr.mxu0 0.0
    %2320 = vmatpush1.msra.mxu0 0.0
    %2321 = vmatprep.subr.mxu0 0.0
    %2322 = vmatpush1.msra.mxu0 0.0
    %2323 = vmatprep.subr.mxu0 0.0
    %2324 = vmatpush1.msra.mxu0 0.0
    %2325 = vmatprep.subr.mxu0 0.0
    %2326 = vmatpush1.msra.mxu0 0.0
    %2327 = vmatprep.subr.mxu0 0.0
    %2328 = vmatpush1.msra.mxu0 0.0
    %2329 = vmatprep.subr.mxu0 0.0
    %2330 = vmatpush1.msra.mxu0 0.0
    %2331 = vmatprep.subr.mxu0 0.0
    %2332 = vmatpush1.msra.mxu0 0.0
    %2333 = vmatprep.subr.mxu0 0.0
    %2334 = vmatpush1.msra.mxu0 0.0
    %2335 = vmatprep.subr.mxu0 0.0
    %2336 = vmatpush1.msra.mxu0 0.0
    %2337 = vmatprep.subr.mxu0 0.0
    %2338 = vmatpush1.msra.mxu0 0.0
    %2339 = vmatprep.subr.mxu0 0.0
    %2340 = vmatpush1.msra.mxu0 0.0
    %2341 = vmatprep.subr.mxu0 0.0
    %2342 = vmatpush1.msra.mxu0 0.0
    %2343 = vmatprep.subr.mxu0 0.0
    %2344 = vmatpush1.msra.mxu0 0.0
    %2345 = vmatprep.subr.mxu0 0.0
    %2346 = vmatpush1.msra.mxu0 0.0
    %2347 = vmatprep.subr.mxu0 0.0
    %2348 = vmatpush1.msra.mxu0 0.0
    %2349 = vmatprep.subr.mxu0 0.0
    %2350 = vmatpush1.msra.mxu0 0.0
    %2351 = vmatprep.subr.mxu0 0.0
    %2352 = vmatpush1.msra.mxu0 0.0
    %2353 = vmatprep.subr.mxu0 0.0
    %2354 = vmatpush1.msra.mxu0 0.0
    %2355 = vmatprep.subr.mxu0 0.0
    %2356 = vmatpush1.msra.mxu0 0.0
    %2357 = vmatprep.subr.mxu0 0.0
    %2358 = vmatpush1.msra.mxu0 0.0
    %2359 = vmatprep.subr.mxu0 0.0
    %2360 = vmatpush1.msra.mxu0 0.0
    %2361 = vmatprep.subr.mxu0 0.0
    %2362 = vmatpush1.msra.mxu0 0.0
    %2363 = vmatprep.mubr.f32.mxu0 0.0
    %2364 = vmatmul.mubr.f32.gmra.mrb[0].mxu0 %v2297
    %v2365 = vpop.f32.mrb[0].mxu0
    %v2366 = vadd.f32 %v2295, %v2365
    %v2367 = vpop.f32.mrb[0].mxu0
    %2368 = vdwg.mxu0
    %v2369 = vmul.f32 %v2366, 0.5
    %v2370 = vmul.f32 %v2366, 0.70710677
    %v2371 = vand.u32 2147483647, %v2370
    %v2372 = vmul.f32 %v2371, 0.3275911
    %v2373 = vadd.f32 %v2372, 1.0
    %v2374 = vrcp.pop %v2373
    %v2375 = vmul.f32 1.0, %v2374
    %v2376 = vmul.f32 %v2375, 1.0614054
    %v2377 = vadd.f32 %v2376, -1.4531521
    %v2378 = vmul.f32 %v2375, %v2377
    %v2379 = vadd.f32 %v2378, 1.4214138
    %v2380 = vmul.f32 %v2375, %v2379
    %v2381 = vadd.f32 %v2380, -0.28449672
    %v2382 = vmul.f32 %v2375, %v2381
    %v2383 = vadd.f32 %v2382, 0.2548296
    %v2384 = vmul.f32 %v2375, %v2383
    %v2385 = vsub.f32 0.0, %v2371
    %v2386 = vmul.f32 %v2385, %v2371
    %v2387 = vmul.f32 %v2386, 1.442695
    %v2388 = vpow.pop %v2387
    %v2389 = vmul.f32 %v2384, %v2388
    %v2390 = vsub.f32 1.0, %v2389
    %vm2391 = vcmp.ge.f32.partialorder %v2370, 0.0
    %v2392 = vsub.f32 0.0, %v2390
    %v2393 = vsel %vm2391, %v2390, %v2392
    %v2394 = vadd.f32 %v2393, 1.0
    %v2395 = vmul.f32 %v2369, %v2394
    %v2396 = vld [vmem:[#allocation2 + $0x3f0] sm:$0xff]
    %v2397 = vld [vmem:[#allocation2 + $0x3f8] sm:$0xff]
    %v2398 = vld [vmem:[#allocation2 + $0x400] sm:$0xff]
    %v2399 = vld [vmem:[#allocation2 + $0x408] sm:$0xff]
    %v2400 = vld [vmem:[#allocation2 + $0x410] sm:$0xff]
    %v2401 = vld [vmem:[#allocation2 + $0x418] sm:$0xff]
    %v2402 = vld [vmem:[#allocation2 + $0x420] sm:$0xff]
    %v2403 = vld [vmem:[#allocation2 + $0x428] sm:$0xff]
    %v2404 = vld [vmem:[#allocation2 + $0x430] sm:$0xff]
    %v2405 = vld [vmem:[#allocation2 + $0x438] sm:$0xff]
    %v2406 = vld [vmem:[#allocation2 + $0x440] sm:$0xff]
    %v2407 = vld [vmem:[#allocation2 + $0x448] sm:$0xff]
    %v2408 = vld [vmem:[#allocation2 + $0x450] sm:$0xff]
    %v2409 = vld [vmem:[#allocation2 + $0x458] sm:$0xff]
    %v2410 = vld [vmem:[#allocation2 + $0x460] sm:$0xff]
    %v2411 = vld [vmem:[#allocation2 + $0x468] sm:$0xff]
    %2412 = vmatprep.subr.mxu0 0.0
    %2413 = vmatpush1.msra.mxu0 %v2396
    %2414 = vmatprep.subr.mxu0 0.0
    %2415 = vmatpush1.msra.mxu0 %v2397
    %2416 = vmatprep.subr.mxu0 0.0
    %2417 = vmatpush1.msra.mxu0 %v2398
    %2418 = vmatprep.subr.mxu0 0.0
    %2419 = vmatpush1.msra.mxu0 %v2399
    %2420 = vmatprep.subr.mxu0 0.0
    %2421 = vmatpush1.msra.mxu0 %v2400
    %2422 = vmatprep.subr.mxu0 0.0
    %2423 = vmatpush1.msra.mxu0 %v2401
    %2424 = vmatprep.subr.mxu0 0.0
    %2425 = vmatpush1.msra.mxu0 %v2402
    %2426 = vmatprep.subr.mxu0 0.0
    %2427 = vmatpush1.msra.mxu0 %v2403
    %2428 = vmatprep.subr.mxu0 0.0
    %2429 = vmatpush1.msra.mxu0 %v2404
    %2430 = vmatprep.subr.mxu0 0.0
    %2431 = vmatpush1.msra.mxu0 %v2405
    %2432 = vmatprep.subr.mxu0 0.0
    %2433 = vmatpush1.msra.mxu0 %v2406
    %2434 = vmatprep.subr.mxu0 0.0
    %2435 = vmatpush1.msra.mxu0 %v2407
    %2436 = vmatprep.subr.mxu0 0.0
    %2437 = vmatpush1.msra.mxu0 %v2408
    %2438 = vmatprep.subr.mxu0 0.0
    %2439 = vmatpush1.msra.mxu0 %v2409
    %2440 = vmatprep.subr.mxu0 0.0
    %2441 = vmatpush1.msra.mxu0 %v2410
    %2442 = vmatprep.subr.mxu0 0.0
    %2443 = vmatpush1.msra.mxu0 %v2411
    %2444 = vmatprep.subr.mxu0 0.0
    %2445 = vmatpush1.msra.mxu0 0.0
    %2446 = vmatprep.subr.mxu0 0.0
    %2447 = vmatpush1.msra.mxu0 0.0
    %2448 = vmatprep.subr.mxu0 0.0
    %2449 = vmatpush1.msra.mxu0 0.0
    %2450 = vmatprep.subr.mxu0 0.0
    %2451 = vmatpush1.msra.mxu0 0.0
    %2452 = vmatprep.subr.mxu0 0.0
    %2453 = vmatpush1.msra.mxu0 0.0
    %2454 = vmatprep.subr.mxu0 0.0
    %2455 = vmatpush1.msra.mxu0 0.0
    %2456 = vmatprep.subr.mxu0 0.0
    %2457 = vmatpush1.msra.mxu0 0.0
    %2458 = vmatprep.subr.mxu0 0.0
    %2459 = vmatpush1.msra.mxu0 0.0
    %2460 = vmatprep.subr.mxu0 0.0
    %2461 = vmatpush1.msra.mxu0 0.0
    %2462 = vmatprep.subr.mxu0 0.0
    %2463 = vmatpush1.msra.mxu0 0.0
    %2464 = vmatprep.subr.mxu0 0.0
    %2465 = vmatpush1.msra.mxu0 0.0
    %2466 = vmatprep.subr.mxu0 0.0
    %2467 = vmatpush1.msra.mxu0 0.0
    %2468 = vmatprep.subr.mxu0 0.0
    %2469 = vmatpush1.msra.mxu0 0.0
    %2470 = vmatprep.subr.mxu0 0.0
    %2471 = vmatpush1.msra.mxu0 0.0
    %2472 = vmatprep.subr.mxu0 0.0
    %2473 = vmatpush1.msra.mxu0 0.0
    %2474 = vmatprep.subr.mxu0 0.0
    %2475 = vmatpush1.msra.mxu0 0.0
    %2476 = vmatprep.mubr.f32.mxu0 0.0
    %2477 = vmatmul.mubr.f32.gmra.mrb[0].mxu0 %v2395
    %v2478 = vpop.f32.mrb[0].mxu0
    %v2479 = vadd.f32 0.0, %v2478
    %v2480 = vpop.f32.mrb[0].mxu0
    %2481 = vdwg.mxu0
    %v2482 = vadd.f32 %v2261, %v2479
    %v2483 = vld [vmem:[#allocation2 + $0x470] sm:$0x1]
    %v2484 = vlaneseq
    %v2485 = vshrl.u32 %v2484, 7
    %v2486 = vsub.s32 0, %v2485
    %v2487 = vrot.slane %v2483, %v2486
    %v2488 = vadd.f32 %v2482, %v2487
    %v2489 = vld [vmem:[#allocation2 + $0x478] sm:$0x1]
    %v2490 = vld [vmem:[#allocation2 + $0x480] sm:$0x1]
    %v2491 = vsel %vm135, %v2488, 0.0
    %2492 = vadd.xlane.f32.xlu0 %v2491
    %v2493 = vpop.xlane.xlu0 %2492
    %v2494 = vmul.f32 %v2493, %v139
    %v2495 = vsub.f32 %v2488, %v2494
    %v2496 = vmul.f32 %v2495, %v2495
    %v2497 = vsel %vm135, %v2496, 0.0
    %2498 = vadd.xlane.f32.xlu0 %v2497
    %v2499 = vpop.xlane.xlu0 %2498
    %v2500 = vmul.f32 %v2499, %v139
    %v2501 = vadd.f32 %v2500, 1e-05
    %v2502 = vrsqrt.pop %v2501
    %v2503 = vmul.f32 %v2495, %v2502
    %v2504 = vlaneseq
    %v2505 = vshrl.u32 %v2504, 7
    %v2506 = vsub.s32 0, %v2505
    %v2507 = vrot.slane %v2489, %v2506
    %v2508 = vmul.f32 %v2503, %v2507
    %v2509 = vlaneseq
    %v2510 = vshrl.u32 %v2509, 7
    %v2511 = vsub.s32 0, %v2510
    %v2512 = vrot.slane %v2490, %v2511
    %v2513 = vadd.f32 %v2508, %v2512
    %v2514 = vld [vmem:[#allocation2 + $0x488] sm:$0xff]
    %v2515 = vld [vmem:[#allocation2 + $0x490] sm:$0xff]
    %v2516 = vld [vmem:[#allocation2 + $0x498] sm:$0xff]
    %v2517 = vld [vmem:[#allocation2 + $0x4a0] sm:$0xff]
    %v2518 = vld [vmem:[#allocation2 + $0x4a8] sm:$0xff]
    %v2520 = vsel %vm135, %v2513, 0
    %2522 = vmatprep.subr.mxu0 0.0
    %2523 = vmatpush1.msra.mxu0 %v2514
    %2524 = vmatprep.subr.mxu0 0.0
    %2525 = vmatpush1.msra.mxu0 %v2515
    %2526 = vmatprep.subr.mxu0 0.0
    %2527 = vmatpush1.msra.mxu0 %v2516
    %2528 = vmatprep.subr.mxu0 0.0
    %2529 = vmatpush1.msra.mxu0 %v2517
    %2530 = vmatprep.subr.mxu0 0.0
    %2531 = vmatpush1.msra.mxu0 0.0
    %2532 = vmatprep.subr.mxu0 0.0
    %2533 = vmatpush1.msra.mxu0 0.0
    %2534 = vmatprep.subr.mxu0 0.0
    %2535 = vmatpush1.msra.mxu0 0.0
    %2536 = vmatprep.subr.mxu0 0.0
    %2537 = vmatpush1.msra.mxu0 0.0
    %2538 = vmatprep.subr.mxu0 0.0
    %2539 = vmatpush1.msra.mxu0 0.0
    %2540 = vmatprep.subr.mxu0 0.0
    %2541 = vmatpush1.msra.mxu0 0.0
    %2542 = vmatprep.subr.mxu0 0.0
    %2543 = vmatpush1.msra.mxu0 0.0
    %2544 = vmatprep.subr.mxu0 0.0
    %2545 = vmatpush1.msra.mxu0 0.0
    %2546 = vmatprep.subr.mxu0 0.0
    %2547 = vmatpush1.msra.mxu0 0.0
    %2548 = vmatprep.subr.mxu0 0.0
    %2549 = vmatpush1.msra.mxu0 0.0
    %2550 = vmatprep.subr.mxu0 0.0
    %2551 = vmatpush1.msra.mxu0 0.0
    %2552 = vmatprep.subr.mxu0 0.0
    %2553 = vmatpush1.msra.mxu0 0.0
    %2554 = vmatprep.subr.mxu0 0.0
    %2555 = vmatpush1.msra.mxu0 0.0
    %2556 = vmatprep.subr.mxu0 0.0
    %2557 = vmatpush1.msra.mxu0 0.0
    %2558 = vmatprep.subr.mxu0 0.0
    %2559 = vmatpush1.msra.mxu0 0.0
    %2560 = vmatprep.subr.mxu0 0.0
    %2561 = vmatpush1.msra.mxu0 0.0
    %2562 = vmatprep.subr.mxu0 0.0
    %2563 = vmatpush1.msra.mxu0 0.0
    %2564 = vmatprep.subr.mxu0 0.0
    %2565 = vmatpush1.msra.mxu0 0.0
    %2566 = vmatprep.subr.mxu0 0.0
    %2567 = vmatpush1.msra.mxu0 0.0
    %2568 = vmatprep.subr.mxu0 0.0
    %2569 = vmatpush1.msra.mxu0 0.0
    %2570 = vmatprep.subr.mxu0 0.0
    %2571 = vmatpush1.msra.mxu0 0.0
    %2572 = vmatprep.subr.mxu0 0.0
    %2573 = vmatpush1.msra.mxu0 0.0
    %2574 = vmatprep.subr.mxu0 0.0
    %2575 = vmatpush1.msra.mxu0 0.0
    %2576 = vmatprep.subr.mxu0 0.0
    %2577 = vmatpush1.msra.mxu0 0.0
    %2578 = vmatprep.subr.mxu0 0.0
    %2579 = vmatpush1.msra.mxu0 0.0
    %2580 = vmatprep.subr.mxu0 0.0
    %2581 = vmatpush1.msra.mxu0 0.0
    %2582 = vmatprep.subr.mxu0 0.0
    %2583 = vmatpush1.msra.mxu0 0.0
    %2584 = vmatprep.subr.mxu0 0.0
    %2585 = vmatpush1.msra.mxu0 0.0
    %2586 = vmatprep.mubr.f32.mxu0 0.0
    %2587 = vmatmul.mubr.f32.gmra.mrb[0].mxu0 %v2520
    %v2588 = vpop.f32.mrb[0].mxu0
    %v2589 = vadd.f32 %v2518, %v2588
    %v2590 = vpop.f32.mrb[0].mxu0
    %2591 = vdwg.mxu0
    %v2592 = vld [vmem:[#allocation2 + $0x4b0] sm:$0x1]
    %v2593 = vld [vmem:[#allocation2 + $0x4b8] sm:$0x1]
    %v2594 = vsel %vm135, %v2589, 0.0
    %2595 = vadd.xlane.f32.xlu0 %v2594
    %v2596 = vpop.xlane.xlu0 %2595
    %v2597 = vmul.f32 %v2596, %v139
    %v2598 = vsub.f32 %v2589, %v2597
    %v2599 = vmul.f32 %v2598, %v2598
    %v2600 = vsel %vm135, %v2599, 0.0
    %2601 = vadd.xlane.f32.xlu0 %v2600
    %v2602 = vpop.xlane.xlu0 %2601
    %v2603 = vmul.f32 %v2602, %v139
    %v2604 = vadd.f32 %v2603, 1e-05
    %v2605 = vrsqrt.pop %v2604
    %v2606 = vmul.f32 %v2598, %v2605
    %v2607 = vlaneseq
    %v2608 = vshrl.u32 %v2607, 7
    %v2609 = vsub.s32 0, %v2608
    %v2610 = vrot.slane %v2592, %v2609
    %v2611 = vmul.f32 %v2606, %v2610
    %v2612 = vlaneseq
    %v2613 = vshrl.u32 %v2612, 7
    %v2614 = vsub.s32 0, %v2613
    %v2615 = vrot.slane %v2593, %v2614
    %v2616 = vadd.f32 %v2611, %v2615
    %v2617 = vld [vmem:[#allocation2 + $0x4c0] sm:$0xff]
    %v2618 = vld [vmem:[#allocation2 + $0x4c8] sm:$0xff]
    %v2619 = vld [vmem:[#allocation2 + $0x4d0] sm:$0xff]
    %v2620 = vld [vmem:[#allocation2 + $0x4d8] sm:$0xff]
    %v2622 = vsel %vm135, %v2616, 0
    %2624 = vmatprep.subr.mxu0 0.0
    %2625 = vmatpush1.msra.mxu0 %v2617
    %2626 = vmatprep.subr.mxu0 0.0
    %2627 = vmatpush1.msra.mxu0 %v2618
    %2628 = vmatprep.subr.mxu0 0.0
    %2629 = vmatpush1.msra.mxu0 %v2619
    %2630 = vmatprep.subr.mxu0 0.0
    %2631 = vmatpush1.msra.mxu0 %v2620
    %2632 = vmatprep.subr.mxu0 0.0
    %2633 = vmatpush1.msra.mxu0 0.0
    %2634 = vmatprep.subr.mxu0 0.0
    %2635 = vmatpush1.msra.mxu0 0.0
    %2636 = vmatprep.subr.mxu0 0.0
    %2637 = vmatpush1.msra.mxu0 0.0
    %2638 = vmatprep.subr.mxu0 0.0
    %2639 = vmatpush1.msra.mxu0 0.0
    %2640 = vmatprep.subr.mxu0 0.0
    %2641 = vmatpush1.msra.mxu0 0.0
    %2642 = vmatprep.subr.mxu0 0.0
    %2643 = vmatpush1.msra.mxu0 0.0
    %2644 = vmatprep.subr.mxu0 0.0
    %2645 = vmatpush1.msra.mxu0 0.0
    %2646 = vmatprep.subr.mxu0 0.0
    %2647 = vmatpush1.msra.mxu0 0.0
    %2648 = vmatprep.subr.mxu0 0.0
    %2649 = vmatpush1.msra.mxu0 0.0
    %2650 = vmatprep.subr.mxu0 0.0
    %2651 = vmatpush1.msra.mxu0 0.0
    %2652 = vmatprep.subr.mxu0 0.0
    %2653 = vmatpush1.msra.mxu0 0.0
    %2654 = vmatprep.subr.mxu0 0.0
    %2655 = vmatpush1.msra.mxu0 0.0
    %2656 = vmatprep.subr.mxu0 0.0
    %2657 = vmatpush1.msra.mxu0 0.0
    %2658 = vmatprep.subr.mxu0 0.0
    %2659 = vmatpush1.msra.mxu0 0.0
    %2660 = vmatprep.subr.mxu0 0.0
    %2661 = vmatpush1.msra.mxu0 0.0
    %2662 = vmatprep.subr.mxu0 0.0
    %2663 = vmatpush1.msra.mxu0 0.0
    %2664 = vmatprep.subr.mxu0 0.0
    %2665 = vmatpush1.msra.mxu0 0.0
    %2666 = vmatprep.subr.mxu0 0.0
    %2667 = vmatpush1.msra.mxu0 0.0
    %2668 = vmatprep.subr.mxu0 0.0
    %2669 = vmatpush1.msra.mxu0 0.0
    %2670 = vmatprep.subr.mxu0 0.0
    %2671 = vmatpush1.msra.mxu0 0.0
    %2672 = vmatprep.subr.mxu0 0.0
    %2673 = vmatpush1.msra.mxu0 0.0
    %2674 = vmatprep.subr.mxu0 0.0
    %2675 = vmatpush1.msra.mxu0 0.0
    %2676 = vmatprep.subr.mxu0 0.0
    %2677 = vmatpush1.msra.mxu0 0.0
    %2678 = vmatprep.subr.mxu0 0.0
    %2679 = vmatpush1.msra.mxu0 0.0
    %2680 = vmatprep.subr.mxu0 0.0
    %2681 = vmatpush1.msra.mxu0 0.0
    %2682 = vmatprep.subr.mxu0 0.0
    %2683 = vmatpush1.msra.mxu0 0.0
    %2684 = vmatprep.subr.mxu0 0.0
    %2685 = vmatpush1.msra.mxu0 0.0
    %2686 = vmatprep.subr.mxu0 0.0
    %2687 = vmatpush1.msra.mxu0 0.0
    %2688 = vmatprep.mubr.f32.mxu0 0.0
    %2689 = vmatmul.mubr.f32.gmra.mrb[0].mxu0 %v2622
    %v2690 = vpop.f32.mrb[0].mxu0
    %v2691 = vadd.f32 0.0, %v2690
    %v2692 = vpop.f32.mrb[0].mxu0
    %2693 = vdwg.mxu0
    %v2694 = vld [vmem:[#allocation2 + $0x4e0] sm:$0xff]
    %v2695 = vld [vmem:[#allocation2 + $0x4e8] sm:$0xff]
    %v2696 = vld [vmem:[#allocation2 + $0x4f0] sm:$0xff]
    %v2697 = vld [vmem:[#allocation2 + $0x4f8] sm:$0xff]
    %2698 = vmatprep.subr.mxu0 0.0
    %2699 = vmatpush1.msra.mxu0 %v2694
    %2700 = vmatprep.subr.mxu0 0.0
    %2701 = vmatpush1.msra.mxu0 %v2695
    %2702 = vmatprep.subr.mxu0 0.0
    %2703 = vmatpush1.msra.mxu0 %v2696
    %2704 = vmatprep.subr.mxu0 0.0
    %2705 = vmatpush1.msra.mxu0 %v2697
    %2706 = vmatprep.subr.mxu0 0.0
    %2707 = vmatpush1.msra.mxu0 0.0
    %2708 = vmatprep.subr.mxu0 0.0
    %2709 = vmatpush1.msra.mxu0 0.0
    %2710 = vmatprep.subr.mxu0 0.0
    %2711 = vmatpush1.msra.mxu0 0.0
    %2712 = vmatprep.subr.mxu0 0.0
    %2713 = vmatpush1.msra.mxu0 0.0
    %2714 = vmatprep.subr.mxu0 0.0
    %2715 = vmatpush1.msra.mxu0 0.0
    %2716 = vmatprep.subr.mxu0 0.0
    %2717 = vmatpush1.msra.mxu0 0.0
    %2718 = vmatprep.subr.mxu0 0.0
    %2719 = vmatpush1.msra.mxu0 0.0
    %2720 = vmatprep.subr.mxu0 0.0
    %2721 = vmatpush1.msra.mxu0 0.0
    %2722 = vmatprep.subr.mxu0 0.0
    %2723 = vmatpush1.msra.mxu0 0.0
    %2724 = vmatprep.subr.mxu0 0.0
    %2725 = vmatpush1.msra.mxu0 0.0
    %2726 = vmatprep.subr.mxu0 0.0
    %2727 = vmatpush1.msra.mxu0 0.0
    %2728 = vmatprep.subr.mxu0 0.0
    %2729 = vmatpush1.msra.mxu0 0.0
    %2730 = vmatprep.subr.mxu0 0.0
    %2731 = vmatpush1.msra.mxu0 0.0
    %2732 = vmatprep.subr.mxu0 0.0
    %2733 = vmatpush1.msra.mxu0 0.0
    %2734 = vmatprep.subr.mxu0 0.0
    %2735 = vmatpush1.msra.mxu0 0.0
    %2736 = vmatprep.subr.mxu0 0.0
    %2737 = vmatpush1.msra.mxu0 0.0
    %2738 = vmatprep.subr.mxu0 0.0
    %2739 = vmatpush1.msra.mxu0 0.0
    %2740 = vmatprep.subr.mxu0 0.0
    %2741 = vmatpush1.msra.mxu0 0.0
    %2742 = vmatprep.subr.mxu0 0.0
    %2743 = vmatpush1.msra.mxu0 0.0
    %2744 = vmatprep.subr.mxu0 0.0
    %2745 = vmatpush1.msra.mxu0 0.0
    %2746 = vmatprep.subr.mxu0 0.0
    %2747 = vmatpush1.msra.mxu0 0.0
    %2748 = vmatprep.subr.mxu0 0.0
    %2749 = vmatpush1.msra.mxu0 0.0
    %2750 = vmatprep.subr.mxu0 0.0
    %2751 = vmatpush1.msra.mxu0 0.0
    %2752 = vmatprep.subr.mxu0 0.0
    %2753 = vmatpush1.msra.mxu0 0.0
    %2754 = vmatprep.subr.mxu0 0.0
    %2755 = vmatpush1.msra.mxu0 0.0
    %2756 = vmatprep.subr.mxu0 0.0
    %2757 = vmatpush1.msra.mxu0 0.0
    %2758 = vmatprep.subr.mxu0 0.0
    %2759 = vmatpush1.msra.mxu0 0.0
    %2760 = vmatprep.subr.mxu0 0.0
    %2761 = vmatpush1.msra.mxu0 0.0
    %2762 = vmatprep.mubr.f32.mxu0 0.0
    %2763 = vmatmul.mubr.f32.gmra.mrb[0].mxu0 %v2622
    %v2764 = vpop.f32.mrb[0].mxu0
    %v2765 = vadd.f32 0.0, %v2764
    %v2766 = vpop.f32.mrb[0].mxu0
    %2767 = vdwg.mxu0
    %v2768 = vld [vmem:[#allocation2 + $0x500] sm:$0xff]
    %v2769 = vld [vmem:[#allocation2 + $0x508] sm:$0xff]
    %v2770 = vld [vmem:[#allocation2 + $0x510] sm:$0xff]
    %v2771 = vld [vmem:[#allocation2 + $0x518] sm:$0xff]
    %2772 = vmatprep.subr.mxu0 0.0
    %2773 = vmatpush1.msra.mxu0 %v2768
    %2774 = vmatprep.subr.mxu0 0.0
    %2775 = vmatpush1.msra.mxu0 %v2769
    %2776 = vmatprep.subr.mxu0 0.0
    %2777 = vmatpush1.msra.mxu0 %v2770
    %2778 = vmatprep.subr.mxu0 0.0
    %2779 = vmatpush1.msra.mxu0 %v2771
    %2780 = vmatprep.subr.mxu0 0.0
    %2781 = vmatpush1.msra.mxu0 0.0
    %2782 = vmatprep.subr.mxu0 0.0
    %2783 = vmatpush1.msra.mxu0 0.0
    %2784 = vmatprep.subr.mxu0 0.0
    %2785 = vmatpush1.msra.mxu0 0.0
    %2786 = vmatprep.subr.mxu0 0.0
    %2787 = vmatpush1.msra.mxu0 0.0
    %2788 = vmatprep.subr.mxu0 0.0
    %2789 = vmatpush1.msra.mxu0 0.0
    %2790 = vmatprep.subr.mxu0 0.0
    %2791 = vmatpush1.msra.mxu0 0.0
    %2792 = vmatprep.subr.mxu0 0.0
    %2793 = vmatpush1.msra.mxu0 0.0
    %2794 = vmatprep.subr.mxu0 0.0
    %2795 = vmatpush1.msra.mxu0 0.0
    %2796 = vmatprep.subr.mxu0 0.0
    %2797 = vmatpush1.msra.mxu0 0.0
    %2798 = vmatprep.subr.mxu0 0.0
    %2799 = vmatpush1.msra.mxu0 0.0
    %2800 = vmatprep.subr.mxu0 0.0
    %2801 = vmatpush1.msra.mxu0 0.0
    %2802 = vmatprep.subr.mxu0 0.0
    %2803 = vmatpush1.msra.mxu0 0.0
    %2804 = vmatprep.subr.mxu0 0.0
    %2805 = vmatpush1.msra.mxu0 0.0
    %2806 = vmatprep.subr.mxu0 0.0
    %2807 = vmatpush1.msra.mxu0 0.0
    %2808 = vmatprep.subr.mxu0 0.0
    %2809 = vmatpush1.msra.mxu0 0.0
    %2810 = vmatprep.subr.mxu0 0.0
    %2811 = vmatpush1.msra.mxu0 0.0
    %2812 = vmatprep.subr.mxu0 0.0
    %2813 = vmatpush1.msra.mxu0 0.0
    %2814 = vmatprep.subr.mxu0 0.0
    %2815 = vmatpush1.msra.mxu0 0.0
    %2816 = vmatprep.subr.mxu0 0.0
    %2817 = vmatpush1.msra.mxu0 0.0
    %2818 = vmatprep.subr.mxu0 0.0
    %2819 = vmatpush1.msra.mxu0 0.0
    %2820 = vmatprep.subr.mxu0 0.0
    %2821 = vmatpush1.msra.mxu0 0.0
    %2822 = vmatprep.subr.mxu0 0.0
    %2823 = vmatpush1.msra.mxu0 0.0
    %2824 = vmatprep.subr.mxu0 0.0
    %2825 = vmatpush1.msra.mxu0 0.0
    %2826 = vmatprep.subr.mxu0 0.0
    %2827 = vmatpush1.msra.mxu0 0.0
    %2828 = vmatprep.subr.mxu0 0.0
    %2829 = vmatpush1.msra.mxu0 0.0
    %2830 = vmatprep.subr.mxu0 0.0
    %2831 = vmatpush1.msra.mxu0 0.0
    %2832 = vmatprep.subr.mxu0 0.0
    %2833 = vmatpush1.msra.mxu0 0.0
    %2834 = vmatprep.subr.mxu0 0.0
    %2835 = vmatpush1.msra.mxu0 0.0
    %2836 = vmatprep.mubr.f32.mxu0 0.0
    %2837 = vmatmul.mubr.f32.gmra.mrb[0].mxu0 %v2622
    %v2838 = vpop.f32.mrb[0].mxu0
    %v2839 = vadd.f32 0.0, %v2838
    %v2840 = vpop.f32.mrb[0].mxu0
    %2841 = vdwg.mxu0
    %v2843 = vsel %vm385, %v2691, 0
    %v2846 = vsel %vm385, %v2765, 0
    %2848 = vmatprep.subr.mxu0 0.0
    %2849 = vmatpush1.xpose.msra.mxu0 %v2846
    %2850 = vmatprep.subr.mxu0 0.0
    %2851 = vmatpush1.xpose.msra.mxu0 0.0
    %2852 = vmatprep.subr.mxu0 0.0
    %2853 = vmatpush1.xpose.msra.mxu0 0.0
    %2854 = vmatprep.subr.mxu0 0.0
    %2855 = vmatpush1.xpose.msra.mxu0 0.0
    %2856 = vmatprep.subr.mxu0 0.0
    %2857 = vmatpush1.xpose.msra.mxu0 0.0
    %2858 = vmatprep.subr.mxu0 0.0
    %2859 = vmatpush1.xpose.msra.mxu0 0.0
    %2860 = vmatprep.subr.mxu0 0.0
    %2861 = vmatpush1.xpose.msra.mxu0 0.0
    %2862 = vmatprep.subr.mxu0 0.0
    %2863 = vmatpush1.xpose.msra.mxu0 0.0
    %2864 = vmatprep.subr.mxu0 0.0
    %2865 = vmatpush1.xpose.msra.mxu0 0.0
    %2866 = vmatprep.subr.mxu0 0.0
    %2867 = vmatpush1.xpose.msra.mxu0 0.0
    %2868 = vmatprep.subr.mxu0 0.0
    %2869 = vmatpush1.xpose.msra.mxu0 0.0
    %2870 = vmatprep.subr.mxu0 0.0
    %2871 = vmatpush1.xpose.msra.mxu0 0.0
    %2872 = vmatprep.subr.mxu0 0.0
    %2873 = vmatpush1.xpose.msra.mxu0 0.0
    %2874 = vmatprep.subr.mxu0 0.0
    %2875 = vmatpush1.xpose.msra.mxu0 0.0
    %2876 = vmatprep.subr.mxu0 0.0
    %2877 = vmatpush1.xpose.msra.mxu0 0.0
    %2878 = vmatprep.subr.mxu0 0.0
    %2879 = vmatpush1.xpose.msra.mxu0 0.0
    %2880 = vmatprep.subr.mxu0 0.0
    %2881 = vmatpush1.xpose.msra.mxu0 0.0
    %2882 = vmatprep.subr.mxu0 0.0
    %2883 = vmatpush1.xpose.msra.mxu0 0.0
    %2884 = vmatprep.subr.mxu0 0.0
    %2885 = vmatpush1.xpose.msra.mxu0 0.0
    %2886 = vmatprep.subr.mxu0 0.0
    %2887 = vmatpush1.xpose.msra.mxu0 0.0
    %2888 = vmatprep.subr.mxu0 0.0
    %2889 = vmatpush1.xpose.msra.mxu0 0.0
    %2890 = vmatprep.subr.mxu0 0.0
    %2891 = vmatpush1.xpose.msra.mxu0 0.0
    %2892 = vmatprep.subr.mxu0 0.0
    %2893 = vmatpush1.xpose.msra.mxu0 0.0
    %2894 = vmatprep.subr.mxu0 0.0
    %2895 = vmatpush1.xpose.msra.mxu0 0.0
    %2896 = vmatprep.subr.mxu0 0.0
    %2897 = vmatpush1.xpose.msra.mxu0 0.0
    %2898 = vmatprep.subr.mxu0 0.0
    %2899 = vmatpush1.xpose.msra.mxu0 0.0
    %2900 = vmatprep.subr.mxu0 0.0
    %2901 = vmatpush1.xpose.msra.mxu0 0.0
    %2902 = vmatprep.subr.mxu0 0.0
    %2903 = vmatpush1.xpose.msra.mxu0 0.0
    %2904 = vmatprep.subr.mxu0 0.0
    %2905 = vmatpush1.xpose.msra.mxu0 0.0
    %2906 = vmatprep.subr.mxu0 0.0
    %2907 = vmatpush1.xpose.msra.mxu0 0.0
    %2908 = vmatprep.subr.mxu0 0.0
    %2909 = vmatpush1.xpose.msra.mxu0 0.0
    %2910 = vmatprep.subr.mxu0 0.0
    %2911 = vmatpush1.xpose.msra.mxu0 0.0
    %2912 = vmatprep.mubr.f32.mxu0 0.0
    %2913 = vmatmul.mubr.f32.gmra.mrb[0].mxu0 %v2843
    %v2914 = vpop.f32.mrb[0].mxu0
    %v2915 = vadd.f32 %v26, %v2914
    %v2916 = vpop.f32.mrb[0].mxu0
    %2917 = vdwg.mxu0
    %v2918 = vsel %vm462, %v2915, -inf
    %2919 = vmax.xlane.f32.xlu0 %v2918
    %v2920 = vpop.xlane.xlu0 %2919
    %v2921 = vsub.f32 %v2915, %v2920
    %v2922 = vmul.f32 %v2921, 1.442695
    %v2923 = vpow.pop %v2922
    %v2924 = vsel %vm462, %v2923, 0.0
    %2925 = vadd.xlane.f32.xlu0 %v2924
    %v2926 = vpop.xlane.xlu0 %2925
    %v2927 = vrcp.pop %v2926
    %v2928 = vmul.f32 %v2923, %v2927
    %v2930 = vsel %vm462, %v2928, 0
    %2932 = vmatprep.subr.mxu0 0.0
    %2933 = vmatpush1.msra.mxu0 %v2839
    %2934 = vmatprep.subr.mxu0 0.0
    %2935 = vmatpush1.msra.mxu0 0.0
    %2936 = vmatprep.subr.mxu0 0.0
    %2937 = vmatpush1.msra.mxu0 0.0
    %2938 = vmatprep.subr.mxu0 0.0
    %2939 = vmatpush1.msra.mxu0 0.0
    %2940 = vmatprep.subr.mxu0 0.0
    %2941 = vmatpush1.msra.mxu0 0.0
    %2942 = vmatprep.subr.mxu0 0.0
    %2943 = vmatpush1.msra.mxu0 0.0
    %2944 = vmatprep.subr.mxu0 0.0
    %2945 = vmatpush1.msra.mxu0 0.0
    %2946 = vmatprep.subr.mxu0 0.0
    %2947 = vmatpush1.msra.mxu0 0.0
    %2948 = vmatprep.subr.mxu0 0.0
    %2949 = vmatpush1.msra.mxu0 0.0
    %2950 = vmatprep.subr.mxu0 0.0
    %2951 = vmatpush1.msra.mxu0 0.0
    %2952 = vmatprep.subr.mxu0 0.0
    %2953 = vmatpush1.msra.mxu0 0.0
    %2954 = vmatprep.subr.mxu0 0.0
    %2955 = vmatpush1.msra.mxu0 0.0
    %2956 = vmatprep.subr.mxu0 0.0
    %2957 = vmatpush1.msra.mxu0 0.0
    %2958 = vmatprep.subr.mxu0 0.0
    %2959 = vmatpush1.msra.mxu0 0.0
    %2960 = vmatprep.subr.mxu0 0.0
    %2961 = vmatpush1.msra.mxu0 0.0
    %2962 = vmatprep.subr.mxu0 0.0
    %2963 = vmatpush1.msra.mxu0 0.0
    %2964 = vmatprep.subr.mxu0 0.0
    %2965 = vmatpush1.msra.mxu0 0.0
    %2966 = vmatprep.subr.mxu0 0.0
    %2967 = vmatpush1.msra.mxu0 0.0
    %2968 = vmatprep.subr.mxu0 0.0
    %2969 = vmatpush1.msra.mxu0 0.0
    %2970 = vmatprep.subr.mxu0 0.0
    %2971 = vmatpush1.msra.mxu0 0.0
    %2972 = vmatprep.subr.mxu0 0.0
    %2973 = vmatpush1.msra.mxu0 0.0
    %2974 = vmatprep.subr.mxu0 0.0
    %2975 = vmatpush1.msra.mxu0 0.0
    %2976 = vmatprep.subr.mxu0 0.0
    %2977 = vmatpush1.msra.mxu0 0.0
    %2978 = vmatprep.subr.mxu0 0.0
    %2979 = vmatpush1.msra.mxu0 0.0
    %2980 = vmatprep.subr.mxu0 0.0
    %2981 = vmatpush1.msra.mxu0 0.0
    %2982 = vmatprep.subr.mxu0 0.0
    %2983 = vmatpush1.msra.mxu0 0.0
    %2984 = vmatprep.subr.mxu0 0.0
    %2985 = vmatpush1.msra.mxu0 0.0
    %2986 = vmatprep.subr.mxu0 0.0
    %2987 = vmatpush1.msra.mxu0 0.0
    %2988 = vmatprep.subr.mxu0 0.0
    %2989 = vmatpush1.msra.mxu0 0.0
    %2990 = vmatprep.subr.mxu0 0.0
    %2991 = vmatpush1.msra.mxu0 0.0
    %2992 = vmatprep.subr.mxu0 0.0
    %2993 = vmatpush1.msra.mxu0 0.0
    %2994 = vmatprep.subr.mxu0 0.0
    %2995 = vmatpush1.msra.mxu0 0.0
    %2996 = vmatprep.mubr.f32.mxu0 0.0
    %2997 = vmatmul.mubr.f32.gmra.mrb[0].mxu0 %v2930
    %v2998 = vpop.f32.mrb[0].mxu0
    %v2999 = vadd.f32 0.0, %v2998
    %v3000 = vpop.f32.mrb[0].mxu0
    %3001 = vdwg.mxu0
    %v3002 = vld [vmem:[#allocation2 + $0x520] sm:$0xff]
    %v3003 = vld [vmem:[#allocation2 + $0x528] sm:$0xff]
    %v3004 = vld [vmem:[#allocation2 + $0x530] sm:$0xff]
    %v3005 = vld [vmem:[#allocation2 + $0x538] sm:$0xff]
    %v3006 = vld [vmem:[#allocation2 + $0x540] sm:$0xff]
    %v3007 = vld [vmem:[#allocation2 + $0x548] sm:$0xff]
    %3008 = vmatprep.subr.mxu0 0.0
    %3009 = vmatpush1.msra.mxu0 %v3004
    %3010 = vmatprep.subr.mxu0 0.0
    %3011 = vmatpush1.msra.mxu0 %v3005
    %3012 = vmatprep.subr.mxu0 0.0
    %3013 = vmatpush1.msra.mxu0 %v3006
    %3014 = vmatprep.subr.mxu0 0.0
    %3015 = vmatpush1.msra.mxu0 %v3007
    %3016 = vmatprep.subr.mxu0 0.0
    %3017 = vmatpush1.msra.mxu0 0.0
    %3018 = vmatprep.subr.mxu0 0.0
    %3019 = vmatpush1.msra.mxu0 0.0
    %3020 = vmatprep.subr.mxu0 0.0
    %3021 = vmatpush1.msra.mxu0 0.0
    %3022 = vmatprep.subr.mxu0 0.0
    %3023 = vmatpush1.msra.mxu0 0.0
    %3024 = vmatprep.subr.mxu0 0.0
    %3025 = vmatpush1.msra.mxu0 0.0
    %3026 = vmatprep.subr.mxu0 0.0
    %3027 = vmatpush1.msra.mxu0 0.0
    %3028 = vmatprep.subr.mxu0 0.0
    %3029 = vmatpush1.msra.mxu0 0.0
    %3030 = vmatprep.subr.mxu0 0.0
    %3031 = vmatpush1.msra.mxu0 0.0
    %3032 = vmatprep.subr.mxu0 0.0
    %3033 = vmatpush1.msra.mxu0 0.0
    %3034 = vmatprep.subr.mxu0 0.0
    %3035 = vmatpush1.msra.mxu0 0.0
    %3036 = vmatprep.subr.mxu0 0.0
    %3037 = vmatpush1.msra.mxu0 0.0
    %3038 = vmatprep.subr.mxu0 0.0
    %3039 = vmatpush1.msra.mxu0 0.0
    %3040 = vmatprep.subr.mxu0 0.0
    %3041 = vmatpush1.msra.mxu0 0.0
    %3042 = vmatprep.subr.mxu0 0.0
    %3043 = vmatpush1.msra.mxu0 0.0
    %3044 = vmatprep.subr.mxu0 0.0
    %3045 = vmatpush1.msra.mxu0 0.0
    %3046 = vmatprep.subr.mxu0 0.0
    %3047 = vmatpush1.msra.mxu0 0.0
    %3048 = vmatprep.subr.mxu0 0.0
    %3049 = vmatpush1.msra.mxu0 0.0
    %3050 = vmatprep.subr.mxu0 0.0
    %3051 = vmatpush1.msra.mxu0 0.0
    %3052 = vmatprep.subr.mxu0 0.0
    %3053 = vmatpush1.msra.mxu0 0.0
    %3054 = vmatprep.subr.mxu0 0.0
    %3055 = vmatpush1.msra.mxu0 0.0
    %3056 = vmatprep.subr.mxu0 0.0
    %3057 = vmatpush1.msra.mxu0 0.0
    %3058 = vmatprep.subr.mxu0 0.0
    %3059 = vmatpush1.msra.mxu0 0.0
    %3060 = vmatprep.subr.mxu0 0.0
    %3061 = vmatpush1.msra.mxu0 0.0
    %3062 = vmatprep.subr.mxu0 0.0
    %3063 = vmatpush1.msra.mxu0 0.0
    %3064 = vmatprep.subr.mxu0 0.0
    %3065 = vmatpush1.msra.mxu0 0.0
    %3066 = vmatprep.subr.mxu0 0.0
    %3067 = vmatpush1.msra.mxu0 0.0
    %3068 = vmatprep.subr.mxu0 0.0
    %3069 = vmatpush1.msra.mxu0 0.0
    %3070 = vmatprep.subr.mxu0 0.0
    %3071 = vmatpush1.msra.mxu0 0.0
    %3072 = vmatprep.mubr.f32.mxu0 0.0
    %3073 = vmatmul.mubr.f32.gmra.mrb[0].mxu0 %v2622
    %v3074 = vpop.f32.mrb[0].mxu0
    %v3075 = vadd.f32 0.0, %v3074
    %v3076 = vpop.f32.mrb[0].mxu0
    %3077 = vdwg.mxu0
    %v3078 = vld [vmem:[#allocation2 + $0x550] sm:$0xff]
    %v3079 = vld [vmem:[#allocation2 + $0x558] sm:$0xff]
    %v3080 = vld [vmem:[#allocation2 + $0x560] sm:$0xff]
    %v3081 = vld [vmem:[#allocation2 + $0x568] sm:$0xff]
    %3082 = vmatprep.subr.mxu0 0.0
    %3083 = vmatpush1.msra.mxu0 %v3078
    %3084 = vmatprep.subr.mxu0 0.0
    %3085 = vmatpush1.msra.mxu0 %v3079
    %3086 = vmatprep.subr.mxu0 0.0
    %3087 = vmatpush1.msra.mxu0 %v3080
    %3088 = vmatprep.subr.mxu0 0.0
    %3089 = vmatpush1.msra.mxu0 %v3081
    %3090 = vmatprep.subr.mxu0 0.0
    %3091 = vmatpush1.msra.mxu0 0.0
    %3092 = vmatprep.subr.mxu0 0.0
    %3093 = vmatpush1.msra.mxu0 0.0
    %3094 = vmatprep.subr.mxu0 0.0
    %3095 = vmatpush1.msra.mxu0 0.0
    %3096 = vmatprep.subr.mxu0 0.0
    %3097 = vmatpush1.msra.mxu0 0.0
    %3098 = vmatprep.subr.mxu0 0.0
    %3099 = vmatpush1.msra.mxu0 0.0
    %3100 = vmatprep.subr.mxu0 0.0
    %3101 = vmatpush1.msra.mxu0 0.0
    %3102 = vmatprep.subr.mxu0 0.0
    %3103 = vmatpush1.msra.mxu0 0.0
    %3104 = vmatprep.subr.mxu0 0.0
    %3105 = vmatpush1.msra.mxu0 0.0
    %3106 = vmatprep.subr.mxu0 0.0
    %3107 = vmatpush1.msra.mxu0 0.0
    %3108 = vmatprep.subr.mxu0 0.0
    %3109 = vmatpush1.msra.mxu0 0.0
    %3110 = vmatprep.subr.mxu0 0.0
    %3111 = vmatpush1.msra.mxu0 0.0
    %3112 = vmatprep.subr.mxu0 0.0
    %3113 = vmatpush1.msra.mxu0 0.0
    %3114 = vmatprep.subr.mxu0 0.0
    %3115 = vmatpush1.msra.mxu0 0.0
    %3116 = vmatprep.subr.mxu0 0.0
    %3117 = vmatpush1.msra.mxu0 0.0
    %3118 = vmatprep.subr.mxu0 0.0
    %3119 = vmatpush1.msra.mxu0 0.0
    %3120 = vmatprep.subr.mxu0 0.0
    %3121 = vmatpush1.msra.mxu0 0.0
    %3122 = vmatprep.subr.mxu0 0.0
    %3123 = vmatpush1.msra.mxu0 0.0
    %3124 = vmatprep.subr.mxu0 0.0
    %3125 = vmatpush1.msra.mxu0 0.0
    %3126 = vmatprep.subr.mxu0 0.0
    %3127 = vmatpush1.msra.mxu0 0.0
    %3128 = vmatprep.subr.mxu0 0.0
    %3129 = vmatpush1.msra.mxu0 0.0
    %3130 = vmatprep.subr.mxu0 0.0
    %3131 = vmatpush1.msra.mxu0 0.0
    %3132 = vmatprep.subr.mxu0 0.0
    %3133 = vmatpush1.msra.mxu0 0.0
    %3134 = vmatprep.subr.mxu0 0.0
    %3135 = vmatpush1.msra.mxu0 0.0
    %3136 = vmatprep.subr.mxu0 0.0
    %3137 = vmatpush1.msra.mxu0 0.0
    %3138 = vmatprep.subr.mxu0 0.0
    %3139 = vmatpush1.msra.mxu0 0.0
    %3140 = vmatprep.subr.mxu0 0.0
    %3141 = vmatpush1.msra.mxu0 0.0
    %3142 = vmatprep.subr.mxu0 0.0
    %3143 = vmatpush1.msra.mxu0 0.0
    %3144 = vmatprep.subr.mxu0 0.0
    %3145 = vmatpush1.msra.mxu0 0.0
    %3146 = vmatprep.mubr.f32.mxu0 0.0
    %3147 = vmatmul.mubr.f32.gmra.mrb[0].mxu0 %v2622
    %v3148 = vpop.f32.mrb[0].mxu0
    %v3149 = vadd.f32 0.0, %v3148
    %v3150 = vpop.f32.mrb[0].mxu0
    %3151 = vdwg.mxu0
    %v3152 = vld [vmem:[#allocation2 + $0x570] sm:$0xff]
    %v3153 = vld [vmem:[#allocation2 + $0x578] sm:$0xff]
    %v3154 = vld [vmem:[#allocation2 + $0x580] sm:$0xff]
    %v3155 = vld [vmem:[#allocation2 + $0x588] sm:$0xff]
    %3156 = vmatprep.subr.mxu0 0.0
    %3157 = vmatpush1.msra.mxu0 %v3152
    %3158 = vmatprep.subr.mxu0 0.0
    %3159 = vmatpush1.msra.mxu0 %v3153
    %3160 = vmatprep.subr.mxu0 0.0
    %3161 = vmatpush1.msra.mxu0 %v3154
    %3162 = vmatprep.subr.mxu0 0.0
    %3163 = vmatpush1.msra.mxu0 %v3155
    %3164 = vmatprep.subr.mxu0 0.0
    %3165 = vmatpush1.msra.mxu0 0.0
    %3166 = vmatprep.subr.mxu0 0.0
    %3167 = vmatpush1.msra.mxu0 0.0
    %3168 = vmatprep.subr.mxu0 0.0
    %3169 = vmatpush1.msra.mxu0 0.0
    %3170 = vmatprep.subr.mxu0 0.0
    %3171 = vmatpush1.msra.mxu0 0.0
    %3172 = vmatprep.subr.mxu0 0.0
    %3173 = vmatpush1.msra.mxu0 0.0
    %3174 = vmatprep.subr.mxu0 0.0
    %3175 = vmatpush1.msra.mxu0 0.0
    %3176 = vmatprep.subr.mxu0 0.0
    %3177 = vmatpush1.msra.mxu0 0.0
    %3178 = vmatprep.subr.mxu0 0.0
    %3179 = vmatpush1.msra.mxu0 0.0
    %3180 = vmatprep.subr.mxu0 0.0
    %3181 = vmatpush1.msra.mxu0 0.0
    %3182 = vmatprep.subr.mxu0 0.0
    %3183 = vmatpush1.msra.mxu0 0.0
    %3184 = vmatprep.subr.mxu0 0.0
    %3185 = vmatpush1.msra.mxu0 0.0
    %3186 = vmatprep.subr.mxu0 0.0
    %3187 = vmatpush1.msra.mxu0 0.0
    %3188 = vmatprep.subr.mxu0 0.0
    %3189 = vmatpush1.msra.mxu0 0.0
    %3190 = vmatprep.subr.mxu0 0.0
    %3191 = vmatpush1.msra.mxu0 0.0
    %3192 = vmatprep.subr.mxu0 0.0
    %3193 = vmatpush1.msra.mxu0 0.0
    %3194 = vmatprep.subr.mxu0 0.0
    %3195 = vmatpush1.msra.mxu0 0.0
    %3196 = vmatprep.subr.mxu0 0.0
    %3197 = vmatpush1.msra.mxu0 0.0
    %3198 = vmatprep.subr.mxu0 0.0
    %3199 = vmatpush1.msra.mxu0 0.0
    %3200 = vmatprep.subr.mxu0 0.0
    %3201 = vmatpush1.msra.mxu0 0.0
    %3202 = vmatprep.subr.mxu0 0.0
    %3203 = vmatpush1.msra.mxu0 0.0
    %3204 = vmatprep.subr.mxu0 0.0
    %3205 = vmatpush1.msra.mxu0 0.0
    %3206 = vmatprep.subr.mxu0 0.0
    %3207 = vmatpush1.msra.mxu0 0.0
    %3208 = vmatprep.subr.mxu0 0.0
    %3209 = vmatpush1.msra.mxu0 0.0
    %3210 = vmatprep.subr.mxu0 0.0
    %3211 = vmatpush1.msra.mxu0 0.0
    %3212 = vmatprep.subr.mxu0 0.0
    %3213 = vmatpush1.msra.mxu0 0.0
    %3214 = vmatprep.subr.mxu0 0.0
    %3215 = vmatpush1.msra.mxu0 0.0
    %3216 = vmatprep.subr.mxu0 0.0
    %3217 = vmatpush1.msra.mxu0 0.0
    %3218 = vmatprep.subr.mxu0 0.0
    %3219 = vmatpush1.msra.mxu0 0.0
    %3220 = vmatprep.mubr.f32.mxu0 0.0
    %3221 = vmatmul.mubr.f32.gmra.mrb[0].mxu0 %v2622
    %v3222 = vpop.f32.mrb[0].mxu0
    %v3223 = vadd.f32 0.0, %v3222
    %v3224 = vpop.f32.mrb[0].mxu0
    %3225 = vdwg.mxu0
    %v3227 = vsel %vm385, %v3075, 0
    %v3230 = vsel %vm385, %v3149, 0
    %3232 = vmatprep.subr.mxu0 0.0
    %3233 = vmatpush1.xpose.msra.mxu0 %v3230
    %3234 = vmatprep.subr.mxu0 0.0
    %3235 = vmatpush1.xpose.msra.mxu0 0.0
    %3236 = vmatprep.subr.mxu0 0.0
    %3237 = vmatpush1.xpose.msra.mxu0 0.0
    %3238 = vmatprep.subr.mxu0 0.0
    %3239 = vmatpush1.xpose.msra.mxu0 0.0
    %3240 = vmatprep.subr.mxu0 0.0
    %3241 = vmatpush1.xpose.msra.mxu0 0.0
    %3242 = vmatprep.subr.mxu0 0.0
    %3243 = vmatpush1.xpose.msra.mxu0 0.0
    %3244 = vmatprep.subr.mxu0 0.0
    %3245 = vmatpush1.xpose.msra.mxu0 0.0
    %3246 = vmatprep.subr.mxu0 0.0
    %3247 = vmatpush1.xpose.msra.mxu0 0.0
    %3248 = vmatprep.subr.mxu0 0.0
    %3249 = vmatpush1.xpose.msra.mxu0 0.0
    %3250 = vmatprep.subr.mxu0 0.0
    %3251 = vmatpush1.xpose.msra.mxu0 0.0
    %3252 = vmatprep.subr.mxu0 0.0
    %3253 = vmatpush1.xpose.msra.mxu0 0.0
    %3254 = vmatprep.subr.mxu0 0.0
    %3255 = vmatpush1.xpose.msra.mxu0 0.0
    %3256 = vmatprep.subr.mxu0 0.0
    %3257 = vmatpush1.xpose.msra.mxu0 0.0
    %3258 = vmatprep.subr.mxu0 0.0
    %3259 = vmatpush1.xpose.msra.mxu0 0.0
    %3260 = vmatprep.subr.mxu0 0.0
    %3261 = vmatpush1.xpose.msra.mxu0 0.0
    %3262 = vmatprep.subr.mxu0 0.0
    %3263 = vmatpush1.xpose.msra.mxu0 0.0
    %3264 = vmatprep.subr.mxu0 0.0
    %3265 = vmatpush1.xpose.msra.mxu0 0.0
    %3266 = vmatprep.subr.mxu0 0.0
    %3267 = vmatpush1.xpose.msra.mxu0 0.0
    %3268 = vmatprep.subr.mxu0 0.0
    %3269 = vmatpush1.xpose.msra.mxu0 0.0
    %3270 = vmatprep.subr.mxu0 0.0
    %3271 = vmatpush1.xpose.msra.mxu0 0.0
    %3272 = vmatprep.subr.mxu0 0.0
    %3273 = vmatpush1.xpose.msra.mxu0 0.0
    %3274 = vmatprep.subr.mxu0 0.0
    %3275 = vmatpush1.xpose.msra.mxu0 0.0
    %3276 = vmatprep.subr.mxu0 0.0
    %3277 = vmatpush1.xpose.msra.mxu0 0.0
    %3278 = vmatprep.subr.mxu0 0.0
    %3279 = vmatpush1.xpose.msra.mxu0 0.0
    %3280 = vmatprep.subr.mxu0 0.0
    %3281 = vmatpush1.xpose.msra.mxu0 0.0
    %3282 = vmatprep.subr.mxu0 0.0
    %3283 = vmatpush1.xpose.msra.mxu0 0.0
    %3284 = vmatprep.subr.mxu0 0.0
    %3285 = vmatpush1.xpose.msra.mxu0 0.0
    %3286 = vmatprep.subr.mxu0 0.0
    %3287 = vmatpush1.xpose.msra.mxu0 0.0
    %3288 = vmatprep.subr.mxu0 0.0
    %3289 = vmatpush1.xpose.msra.mxu0 0.0
    %3290 = vmatprep.subr.mxu0 0.0
    %3291 = vmatpush1.xpose.msra.mxu0 0.0
    %3292 = vmatprep.subr.mxu0 0.0
    %3293 = vmatpush1.xpose.msra.mxu0 0.0
    %3294 = vmatprep.subr.mxu0 0.0
    %3295 = vmatpush1.xpose.msra.mxu0 0.0
    %3296 = vmatprep.mubr.f32.mxu0 0.0
    %3297 = vmatmul.mubr.f32.gmra.mrb[0].mxu0 %v3227
    %v3298 = vpop.f32.mrb[0].mxu0
    %v3299 = vadd.f32 %v26, %v3298
    %v3300 = vpop.f32.mrb[0].mxu0
    %3301 = vdwg.mxu0
    %v3302 = vsel %vm462, %v3299, -inf
    %3303 = vmax.xlane.f32.xlu0 %v3302
    %v3304 = vpop.xlane.xlu0 %3303
    %v3305 = vsub.f32 %v3299, %v3304
    %v3306 = vmul.f32 %v3305, 1.442695
    %v3307 = vpow.pop %v3306
    %v3308 = vsel %vm462, %v3307, 0.0
    %3309 = vadd.xlane.f32.xlu0 %v3308
    %v3310 = vpop.xlane.xlu0 %3309
    %v3311 = vrcp.pop %v3310
    %v3312 = vmul.f32 %v3307, %v3311
    %v3314 = vsel %vm462, %v3312, 0
    %3316 = vmatprep.subr.mxu0 0.0
    %3317 = vmatpush1.msra.mxu0 %v3223
    %3318 = vmatprep.subr.mxu0 0.0
    %3319 = vmatpush1.msra.mxu0 0.0
    %3320 = vmatprep.subr.mxu0 0.0
    %3321 = vmatpush1.msra.mxu0 0.0
    %3322 = vmatprep.subr.mxu0 0.0
    %3323 = vmatpush1.msra.mxu0 0.0
    %3324 = vmatprep.subr.mxu0 0.0
    %3325 = vmatpush1.msra.mxu0 0.0
    %3326 = vmatprep.subr.mxu0 0.0
    %3327 = vmatpush1.msra.mxu0 0.0
    %3328 = vmatprep.subr.mxu0 0.0
    %3329 = vmatpush1.msra.mxu0 0.0
    %3330 = vmatprep.subr.mxu0 0.0
    %3331 = vmatpush1.msra.mxu0 0.0
    %3332 = vmatprep.subr.mxu0 0.0
    %3333 = vmatpush1.msra.mxu0 0.0
    %3334 = vmatprep.subr.mxu0 0.0
    %3335 = vmatpush1.msra.mxu0 0.0
    %3336 = vmatprep.subr.mxu0 0.0
    %3337 = vmatpush1.msra.mxu0 0.0
    %3338 = vmatprep.subr.mxu0 0.0
    %3339 = vmatpush1.msra.mxu0 0.0
    %3340 = vmatprep.subr.mxu0 0.0
    %3341 = vmatpush1.msra.mxu0 0.0
    %3342 = vmatprep.subr.mxu0 0.0
    %3343 = vmatpush1.msra.mxu0 0.0
    %3344 = vmatprep.subr.mxu0 0.0
    %3345 = vmatpush1.msra.mxu0 0.0
    %3346 = vmatprep.subr.mxu0 0.0
    %3347 = vmatpush1.msra.mxu0 0.0
    %3348 = vmatprep.subr.mxu0 0.0
    %3349 = vmatpush1.msra.mxu0 0.0
    %3350 = vmatprep.subr.mxu0 0.0
    %3351 = vmatpush1.msra.mxu0 0.0
    %3352 = vmatprep.subr.mxu0 0.0
    %3353 = vmatpush1.msra.mxu0 0.0
    %3354 = vmatprep.subr.mxu0 0.0
    %3355 = vmatpush1.msra.mxu0 0.0
    %3356 = vmatprep.subr.mxu0 0.0
    %3357 = vmatpush1.msra.mxu0 0.0
    %3358 = vmatprep.subr.mxu0 0.0
    %3359 = vmatpush1.msra.mxu0 0.0
    %3360 = vmatprep.subr.mxu0 0.0
    %3361 = vmatpush1.msra.mxu0 0.0
    %3362 = vmatprep.subr.mxu0 0.0
    %3363 = vmatpush1.msra.mxu0 0.0
    %3364 = vmatprep.subr.mxu0 0.0
    %3365 = vmatpush1.msra.mxu0 0.0
    %3366 = vmatprep.subr.mxu0 0.0
    %3367 = vmatpush1.msra.mxu0 0.0
    %3368 = vmatprep.subr.mxu0 0.0
    %3369 = vmatpush1.msra.mxu0 0.0
    %3370 = vmatprep.subr.mxu0 0.0
    %3371 = vmatpush1.msra.mxu0 0.0
    %3372 = vmatprep.subr.mxu0 0.0
    %3373 = vmatpush1.msra.mxu0 0.0
    %3374 = vmatprep.subr.mxu0 0.0
    %3375 = vmatpush1.msra.mxu0 0.0
    %3376 = vmatprep.subr.mxu0 0.0
    %3377 = vmatpush1.msra.mxu0 0.0
    %3378 = vmatprep.subr.mxu0 0.0
    %3379 = vmatpush1.msra.mxu0 0.0
    %3380 = vmatprep.mubr.f32.mxu0 0.0
    %3381 = vmatmul.mubr.f32.gmra.mrb[0].mxu0 %v3314
    %v3382 = vpop.f32.mrb[0].mxu0
    %v3383 = vadd.f32 0.0, %v3382
    %v3384 = vpop.f32.mrb[0].mxu0
    %3385 = vdwg.mxu0
    %v3386 = vld [vmem:[#allocation2 + $0x590] sm:$0xff]
    %v3387 = vld [vmem:[#allocation2 + $0x598] sm:$0xff]
    %v3389 = vsel %vm385, %v3383, 0
    %3391 = vmatprep.subr.mxu0 0.0
    %3392 = vmatpush1.msra.mxu0 %v3386
    %3393 = vmatprep.subr.mxu0 0.0
    %3394 = vmatpush1.msra.mxu0 %v3387
    %3395 = vmatprep.subr.mxu0 0.0
    %3396 = vmatpush1.msra.mxu0 0.0
    %3397 = vmatprep.subr.mxu0 0.0
    %3398 = vmatpush1.msra.mxu0 0.0
    %3399 = vmatprep.subr.mxu0 0.0
    %3400 = vmatpush1.msra.mxu0 0.0
    %3401 = vmatprep.subr.mxu0 0.0
    %3402 = vmatpush1.msra.mxu0 0.0
    %3403 = vmatprep.subr.mxu0 0.0
    %3404 = vmatpush1.msra.mxu0 0.0
    %3405 = vmatprep.subr.mxu0 0.0
    %3406 = vmatpush1.msra.mxu0 0.0
    %3407 = vmatprep.subr.mxu0 0.0
    %3408 = vmatpush1.msra.mxu0 0.0
    %3409 = vmatprep.subr.mxu0 0.0
    %3410 = vmatpush1.msra.mxu0 0.0
    %3411 = vmatprep.subr.mxu0 0.0
    %3412 = vmatpush1.msra.mxu0 0.0
    %3413 = vmatprep.subr.mxu0 0.0
    %3414 = vmatpush1.msra.mxu0 0.0
    %3415 = vmatprep.subr.mxu0 0.0
    %3416 = vmatpush1.msra.mxu0 0.0
    %3417 = vmatprep.subr.mxu0 0.0
    %3418 = vmatpush1.msra.mxu0 0.0
    %3419 = vmatprep.subr.mxu0 0.0
    %3420 = vmatpush1.msra.mxu0 0.0
    %3421 = vmatprep.subr.mxu0 0.0
    %3422 = vmatpush1.msra.mxu0 0.0
    %3423 = vmatprep.subr.mxu0 0.0
    %3424 = vmatpush1.msra.mxu0 0.0
    %3425 = vmatprep.subr.mxu0 0.0
    %3426 = vmatpush1.msra.mxu0 0.0
    %3427 = vmatprep.subr.mxu0 0.0
    %3428 = vmatpush1.msra.mxu0 0.0
    %3429 = vmatprep.subr.mxu0 0.0
    %3430 = vmatpush1.msra.mxu0 0.0
    %3431 = vmatprep.subr.mxu0 0.0
    %3432 = vmatpush1.msra.mxu0 0.0
    %3433 = vmatprep.subr.mxu0 0.0
    %3434 = vmatpush1.msra.mxu0 0.0
    %3435 = vmatprep.subr.mxu0 0.0
    %3436 = vmatpush1.msra.mxu0 0.0
    %3437 = vmatprep.subr.mxu0 0.0
    %3438 = vmatpush1.msra.mxu0 0.0
    %3439 = vmatprep.subr.mxu0 0.0
    %3440 = vmatpush1.msra.mxu0 0.0
    %3441 = vmatprep.subr.mxu0 0.0
    %3442 = vmatpush1.msra.mxu0 0.0
    %3443 = vmatprep.subr.mxu0 0.0
    %3444 = vmatpush1.msra.mxu0 0.0
    %3445 = vmatprep.subr.mxu0 0.0
    %3446 = vmatpush1.msra.mxu0 0.0
    %3447 = vmatprep.subr.mxu0 0.0
    %3448 = vmatpush1.msra.mxu0 0.0
    %3449 = vmatprep.subr.mxu0 0.0
    %3450 = vmatpush1.msra.mxu0 0.0
    %3451 = vmatprep.subr.mxu0 0.0
    %3452 = vmatpush1.msra.mxu0 0.0
    %3453 = vmatprep.subr.mxu0 0.0
    %3454 = vmatpush1.msra.mxu0 0.0
    %3455 = vmatprep.mubr.f32.mxu0 0.0
    %3456 = vmatmul.mubr.f32.gmra.mrb[0].mxu0 %v3389
    %v3457 = vpop.f32.mrb[0].mxu0
    %v3458 = vadd.f32 0.0, %v3457
    %v3459 = vpop.f32.mrb[0].mxu0
    %3460 = vdwg.mxu0
    %v3462 = vsel %vm385, %v2999, 0
    %3464 = vmatprep.subr.mxu0 0.0
    %3465 = vmatpush1.msra.mxu0 %v3002
    %3466 = vmatprep.subr.mxu0 0.0
    %3467 = vmatpush1.msra.mxu0 %v3003
    %3468 = vmatprep.subr.mxu0 0.0
    %3469 = vmatpush1.msra.mxu0 0.0
    %3470 = vmatprep.subr.mxu0 0.0
    %3471 = vmatpush1.msra.mxu0 0.0
    %3472 = vmatprep.subr.mxu0 0.0
    %3473 = vmatpush1.msra.mxu0 0.0
    %3474 = vmatprep.subr.mxu0 0.0
    %3475 = vmatpush1.msra.mxu0 0.0
    %3476 = vmatprep.subr.mxu0 0.0
    %3477 = vmatpush1.msra.mxu0 0.0
    %3478 = vmatprep.subr.mxu0 0.0
    %3479 = vmatpush1.msra.mxu0 0.0
    %3480 = vmatprep.subr.mxu0 0.0
    %3481 = vmatpush1.msra.mxu0 0.0
    %3482 = vmatprep.subr.mxu0 0.0
    %3483 = vmatpush1.msra.mxu0 0.0
    %3484 = vmatprep.subr.mxu0 0.0
    %3485 = vmatpush1.msra.mxu0 0.0
    %3486 = vmatprep.subr.mxu0 0.0
    %3487 = vmatpush1.msra.mxu0 0.0
    %3488 = vmatprep.subr.mxu0 0.0
    %3489 = vmatpush1.msra.mxu0 0.0
    %3490 = vmatprep.subr.mxu0 0.0
    %3491 = vmatpush1.msra.mxu0 0.0
    %3492 = vmatprep.subr.mxu0 0.0
    %3493 = vmatpush1.msra.mxu0 0.0
    %3494 = vmatprep.subr.mxu0 0.0
    %3495 = vmatpush1.msra.mxu0 0.0
    %3496 = vmatprep.subr.mxu0 0.0
    %3497 = vmatpush1.msra.mxu0 0.0
    %3498 = vmatprep.subr.mxu0 0.0
    %3499 = vmatpush1.msra.mxu0 0.0
    %3500 = vmatprep.subr.mxu0 0.0
    %3501 = vmatpush1.msra.mxu0 0.0
    %3502 = vmatprep.subr.mxu0 0.0
    %3503 = vmatpush1.msra.mxu0 0.0
    %3504 = vmatprep.subr.mxu0 0.0
    %3505 = vmatpush1.msra.mxu0 0.0
    %3506 = vmatprep.subr.mxu0 0.0
    %3507 = vmatpush1.msra.mxu0 0.0
    %3508 = vmatprep.subr.mxu0 0.0
    %3509 = vmatpush1.msra.mxu0 0.0
    %3510 = vmatprep.subr.mxu0 0.0
    %3511 = vmatpush1.msra.mxu0 0.0
    %3512 = vmatprep.subr.mxu0 0.0
    %3513 = vmatpush1.msra.mxu0 0.0
    %3514 = vmatprep.subr.mxu0 0.0
    %3515 = vmatpush1.msra.mxu0 0.0
    %3516 = vmatprep.subr.mxu0 0.0
    %3517 = vmatpush1.msra.mxu0 0.0
    %3518 = vmatprep.subr.mxu0 0.0
    %3519 = vmatpush1.msra.mxu0 0.0
    %3520 = vmatprep.subr.mxu0 0.0
    %3521 = vmatpush1.msra.mxu0 0.0
    %3522 = vmatprep.subr.mxu0 0.0
    %3523 = vmatpush1.msra.mxu0 0.0
    %3524 = vmatprep.subr.mxu0 0.0
    %3525 = vmatpush1.msra.mxu0 0.0
    %3526 = vmatprep.subr.mxu0 0.0
    %3527 = vmatpush1.msra.mxu0 0.0
    %3528 = vmatprep.mubr.f32.mxu0 0.0
    %3529 = vmatmul.mubr.f32.gmra.mrb[0].mxu0 %v3462
    %v3530 = vpop.f32.mrb[0].mxu0
    %v3531 = vadd.f32 %v3458, %v3530
    %v3532 = vpop.f32.mrb[0].mxu0
    %3533 = vdwg.mxu0
    %v3534 = vadd.f32 %v2589, %v3531
    %v3535 = vld [vmem:[#allocation2 + $0x5a0] sm:$0x1]
    %v3536 = vlaneseq
    %v3537 = vshrl.u32 %v3536, 7
    %v3538 = vsub.s32 0, %v3537
    %v3539 = vrot.slane %v3535, %v3538
    %v3540 = vadd.f32 %v3534, %v3539
    %v3541 = vld [vmem:[#allocation2 + $0x5a8] sm:$0x1]
    %v3542 = vld [vmem:[#allocation2 + $0x5b0] sm:$0x1]
    %v3543 = vsel %vm135, %v3540, 0.0
    %3544 = vadd.xlane.f32.xlu0 %v3543
    %v3545 = vpop.xlane.xlu0 %3544
    %v3546 = vmul.f32 %v3545, %v139
    %v3547 = vsub.f32 %v3540, %v3546
    %v3548 = vmul.f32 %v3547, %v3547
    %v3549 = vsel %vm135, %v3548, 0.0
    %3550 = vadd.xlane.f32.xlu0 %v3549
    %v3551 = vpop.xlane.xlu0 %3550
    %v3552 = vmul.f32 %v3551, %v139
    %v3553 = vadd.f32 %v3552, 1e-05
    %v3554 = vrsqrt.pop %v3553
    %v3555 = vmul.f32 %v3547, %v3554
    %v3556 = vlaneseq
    %v3557 = vshrl.u32 %v3556, 7
    %v3558 = vsub.s32 0, %v3557
    %v3559 = vrot.slane %v3541, %v3558
    %v3560 = vmul.f32 %v3555, %v3559
    %v3561 = vlaneseq
    %v3562 = vshrl.u32 %v3561, 7
    %v3563 = vsub.s32 0, %v3562
    %v3564 = vrot.slane %v3542, %v3563
    %v3565 = vadd.f32 %v3560, %v3564
    %v3566 = vld [vmem:[#allocation2 + $0x5b8] sm:$0xff]
    %v3567 = vld [vmem:[#allocation2 + $0x5c0] sm:$0xff]
    %v3568 = vld [vmem:[#allocation2 + $0x5c8] sm:$0xff]
    %v3569 = vld [vmem:[#allocation2 + $0x5d0] sm:$0xff]
    %v3570 = vld [vmem:[#allocation2 + $0x5d8] sm:$0x1]
    %v3571 = vlaneseq
    %v3572 = vshrl.u32 %v3571, 7
    %v3573 = vsub.s32 0, %v3572
    %v3574 = vrot.slane %v3570, %v3573
    %v3576 = vsel %vm135, %v3565, 0
    %3578 = vmatprep.subr.mxu0 0.0
    %3579 = vmatpush1.msra.mxu0 %v3566
    %3580 = vmatprep.subr.mxu0 0.0
    %3581 = vmatpush1.msra.mxu0 %v3567
    %3582 = vmatprep.subr.mxu0 0.0
    %3583 = vmatpush1.msra.mxu0 %v3568
    %3584 = vmatprep.subr.mxu0 0.0
    %3585 = vmatpush1.msra.mxu0 %v3569
    %3586 = vmatprep.subr.mxu0 0.0
    %3587 = vmatpush1.msra.mxu0 0.0
    %3588 = vmatprep.subr.mxu0 0.0
    %3589 = vmatpush1.msra.mxu0 0.0
    %3590 = vmatprep.subr.mxu0 0.0
    %3591 = vmatpush1.msra.mxu0 0.0
    %3592 = vmatprep.subr.mxu0 0.0
    %3593 = vmatpush1.msra.mxu0 0.0
    %3594 = vmatprep.subr.mxu0 0.0
    %3595 = vmatpush1.msra.mxu0 0.0
    %3596 = vmatprep.subr.mxu0 0.0
    %3597 = vmatpush1.msra.mxu0 0.0
    %3598 = vmatprep.subr.mxu0 0.0
    %3599 = vmatpush1.msra.mxu0 0.0
    %3600 = vmatprep.subr.mxu0 0.0
    %3601 = vmatpush1.msra.mxu0 0.0
    %3602 = vmatprep.subr.mxu0 0.0
    %3603 = vmatpush1.msra.mxu0 0.0
    %3604 = vmatprep.subr.mxu0 0.0
    %3605 = vmatpush1.msra.mxu0 0.0
    %3606 = vmatprep.subr.mxu0 0.0
    %3607 = vmatpush1.msra.mxu0 0.0
    %3608 = vmatprep.subr.mxu0 0.0
    %3609 = vmatpush1.msra.mxu0 0.0
    %3610 = vmatprep.subr.mxu0 0.0
    %3611 = vmatpush1.msra.mxu0 0.0
    %3612 = vmatprep.subr.mxu0 0.0
    %3613 = vmatpush1.msra.mxu0 0.0
    %3614 = vmatprep.subr.mxu0 0.0
    %3615 = vmatpush1.msra.mxu0 0.0
    %3616 = vmatprep.subr.mxu0 0.0
    %3617 = vmatpush1.msra.mxu0 0.0
    %3618 = vmatprep.subr.mxu0 0.0
    %3619 = vmatpush1.msra.mxu0 0.0
    %3620 = vmatprep.subr.mxu0 0.0
    %3621 = vmatpush1.msra.mxu0 0.0
    %3622 = vmatprep.subr.mxu0 0.0
    %3623 = vmatpush1.msra.mxu0 0.0
    %3624 = vmatprep.subr.mxu0 0.0
    %3625 = vmatpush1.msra.mxu0 0.0
    %3626 = vmatprep.subr.mxu0 0.0
    %3627 = vmatpush1.msra.mxu0 0.0
    %3628 = vmatprep.subr.mxu0 0.0
    %3629 = vmatpush1.msra.mxu0 0.0
    %3630 = vmatprep.subr.mxu0 0.0
    %3631 = vmatpush1.msra.mxu0 0.0
    %3632 = vmatprep.subr.mxu0 0.0
    %3633 = vmatpush1.msra.mxu0 0.0
    %3634 = vmatprep.subr.mxu0 0.0
    %3635 = vmatpush1.msra.mxu0 0.0
    %3636 = vmatprep.subr.mxu0 0.0
    %3637 = vmatpush1.msra.mxu0 0.0
    %3638 = vmatprep.subr.mxu0 0.0
    %3639 = vmatpush1.msra.mxu0 0.0
    %3640 = vmatprep.subr.mxu0 0.0
    %3641 = vmatpush1.msra.mxu0 0.0
    %3642 = vmatprep.mubr.f32.mxu0 0.0
    %3643 = vmatmul.mubr.f32.gmra.mrb[0].mxu0 %v3576
    %v3644 = vpop.f32.mrb[0].mxu0
    %v3645 = vadd.f32 %v3574, %v3644
    %v3646 = vpop.f32.mrb[0].mxu0
    %3647 = vdwg.mxu0
    %v3648 = vmul.f32 %v3645, 0.5
    %v3649 = vmul.f32 %v3645, 0.70710677
    %v3650 = vand.u32 2147483647, %v3649
    %v3651 = vmul.f32 %v3650, 0.3275911
    %v3652 = vadd.f32 %v3651, 1.0
    %v3653 = vrcp.pop %v3652
    %v3654 = vmul.f32 1.0, %v3653
    %v3655 = vmul.f32 %v3654, 1.0614054
    %v3656 = vadd.f32 %v3655, -1.4531521
    %v3657 = vmul.f32 %v3654, %v3656
    %v3658 = vadd.f32 %v3657, 1.4214138
    %v3659 = vmul.f32 %v3654, %v3658
    %v3660 = vadd.f32 %v3659, -0.28449672
    %v3661 = vmul.f32 %v3654, %v3660
    %v3662 = vadd.f32 %v3661, 0.2548296
    %v3663 = vmul.f32 %v3654, %v3662
    %v3664 = vsub.f32 0.0, %v3650
    %v3665 = vmul.f32 %v3664, %v3650
    %v3666 = vmul.f32 %v3665, 1.442695
    %v3667 = vpow.pop %v3666
    %v3668 = vmul.f32 %v3663, %v3667
    %v3669 = vsub.f32 1.0, %v3668
    %vm3670 = vcmp.ge.f32.partialorder %v3649, 0.0
    %v3671 = vsub.f32 0.0, %v3669
    %v3672 = vsel %vm3670, %v3669, %v3671
    %v3673 = vadd.f32 %v3672, 1.0
    %v3674 = vmul.f32 %v3648, %v3673
    %v3675 = vld [vmem:[#allocation2 + $0x5e0] sm:$0xff]
    %v3676 = vld [vmem:[#allocation2 + $0x5e8] sm:$0xff]
    %v3677 = vld [vmem:[#allocation2 + $0x5f0] sm:$0xff]
    %v3678 = vld [vmem:[#allocation2 + $0x5f8] sm:$0xff]
    %v3679 = vld [vmem:[#allocation2 + $0x600] sm:$0xff]
    %v3680 = vld [vmem:[#allocation2 + $0x608] sm:$0xff]
    %v3681 = vld [vmem:[#allocation2 + $0x610] sm:$0xff]
    %v3682 = vld [vmem:[#allocation2 + $0x618] sm:$0xff]
    %v3683 = vld [vmem:[#allocation2 + $0x620] sm:$0xff]
    %v3684 = vld [vmem:[#allocation2 + $0x628] sm:$0xff]
    %v3685 = vld [vmem:[#allocation2 + $0x630] sm:$0xff]
    %v3686 = vld [vmem:[#allocation2 + $0x638] sm:$0xff]
    %v3687 = vld [vmem:[#allocation2 + $0x640] sm:$0xff]
    %v3688 = vld [vmem:[#allocation2 + $0x648] sm:$0xff]
    %v3689 = vld [vmem:[#allocation2 + $0x650] sm:$0xff]
    %v3690 = vld [vmem:[#allocation2 + $0x658] sm:$0xff]
    %3691 = vmatprep.subr.mxu0 0.0
    %3692 = vmatpush1.msra.mxu0 %v3675
    %3693 = vmatprep.subr.mxu0 0.0
    %3694 = vmatpush1.msra.mxu0 %v3676
    %3695 = vmatprep.subr.mxu0 0.0
    %3696 = vmatpush1.msra.mxu0 %v3677
    %3697 = vmatprep.subr.mxu0 0.0
    %3698 = vmatpush1.msra.mxu0 %v3678
    %3699 = vmatprep.subr.mxu0 0.0
    %3700 = vmatpush1.msra.mxu0 %v3679
    %3701 = vmatprep.subr.mxu0 0.0
    %3702 = vmatpush1.msra.mxu0 %v3680
    %3703 = vmatprep.subr.mxu0 0.0
    %3704 = vmatpush1.msra.mxu0 %v3681
    %3705 = vmatprep.subr.mxu0 0.0
    %3706 = vmatpush1.msra.mxu0 %v3682
    %3707 = vmatprep.subr.mxu0 0.0
    %3708 = vmatpush1.msra.mxu0 %v3683
    %3709 = vmatprep.subr.mxu0 0.0
    %3710 = vmatpush1.msra.mxu0 %v3684
    %3711 = vmatprep.subr.mxu0 0.0
    %3712 = vmatpush1.msra.mxu0 %v3685
    %3713 = vmatprep.subr.mxu0 0.0
    %3714 = vmatpush1.msra.mxu0 %v3686
    %3715 = vmatprep.subr.mxu0 0.0
    %3716 = vmatpush1.msra.mxu0 %v3687
    %3717 = vmatprep.subr.mxu0 0.0
    %3718 = vmatpush1.msra.mxu0 %v3688
    %3719 = vmatprep.subr.mxu0 0.0
    %3720 = vmatpush1.msra.mxu0 %v3689
    %3721 = vmatprep.subr.mxu0 0.0
    %3722 = vmatpush1.msra.mxu0 %v3690
    %3723 = vmatprep.subr.mxu0 0.0
    %3724 = vmatpush1.msra.mxu0 0.0
    %3725 = vmatprep.subr.mxu0 0.0
    %3726 = vmatpush1.msra.mxu0 0.0
    %3727 = vmatprep.subr.mxu0 0.0
    %3728 = vmatpush1.msra.mxu0 0.0
    %3729 = vmatprep.subr.mxu0 0.0
    %3730 = vmatpush1.msra.mxu0 0.0
    %3731 = vmatprep.subr.mxu0 0.0
    %3732 = vmatpush1.msra.mxu0 0.0
    %3733 = vmatprep.subr.mxu0 0.0
    %3734 = vmatpush1.msra.mxu0 0.0
    %3735 = vmatprep.subr.mxu0 0.0
    %3736 = vmatpush1.msra.mxu0 0.0
    %3737 = vmatprep.subr.mxu0 0.0
    %3738 = vmatpush1.msra.mxu0 0.0
    %3739 = vmatprep.subr.mxu0 0.0
    %3740 = vmatpush1.msra.mxu0 0.0
    %3741 = vmatprep.subr.mxu0 0.0
    %3742 = vmatpush1.msra.mxu0 0.0
    %3743 = vmatprep.subr.mxu0 0.0
    %3744 = vmatpush1.msra.mxu0 0.0
    %3745 = vmatprep.subr.mxu0 0.0
    %3746 = vmatpush1.msra.mxu0 0.0
    %3747 = vmatprep.subr.mxu0 0.0
    %3748 = vmatpush1.msra.mxu0 0.0
    %3749 = vmatprep.subr.mxu0 0.0
    %3750 = vmatpush1.msra.mxu0 0.0
    %3751 = vmatprep.subr.mxu0 0.0
    %3752 = vmatpush1.msra.mxu0 0.0
    %3753 = vmatprep.subr.mxu0 0.0
    %3754 = vmatpush1.msra.mxu0 0.0
    %3755 = vmatprep.mubr.f32.mxu0 0.0
    %3756 = vmatmul.mubr.f32.gmra.mrb[0].mxu0 %v3674
    %v3757 = vpop.f32.mrb[0].mxu0
    %v3758 = vadd.f32 0.0, %v3757
    %v3759 = vpop.f32.mrb[0].mxu0
    %3760 = vdwg.mxu0
    %v3761 = vadd.f32 %v3540, %v3758
    %v3762 = vld [vmem:[#allocation2 + $0x660] sm:$0x1]
    %v3763 = vlaneseq
    %v3764 = vshrl.u32 %v3763, 7
    %v3765 = vsub.s32 0, %v3764
    %v3766 = vrot.slane %v3762, %v3765
    %v3767 = vadd.f32 %v3761, %v3766
    %v3768 = vsel %vm135, %v3767, 0.0
    %3769 = vadd.xlane.f32.xlu0 %v3768
    %v3770 = vpop.xlane.xlu0 %3769
    %v3771 = vmul.f32 %v3770, %v139
    %v3772 = vsub.f32 %v3767, %v3771
    %v3773 = vmul.f32 %v3772, %v3772
    %v3774 = vsel %vm135, %v3773, 0.0
    %3775 = vadd.xlane.f32.xlu0 %v3774
    %v3776 = vpop.xlane.xlu0 %3775
    %v3777 = vmul.f32 %v3776, %v139
    %v3778 = vadd.f32 %v3777, 1e-05
    %v3779 = vrsqrt.pop %v3778
    %v3780 = vmul.f32 %v3772, %v3779
    %v3782 = vsel %vm462, %v27, 0
    %3784 = vmatprep.subr.mxu0 0.0
    %3785 = vmatpush1.msra.mxu0 %v3780
    %3786 = vmatprep.subr.mxu0 0.0
    %3787 = vmatpush1.msra.mxu0 0.0
    %3788 = vmatprep.subr.mxu0 0.0
    %3789 = vmatpush1.msra.mxu0 0.0
    %3790 = vmatprep.subr.mxu0 0.0
    %3791 = vmatpush1.msra.mxu0 0.0
    %3792 = vmatprep.subr.mxu0 0.0
    %3793 = vmatpush1.msra.mxu0 0.0
    %3794 = vmatprep.subr.mxu0 0.0
    %3795 = vmatpush1.msra.mxu0 0.0
    %3796 = vmatprep.subr.mxu0 0.0
    %3797 = vmatpush1.msra.mxu0 0.0
    %3798 = vmatprep.subr.mxu0 0.0
    %3799 = vmatpush1.msra.mxu0 0.0
    %3800 = vmatprep.subr.mxu0 0.0
    %3801 = vmatpush1.msra.mxu0 0.0
    %3802 = vmatprep.subr.mxu0 0.0
    %3803 = vmatpush1.msra.mxu0 0.0
    %3804 = vmatprep.subr.mxu0 0.0
    %3805 = vmatpush1.msra.mxu0 0.0
    %3806 = vmatprep.subr.mxu0 0.0
    %3807 = vmatpush1.msra.mxu0 0.0
    %3808 = vmatprep.subr.mxu0 0.0
    %3809 = vmatpush1.msra.mxu0 0.0
    %3810 = vmatprep.subr.mxu0 0.0
    %3811 = vmatpush1.msra.mxu0 0.0
    %3812 = vmatprep.subr.mxu0 0.0
    %3813 = vmatpush1.msra.mxu0 0.0
    %3814 = vmatprep.subr.mxu0 0.0
    %3815 = vmatpush1.msra.mxu0 0.0
    %3816 = vmatprep.subr.mxu0 0.0
    %3817 = vmatpush1.msra.mxu0 0.0
    %3818 = vmatprep.subr.mxu0 0.0
    %3819 = vmatpush1.msra.mxu0 0.0
    %3820 = vmatprep.subr.mxu0 0.0
    %3821 = vmatpush1.msra.mxu0 0.0
    %3822 = vmatprep.subr.mxu0 0.0
    %3823 = vmatpush1.msra.mxu0 0.0
    %3824 = vmatprep.subr.mxu0 0.0
    %3825 = vmatpush1.msra.mxu0 0.0
    %3826 = vmatprep.subr.mxu0 0.0
    %3827 = vmatpush1.msra.mxu0 0.0
    %3828 = vmatprep.subr.mxu0 0.0
    %3829 = vmatpush1.msra.mxu0 0.0
    %3830 = vmatprep.subr.mxu0 0.0
    %3831 = vmatpush1.msra.mxu0 0.0
    %3832 = vmatprep.subr.mxu0 0.0
    %3833 = vmatpush1.msra.mxu0 0.0
    %3834 = vmatprep.subr.mxu0 0.0
    %3835 = vmatpush1.msra.mxu0 0.0
    %3836 = vmatprep.subr.mxu0 0.0
    %3837 = vmatpush1.msra.mxu0 0.0
    %3838 = vmatprep.subr.mxu0 0.0
    %3839 = vmatpush1.msra.mxu0 0.0
    %3840 = vmatprep.subr.mxu0 0.0
    %3841 = vmatpush1.msra.mxu0 0.0
    %3842 = vmatprep.subr.mxu0 0.0
    %3843 = vmatpush1.msra.mxu0 0.0
    %3844 = vmatprep.subr.mxu0 0.0
    %3845 = vmatpush1.msra.mxu0 0.0
    %3846 = vmatprep.subr.mxu0 0.0
    %3847 = vmatpush1.msra.mxu0 0.0
    %3848 = vmatprep.mubr.f32.mxu0 0.0
    %3849 = vmatmul.mubr.f32.gmra.mrb[0].mxu0 %v3782
    %v3850 = vpop.f32.mrb[0].mxu0
    %v3851 = vadd.f32 0.0, %v3850
    %v3852 = vpop.f32.mrb[0].mxu0
    %3853 = vdwg.mxu0
    %v3854 = vld [vmem:[#allocation2 + $0x668] sm:$0xff]
    %v3855 = vld [vmem:[#allocation2 + $0x670] sm:$0xff]
    %v3856 = vld [vmem:[#allocation2 + $0x678] sm:$0xff]
    %v3857 = vld [vmem:[#allocation2 + $0x680] sm:$0xff]
    %v3858 = vld [vmem:[#allocation2 + $0x688] sm:$0x1]
    %v3859 = vlaneseq
    %v3860 = vshrl.u32 %v3859, 7
    %v3861 = vsub.s32 0, %v3860
    %v3862 = vrot.slane %v3858, %v3861
    %v3864 = vsel %vm135, %v3851, 0
    %3866 = vmatprep.subr.mxu0 0.0
    %3867 = vmatpush1.msra.mxu0 %v3854
    %3868 = vmatprep.subr.mxu0 0.0
    %3869 = vmatpush1.msra.mxu0 %v3855
    %3870 = vmatprep.subr.mxu0 0.0
    %3871 = vmatpush1.msra.mxu0 %v3856
    %3872 = vmatprep.subr.mxu0 0.0
    %3873 = vmatpush1.msra.mxu0 %v3857
    %3874 = vmatprep.subr.mxu0 0.0
    %3875 = vmatpush1.msra.mxu0 0.0
    %3876 = vmatprep.subr.mxu0 0.0
    %3877 = vmatpush1.msra.mxu0 0.0
    %3878 = vmatprep.subr.mxu0 0.0
    %3879 = vmatpush1.msra.mxu0 0.0
    %3880 = vmatprep.subr.mxu0 0.0
    %3881 = vmatpush1.msra.mxu0 0.0
    %3882 = vmatprep.subr.mxu0 0.0
    %3883 = vmatpush1.msra.mxu0 0.0
    %3884 = vmatprep.subr.mxu0 0.0
    %3885 = vmatpush1.msra.mxu0 0.0
    %3886 = vmatprep.subr.mxu0 0.0
    %3887 = vmatpush1.msra.mxu0 0.0
    %3888 = vmatprep.subr.mxu0 0.0
    %3889 = vmatpush1.msra.mxu0 0.0
    %3890 = vmatprep.subr.mxu0 0.0
    %3891 = vmatpush1.msra.mxu0 0.0
    %3892 = vmatprep.subr.mxu0 0.0
    %3893 = vmatpush1.msra.mxu0 0.0
    %3894 = vmatprep.subr.mxu0 0.0
    %3895 = vmatpush1.msra.mxu0 0.0
    %3896 = vmatprep.subr.mxu0 0.0
    %3897 = vmatpush1.msra.mxu0 0.0
    %3898 = vmatprep.subr.mxu0 0.0
    %3899 = vmatpush1.msra.mxu0 0.0
    %3900 = vmatprep.subr.mxu0 0.0
    %3901 = vmatpush1.msra.mxu0 0.0
    %3902 = vmatprep.subr.mxu0 0.0
    %3903 = vmatpush1.msra.mxu0 0.0
    %3904 = vmatprep.subr.mxu0 0.0
    %3905 = vmatpush1.msra.mxu0 0.0
    %3906 = vmatprep.subr.mxu0 0.0
    %3907 = vmatpush1.msra.mxu0 0.0
    %3908 = vmatprep.subr.mxu0 0.0
    %3909 = vmatpush1.msra.mxu0 0.0
    %3910 = vmatprep.subr.mxu0 0.0
    %3911 = vmatpush1.msra.mxu0 0.0
    %3912 = vmatprep.subr.mxu0 0.0
    %3913 = vmatpush1.msra.mxu0 0.0
    %3914 = vmatprep.subr.mxu0 0.0
    %3915 = vmatpush1.msra.mxu0 0.0
    %3916 = vmatprep.subr.mxu0 0.0
    %3917 = vmatpush1.msra.mxu0 0.0
    %3918 = vmatprep.subr.mxu0 0.0
    %3919 = vmatpush1.msra.mxu0 0.0
    %3920 = vmatprep.subr.mxu0 0.0
    %3921 = vmatpush1.msra.mxu0 0.0
    %3922 = vmatprep.subr.mxu0 0.0
    %3923 = vmatpush1.msra.mxu0 0.0
    %3924 = vmatprep.subr.mxu0 0.0
    %3925 = vmatpush1.msra.mxu0 0.0
    %3926 = vmatprep.subr.mxu0 0.0
    %3927 = vmatpush1.msra.mxu0 0.0
    %3928 = vmatprep.subr.mxu0 0.0
    %3929 = vmatpush1.msra.mxu0 0.0
    %3930 = vmatprep.mubr.f32.mxu0 0.0
    %3931 = vmatmul.mubr.f32.gmra.mrb[0].mxu0 %v3864
    %v3932 = vpop.f32.mrb[0].mxu0
    %v3933 = vadd.f32 %v3862, %v3932
    %v3934 = vpop.f32.mrb[0].mxu0
    %3935 = vdwg.mxu0
    %vm3936 = vcmask 74752
    %3937 = vst.msk [vmem:[#allocation5] sm:$0x3] %vm3936, %v3933
    // Predicated region
    $region14: #{vit_van_cls_forward.1} parent=1 // pred_check
      _
    $region15: #{vit_van_cls_forward.1} parent=1 // pred_check_branch
      %3939 = sbr.rel (0) target = $region17
    $region16: #{vit_van_cls_forward.1} parent=1 // pred_region
      %s3941 = ssub.s32 32, 32
      %3942 = vsyncadd [#allocation4], %s3941
      %s3944 = sshll.u32 [#allocation5], 4
      %s3945 = int_to_ptr.vmem [resolvable:$true] %s3944
      %3947 = dma.vmem_to_hbm [thread:$0]  %s3945, 32, %s2, [#allocation4]
    $region17: #{vit_van_cls_forward.1} parent=1 // pred_fallthru
      _
    // Predicated region
    $region18: #{vit_van_cls_forward.1} parent=1 // pred_check
      _
    $region19: #{vit_van_cls_forward.1} parent=1 // pred_check_branch
      %3949 = sbr.rel (0) target = $region21
    $region20: #{vit_van_cls_forward.1} parent=1 // pred_region
      %3950 = dma.done [#allocation4], 32
    $region21: #{vit_van_cls_forward.1} parent=1 // pred_fallthru
      _
    %3951 = vsyncpa [#allocation3], 1
    %3952 = vsyncpa [#allocation4], 1

</llo_original>
